<compile_context>
chip_gen: v7x
topology: tpu7x:2x2x1
jax: 0.10.0
libtpu: 0.0.40
codegen_flags: <defaults>
</compile_context>

<pallas_src>
import functools

import jax
import jax.numpy as jnp
from jax.experimental import pallas as pl
from jax.experimental.pallas import tpu as pltpu

BN_EPS = 1e-3                     # BatchNorm2d(out_channels, eps=0.001)
LANE = 128
_TM = 512                         # max patch-row tile
_VMEM_LIMIT = 32 * 1024 * 1024    # safe on v5e/v6e (128 MiB) and v7x (64 MiB)


def _round_up(x, m):
    return (x + m - 1) // m * m


def _cdiv(a, b):
    return -(-a // b)


def _pick_tm(m):
    """M tile: <= _TM, multiple of 8, minimal padding, and >= 2 tiles whenever
    m > 8 so the 'parallel' M axis shards across both v7x TensorCores."""
    if m <= 8:
        return 8
    n_tiles = max(2, _cdiv(m, _TM))
    return _round_up(_cdiv(m, n_tiles), 8)


# ----------------------------- Pallas kernels ------------------------------ #

def _conv_stats_kernel(p_ref, w_ref, y_ref, stats_ref):
    """Pass 1: full-K im2col matmul + per-M-tile BN partial sums.

    p_ref:     (TM, Kp)    bf16 patch tile (full padded K per grid step)
    w_ref:     (Kp, Cp)    bf16 weights (constant block -> DMAed once, resident)
    y_ref:     (TM, Cp)    bf16 pre-BN conv output tile
    stats_ref: (1, 2, Cp)  f32 per-M-tile [sum, sum_sq] over the tile rows
    """
    acc = jnp.dot(p_ref[...], w_ref[...], preferred_element_type=jnp.float32)
    y_ref[...] = acc.astype(y_ref.dtype)
    stats_ref[0, 0:1, :] = jnp.sum(acc, axis=0, keepdims=True)
    stats_ref[0, 1:2, :] = jnp.sum(acc * acc, axis=0, keepdims=True)


def _bn_relu_kernel(y_ref, scale_ref, shift_ref, o_ref):
    """Pass 2: y * scale + shift, ReLU.  scale/shift fold mean/var/gamma/beta."""
    y = y_ref[...].astype(jnp.float32)
    o_ref[...] = jnp.maximum(y * scale_ref[...] + shift_ref[...],
                             0.0).astype(o_ref.dtype)


def _maxpool_kernel(t_ref, o_ref):
    """Max over the 3 row taps (columns already pooled in XLA glue).

    t_ref: (3, TM, C)   row taps on the leading (non-sublane) axis
    o_ref: (TM, C)
    """
    o_ref[...] = jnp.maximum(jnp.maximum(t_ref[0], t_ref[1]), t_ref[2])


# ------------------------------- JAX glue ---------------------------------- #

def _extract_patches(x_nhwc, kh, kw, stride, padding):
    """im2col: returns (N, Ho, Wo, kh*kw, C) plus Ho, Wo (dtype preserved)."""
    if padding:
        x_nhwc = jnp.pad(
            x_nhwc, ((0, 0), (padding, padding), (padding, padding), (0, 0)))
    _, hp, wp, _ = x_nhwc.shape
    ho = (hp - kh) // stride + 1
    wo = (wp - kw) // stride + 1
    taps = []
    for i in range(kh):
        for j in range(kw):
            taps.append(
                x_nhwc[:, i:i + (ho - 1) * stride + 1:stride,
                       j:j + (wo - 1) * stride + 1:stride, :])
    patches = jnp.stack(taps, axis=3)       # (N, Ho, Wo, kh*kw, C)
    return patches, ho, wo


def conv_bn_relu(x_nhwc, w_oihw, gamma, beta, *, stride=1, padding=0,
                 out_dtype=jnp.float32):
    """BasicConv2d: Conv2d(bias=False) + BatchNorm2d(eps=1e-3, batch stats) + ReLU."""
    cout, cin, kh, kw = w_oihw.shape
    n, h, w, _ = x_nhwc.shape

    # Cast BEFORE im2col so the patch tensor is materialized in bf16 (halves
    # the dominant HBM traffic of pass 1).
    x_bf16 = x_nhwc.astype(jnp.bfloat16)

    # --- build the matmul LHS (im2col, skipped for 1x1) -------------------- #
    if kh == 1 and kw == 1 and stride == 1 and padding == 0:
        ho, wo = h, w
        patches_2d = x_bf16.reshape(n * h * w, cin)
    else:
        patches, ho, wo = _extract_patches(x_bf16, kh, kw, stride, padding)
        patches_2d = patches.reshape(n * ho * wo, kh * kw * cin)

    m = n * ho * wo
    k = kh * kw * cin
    cp = _round_up(cout, LANE)                     # lane-dense output channels
    kpad = _round_up(k, LANE)

    tm = _pick_tm(m)

    # Keep pass-1 working set (double-buffered LHS + resident weight +
    # double-buffered bf16 output + f32 dot temporary) under the VMEM budget.
    def _footprint(t):
        return (2 * t * kpad * 2 + 2 * kpad * cp * 2 +
                2 * t * cp * 2 + t * cp * 4)
    while tm > 8 and _footprint(tm) > int(_VMEM_LIMIT * 0.75):
        tm = max(8, _round_up(tm // 2, 8))

    mpad = _round_up(m, tm)
    gm = mpad // tm

    # Pad the matmul operands.  Zero rows / columns contribute nothing to the
    # conv or to the BN partial sums.
    patches_2d = jnp.pad(patches_2d, ((0, mpad - m), (0, kpad - k)))
    # (Cout, Cin, KH, KW) -> (KH, KW, Cin, Cout) -> (K, Cout): matches the
    # (kh, kw, cin) flattening of the patches.
    w_2d = jnp.transpose(w_oihw, (2, 3, 1, 0)).reshape(k, cout)
    w_2d = jnp.pad(w_2d, ((0, kpad - k), (0, cp - cout))).astype(jnp.bfloat16)

    # --- pass 1: matmul + BN partial sums ----------------------------------- #
    y, stats = pl.pallas_call(
        _conv_stats_kernel,
        out_shape=(jax.ShapeDtypeStruct((mpad, cp), jnp.bfloat16),
                   jax.ShapeDtypeStruct((gm, 2, cp), jnp.float32)),
        grid=(gm,),
        in_specs=[
            pl.BlockSpec((tm, kpad), lambda i: (i, 0)),
            pl.BlockSpec((kpad, cp), lambda i: (0, 0)),   # resident weights
        ],
        out_specs=[
            pl.BlockSpec((tm, cp), lambda i: (i, 0)),
            pl.BlockSpec((1, 2, cp), lambda i: (i, 0, 0)),
        ],
        compiler_params=pltpu.CompilerParams(
            dimension_semantics=("parallel",),
            vmem_limit_bytes=_VMEM_LIMIT),
    )(patches_2d, w_2d)

    # --- BN statistics (training-mode: batch stats, biased variance) -------- #
    # NOTE: var = E[x^2] - E[x]^2 in f32 (clamped); not bit-parity with a
    # two-pass variance when |mean| >> std.
    tot = jnp.sum(stats, axis=0)                       # (2, cp)
    inv_m = jnp.float32(1.0 / m)
    mean = tot[0] * inv_m
    var = jnp.maximum(tot[1] * inv_m - mean * mean, 0.0)
    g = jnp.pad(gamma, (0, cp - cout))
    b = jnp.pad(beta, (0, cp - cout))
    scale = g * jax.lax.rsqrt(var + BN_EPS)
    shift = b - mean * scale

    # --- pass 2: normalize + affine + ReLU ----------------------------------- #
    out = pl.pallas_call(
        _bn_relu_kernel,
        out_shape=jax.ShapeDtypeStruct((mpad, cp), out_dtype),
        grid=(gm,),
        in_specs=[
            pl.BlockSpec((tm, cp), lambda i: (i, 0)),
            pl.BlockSpec((1, cp), lambda i: (0, 0)),
            pl.BlockSpec((1, cp), lambda i: (0, 0)),
        ],
        out_specs=pl.BlockSpec((tm, cp), lambda i: (i, 0)),
        compiler_params=pltpu.CompilerParams(
            dimension_semantics=("parallel",),
            vmem_limit_bytes=_VMEM_LIMIT),
    )(y, scale.reshape(1, cp), shift.reshape(1, cp))

    return out[:m, :cout].reshape(n, ho, wo, cout)


def maxpool_3x3_s2(x_nhwc):
    """F.max_pool2d(x, kernel_size=3, stride=2), no padding (separable max)."""
    n, h, w, c = x_nhwc.shape
    ho = (h - 3) // 2 + 1
    wo = (w - 3) // 2 + 1

    # W-direction 3-tap max: fused XLA elementwise op over strided slices.
    cols = [x_nhwc[:, :, j:j + (wo - 1) * 2 + 1:2, :] for j in range(3)]
    cm = jnp.maximum(jnp.maximum(cols[0], cols[1]), cols[2])   # (N, H, Wo, C)

    # H-direction 3 row taps -> Pallas kernel (taps on the leading axis).
    rows = [cm[:, i:i + (ho - 1) * 2 + 1:2, :, :] for i in range(3)]
    m = n * ho * wo
    t = jnp.stack(rows, axis=0).reshape(3, m, c)

    tm = _pick_tm(m)
    mpad = _round_up(m, tm)
    if mpad > m:
        t = jnp.pad(t, ((0, 0), (0, mpad - m), (0, 0)))

    out = pl.pallas_call(
        _maxpool_kernel,
        out_shape=jax.ShapeDtypeStruct((mpad, c), x_nhwc.dtype),
        grid=(mpad // tm,),
        in_specs=[pl.BlockSpec((3, tm, c), lambda i: (0, i, 0))],
        out_specs=pl.BlockSpec((tm, c), lambda i: (i, 0)),
        compiler_params=pltpu.CompilerParams(
            dimension_semantics=("parallel",),
            vmem_limit_bytes=_VMEM_LIMIT),
    )(t)
    return out[:m].reshape(n, ho, wo, c)


# --------------------------- InceptionB module ----------------------------- #

def init_inception_b_params(key, in_channels):
    """Deterministic synthetic parameters; shapes from the module __init__."""
    def conv_w(kk, cout, cin, kh, kw):
        fan_in = cin * kh * kw
        return jax.random.normal(kk, (cout, cin, kh, kw), jnp.float32) / jnp.sqrt(
            jnp.float32(fan_in))

    def bn_params(cout):
        gamma = 1.0 + 0.01 * jnp.arange(cout, dtype=jnp.float32) / cout
        beta = 0.01 * jnp.sin(jnp.arange(cout, dtype=jnp.float32))
        return gamma, beta

    k0, k1, k2, k3 = jax.random.split(key, 4)
    params = {
        "branch3x3":      (conv_w(k0, 384, in_channels, 3, 3), *bn_params(384)),
        "branch3x3dbl_1": (conv_w(k1, 64, in_channels, 1, 1), *bn_params(64)),
        "branch3x3dbl_2": (conv_w(k2, 96, 64, 3, 3),          *bn_params(96)),
        "branch3x3dbl_3": (conv_w(k3, 96, 96, 3, 3),          *bn_params(96)),
    }
    return params


def inception_b_forward(params, x_nchw):
    """Forward pass of InceptionB.  Input / output are NCHW like PyTorch."""
    x = jnp.transpose(x_nchw, (0, 2, 3, 1))  # NCHW -> NHWC

    # branch3x3: 3x3 / stride 2  (branch output kept in f32)
    w, g, b = params["branch3x3"]
    branch3x3 = conv_bn_relu(x, w, g, b, stride=2, padding=0)

    # branch3x3dbl: 1x1 -> 3x3 pad 1 -> 3x3 stride 2
    # (chained intermediates in bf16 — the next conv consumes bf16 anyway)
    w, g, b = params["branch3x3dbl_1"]
    dbl = conv_bn_relu(x, w, g, b, stride=1, padding=0, out_dtype=jnp.bfloat16)
    w, g, b = params["branch3x3dbl_2"]
    dbl = conv_bn_relu(dbl, w, g, b, stride=1, padding=1, out_dtype=jnp.bfloat16)
    w, g, b = params["branch3x3dbl_3"]
    dbl = conv_bn_relu(dbl, w, g, b, stride=2, padding=0)

    # branch_pool: max_pool2d(kernel_size=3, stride=2)
    branch_pool = maxpool_3x3_s2(x)

    out = jnp.concatenate([branch3x3, dbl, branch_pool], axis=-1)  # channel cat
    return jnp.transpose(out, (0, 3, 1, 2))  # NHWC -> NCHW


# --------------------------------- main ------------------------------------ #

if __name__ == "__main__":
    key = jax.random.PRNGKey(0)
    k_x, k_p = jax.random.split(key)

    batch, in_channels, spatial = 2, 4, 16
    x = jax.random.normal(k_x, (batch, in_channels, spatial, spatial),
                          jnp.float32)
    params = init_inception_b_params(k_p, in_channels)

    fwd = jax.jit(functools.partial(inception_b_forward, params))
    y = fwd(x)
    jax.block_until_ready(y)

    # (16 - 3)//2 + 1 = 7 ; channels = 384 + 96 + in_channels
    expected = (batch, 384 + 96 + in_channels, 7, 7)
    assert y.shape == expected, (y.shape, expected)
    assert bool(jnp.all(jnp.isfinite(y)))
    print("KERNEL_OK")
</pallas_src>

<mosaic_0001>
module attributes {stable_mosaic.version = 11 : i64} {
  func.func @_conv_stats_kernel(%arg0: i32, %arg1: memref<256x128xbf16, #tpu.memory_space<vmem>>, %arg2: memref<128x128xbf16, #tpu.memory_space<vmem>>, %arg3: memref<256x128xbf16, #tpu.memory_space<vmem>>, %arg4: memref<1x2x128xf32, #tpu.memory_space<vmem>>) attributes {dimension_semantics = [#tpu.dimension_semantics<parallel>], iteration_bounds = array<i64: 2>, scalar_prefetch = 0 : i64, scratch_operands = 0 : i64, tpu.core_type = #tpu.core_type<tc>, window_params = [{transform_indices = @transform_0, window_bounds = array<i64: 256, 128>}, {pipeline_mode = #tpu.pipeline_mode<synchronous>, transform_indices = @transform_1, window_bounds = array<i64: 128, 128>}, {transform_indices = @transform_2, window_bounds = array<i64: 256, 128>}, {transform_indices = @transform_3, window_bounds = array<i64: 1, 2, 128>}]} {
    %c0 = arith.constant 0 : index
    %c0_0 = arith.constant 0 : index
    %0 = vector.load %arg1[%c0, %c0_0] : memref<256x128xbf16, #tpu.memory_space<vmem>>, vector<256x128xbf16>
    %c0_1 = arith.constant 0 : index
    %c0_2 = arith.constant 0 : index
    %1 = vector.load %arg2[%c0_1, %c0_2] : memref<128x128xbf16, #tpu.memory_space<vmem>>, vector<128x128xbf16>
    %cst = arith.constant dense<0.000000e+00> : vector<256x128xf32>
    %2 = tpu.matmul %0, %1, %cst {dimension_numbers = #tpu.dot_dimension_numbers<[1], [0], [0], [1], [0, 0, 1, 1], [], []>} : vector<256x128xbf16>, vector<128x128xbf16>, vector<256x128xf32> -> vector<256x128xf32>
    %3 = arith.truncf %2 : vector<256x128xf32> to vector<256x128xbf16>
    %c0_3 = arith.constant 0 : index
    %c0_4 = arith.constant 0 : index
    %4 = vector.load %arg3[%c0_3, %c0_4] : memref<256x128xbf16, #tpu.memory_space<vmem>>, vector<256x128xbf16>
    tpu.vector_store %arg3[%c0_3, %c0_4], %3 {strides = array<i32>} : memref<256x128xbf16, #tpu.memory_space<vmem>>, vector<256x128xbf16>,
    %cst_5 = arith.constant dense<0.000000e+00> : vector<128xf32>
    %5 = vector.multi_reduction <add>, %2, %cst_5 [0] : vector<256x128xf32> to vector<128xf32>
    %6 = vector.shape_cast %5 : vector<128xf32> to vector<1x128xf32>
    %c0_6 = arith.constant 0 : index
    %c0_7 = arith.constant 0 : index
    %c0_8 = arith.constant 0 : index
    %7 = vector.load %arg4[%c0_6, %c0_7, %c0_8] : memref<1x2x128xf32, #tpu.memory_space<vmem>>, vector<1x1x128xf32>
    %8 = vector.shape_cast %7 : vector<1x1x128xf32> to vector<1x128xf32>
    %9 = vector.shape_cast %6 : vector<1x128xf32> to vector<1x1x128xf32>
    tpu.vector_store %arg4[%c0_6, %c0_7, %c0_8], %9 {strides = array<i32>} : memref<1x2x128xf32, #tpu.memory_space<vmem>>, vector<1x1x128xf32>,
    %10 = arith.mulf %2, %2 : vector<256x128xf32>
    %cst_9 = arith.constant dense<0.000000e+00> : vector<128xf32>
    %11 = vector.multi_reduction <add>, %10, %cst_9 [0] : vector<256x128xf32> to vector<128xf32>
    %12 = vector.shape_cast %11 : vector<128xf32> to vector<1x128xf32>
    %c0_10 = arith.constant 0 : index
    %c1 = arith.constant 1 : index
    %c0_11 = arith.constant 0 : index
    %13 = vector.load %arg4[%c0_10, %c1, %c0_11] : memref<1x2x128xf32, #tpu.memory_space<vmem>>, vector<1x1x128xf32>
    %14 = vector.shape_cast %13 : vector<1x1x128xf32> to vector<1x128xf32>
    %15 = vector.shape_cast %12 : vector<1x128xf32> to vector<1x1x128xf32>
    tpu.vector_store %arg4[%c0_10, %c1, %c0_11], %15 {strides = array<i32>} : memref<1x2x128xf32, #tpu.memory_space<vmem>>, vector<1x1x128xf32>,
    return
  }
  func.func @transform_0(%arg0: i32) -> (i32, i32) {
    %c0_i32 = arith.constant 0 : i32
    %c0_i32_0 = arith.constant 0 : i32
    return %arg0, %c0_i32 : i32, i32
  }
  func.func @transform_1(%arg0: i32) -> (i32, i32) {
    %c0_i32 = arith.constant 0 : i32
    %c0_i32_0 = arith.constant 0 : i32
    %c0_i32_1 = arith.constant 0 : i32
    return %c0_i32, %c0_i32_0 : i32, i32
  }
  func.func @transform_2(%arg0: i32) -> (i32, i32) {
    %c0_i32 = arith.constant 0 : i32
    %c0_i32_0 = arith.constant 0 : i32
    return %arg0, %c0_i32 : i32, i32
  }
  func.func @transform_3(%arg0: i32) -> (i32, i32, i32) {
    %c0_i32 = arith.constant 0 : i32
    %c0_i32_0 = arith.constant 0 : i32
    %c0_i32_1 = arith.constant 0 : i32
    return %arg0, %c0_i32, %c0_i32_0 : i32, i32, i32
  }
}

module attributes {stable_mosaic.version = 11 : i64} {
  func.func @_bn_relu_kernel(%arg0: i32, %arg1: memref<256x128xbf16, #tpu.memory_space<vmem>>, %arg2: memref<1x128xf32, #tpu.memory_space<vmem>>, %arg3: memref<1x128xf32, #tpu.memory_space<vmem>>, %arg4: memref<256x128xbf16, #tpu.memory_space<vmem>>) attributes {dimension_semantics = [#tpu.dimension_semantics<parallel>], iteration_bounds = array<i64: 2>, scalar_prefetch = 0 : i64, scratch_operands = 0 : i64, tpu.core_type = #tpu.core_type<tc>, window_params = [{transform_indices = @transform_0, window_bounds = array<i64: 256, 128>}, {pipeline_mode = #tpu.pipeline_mode<synchronous>, transform_indices = @transform_1, window_bounds = array<i64: 1, 128>}, {pipeline_mode = #tpu.pipeline_mode<synchronous>, transform_indices = @transform_2, window_bounds = array<i64: 1, 128>}, {transform_indices = @transform_3, window_bounds = array<i64: 256, 128>}]} {
    %c0 = arith.constant 0 : index
    %c0_0 = arith.constant 0 : index
    %0 = vector.load %arg1[%c0, %c0_0] : memref<256x128xbf16, #tpu.memory_space<vmem>>, vector<256x128xbf16>
    %1 = arith.extf %0 : vector<256x128xbf16> to vector<256x128xf32>
    %c0_1 = arith.constant 0 : index
    %c0_2 = arith.constant 0 : index
    %2 = vector.load %arg2[%c0_1, %c0_2] : memref<1x128xf32, #tpu.memory_space<vmem>>, vector<1x128xf32>
    %3 = vector.broadcast %2 : vector<1x128xf32> to vector<256x128xf32>
    %4 = arith.mulf %1, %3 : vector<256x128xf32>
    %c0_3 = arith.constant 0 : index
    %c0_4 = arith.constant 0 : index
    %5 = vector.load %arg3[%c0_3, %c0_4] : memref<1x128xf32, #tpu.memory_space<vmem>>, vector<1x128xf32>
    %6 = vector.broadcast %5 : vector<1x128xf32> to vector<256x128xf32>
    %7 = arith.addf %4, %6 : vector<256x128xf32>
    %cst = arith.constant 0.000000e+00 : f32
    %8 = vector.broadcast %cst : f32 to vector<256x128xf32>
    %9 = arith.maximumf %7, %8 : vector<256x128xf32>
    %10 = arith.truncf %9 : vector<256x128xf32> to vector<256x128xbf16>
    %c0_5 = arith.constant 0 : index
    %c0_6 = arith.constant 0 : index
    %11 = vector.load %arg4[%c0_5, %c0_6] : memref<256x128xbf16, #tpu.memory_space<vmem>>, vector<256x128xbf16>
    tpu.vector_store %arg4[%c0_5, %c0_6], %10 {strides = array<i32>} : memref<256x128xbf16, #tpu.memory_space<vmem>>, vector<256x128xbf16>,
    return
  }
  func.func @transform_0(%arg0: i32) -> (i32, i32) {
    %c0_i32 = arith.constant 0 : i32
    %c0_i32_0 = arith.constant 0 : i32
    return %arg0, %c0_i32 : i32, i32
  }
  func.func @transform_1(%arg0: i32) -> (i32, i32) {
    %c0_i32 = arith.constant 0 : i32
    %c0_i32_0 = arith.constant 0 : i32
    %c0_i32_1 = arith.constant 0 : i32
    return %c0_i32, %c0_i32_0 : i32, i32
  }
  func.func @transform_2(%arg0: i32) -> (i32, i32) {
    %c0_i32 = arith.constant 0 : i32
    %c0_i32_0 = arith.constant 0 : i32
    %c0_i32_1 = arith.constant 0 : i32
    return %c0_i32, %c0_i32_0 : i32, i32
  }
  func.func @transform_3(%arg0: i32) -> (i32, i32) {
    %c0_i32 = arith.constant 0 : i32
    %c0_i32_0 = arith.constant 0 : i32
    return %arg0, %c0_i32 : i32, i32
  }
}

module attributes {stable_mosaic.version = 11 : i64} {
  func.func @_conv_stats_kernel(%arg0: i32, %arg1: memref<256x640xbf16, #tpu.memory_space<vmem>>, %arg2: memref<640x128xbf16, #tpu.memory_space<vmem>>, %arg3: memref<256x128xbf16, #tpu.memory_space<vmem>>, %arg4: memref<1x2x128xf32, #tpu.memory_space<vmem>>) attributes {dimension_semantics = [#tpu.dimension_semantics<parallel>], iteration_bounds = array<i64: 2>, scalar_prefetch = 0 : i64, scratch_operands = 0 : i64, tpu.core_type = #tpu.core_type<tc>, window_params = [{transform_indices = @transform_0, window_bounds = array<i64: 256, 640>}, {pipeline_mode = #tpu.pipeline_mode<synchronous>, transform_indices = @transform_1, window_bounds = array<i64: 640, 128>}, {transform_indices = @transform_2, window_bounds = array<i64: 256, 128>}, {transform_indices = @transform_3, window_bounds = array<i64: 1, 2, 128>}]} {
    %c0 = arith.constant 0 : index
    %c0_0 = arith.constant 0 : index
    %0 = vector.load %arg1[%c0, %c0_0] : memref<256x640xbf16, #tpu.memory_space<vmem>>, vector<256x640xbf16>
    %c0_1 = arith.constant 0 : index
    %c0_2 = arith.constant 0 : index
    %1 = vector.load %arg2[%c0_1, %c0_2] : memref<640x128xbf16, #tpu.memory_space<vmem>>, vector<640x128xbf16>
    %cst = arith.constant dense<0.000000e+00> : vector<256x128xf32>
    %2 = tpu.matmul %0, %1, %cst {dimension_numbers = #tpu.dot_dimension_numbers<[1], [0], [0], [1], [0, 0, 1, 1], [], []>} : vector<256x640xbf16>, vector<640x128xbf16>, vector<256x128xf32> -> vector<256x128xf32>
    %3 = arith.truncf %2 : vector<256x128xf32> to vector<256x128xbf16>
    %c0_3 = arith.constant 0 : index
    %c0_4 = arith.constant 0 : index
    %4 = vector.load %arg3[%c0_3, %c0_4] : memref<256x128xbf16, #tpu.memory_space<vmem>>, vector<256x128xbf16>
    tpu.vector_store %arg3[%c0_3, %c0_4], %3 {strides = array<i32>} : memref<256x128xbf16, #tpu.memory_space<vmem>>, vector<256x128xbf16>,
    %cst_5 = arith.constant dense<0.000000e+00> : vector<128xf32>
    %5 = vector.multi_reduction <add>, %2, %cst_5 [0] : vector<256x128xf32> to vector<128xf32>
    %6 = vector.shape_cast %5 : vector<128xf32> to vector<1x128xf32>
    %c0_6 = arith.constant 0 : index
    %c0_7 = arith.constant 0 : index
    %c0_8 = arith.constant 0 : index
    %7 = vector.load %arg4[%c0_6, %c0_7, %c0_8] : memref<1x2x128xf32, #tpu.memory_space<vmem>>, vector<1x1x128xf32>
    %8 = vector.shape_cast %7 : vector<1x1x128xf32> to vector<1x128xf32>
    %9 = vector.shape_cast %6 : vector<1x128xf32> to vector<1x1x128xf32>
    tpu.vector_store %arg4[%c0_6, %c0_7, %c0_8], %9 {strides = array<i32>} : memref<1x2x128xf32, #tpu.memory_space<vmem>>, vector<1x1x128xf32>,
    %10 = arith.mulf %2, %2 : vector<256x128xf32>
    %cst_9 = arith.constant dense<0.000000e+00> : vector<128xf32>
    %11 = vector.multi_reduction <add>, %10, %cst_9 [0] : vector<256x128xf32> to vector<128xf32>
    %12 = vector.shape_cast %11 : vector<128xf32> to vector<1x128xf32>
    %c0_10 = arith.constant 0 : index
    %c1 = arith.constant 1 : index
    %c0_11 = arith.constant 0 : index
    %13 = vector.load %arg4[%c0_10, %c1, %c0_11] : memref<1x2x128xf32, #tpu.memory_space<vmem>>, vector<1x1x128xf32>
    %14 = vector.shape_cast %13 : vector<1x1x128xf32> to vector<1x128xf32>
    %15 = vector.shape_cast %12 : vector<1x128xf32> to vector<1x1x128xf32>
    tpu.vector_store %arg4[%c0_10, %c1, %c0_11], %15 {strides = array<i32>} : memref<1x2x128xf32, #tpu.memory_space<vmem>>, vector<1x1x128xf32>,
    return
  }
  func.func @transform_0(%arg0: i32) -> (i32, i32) {
    %c0_i32 = arith.constant 0 : i32
    %c0_i32_0 = arith.constant 0 : i32
    return %arg0, %c0_i32 : i32, i32
  }
  func.func @transform_1(%arg0: i32) -> (i32, i32) {
    %c0_i32 = arith.constant 0 : i32
    %c0_i32_0 = arith.constant 0 : i32
    %c0_i32_1 = arith.constant 0 : i32
    return %c0_i32, %c0_i32_0 : i32, i32
  }
  func.func @transform_2(%arg0: i32) -> (i32, i32) {
    %c0_i32 = arith.constant 0 : i32
    %c0_i32_0 = arith.constant 0 : i32
    return %arg0, %c0_i32 : i32, i32
  }
  func.func @transform_3(%arg0: i32) -> (i32, i32, i32) {
    %c0_i32 = arith.constant 0 : i32
    %c0_i32_0 = arith.constant 0 : i32
    %c0_i32_1 = arith.constant 0 : i32
    return %arg0, %c0_i32, %c0_i32_0 : i32, i32, i32
  }
}

module attributes {stable_mosaic.version = 11 : i64} {
  func.func @_conv_stats_kernel(%arg0: i32, %arg1: memref<56x896xbf16, #tpu.memory_space<vmem>>, %arg2: memref<896x128xbf16, #tpu.memory_space<vmem>>, %arg3: memref<56x128xbf16, #tpu.memory_space<vmem>>, %arg4: memref<1x2x128xf32, #tpu.memory_space<vmem>>) attributes {dimension_semantics = [#tpu.dimension_semantics<parallel>], iteration_bounds = array<i64: 2>, scalar_prefetch = 0 : i64, scratch_operands = 0 : i64, tpu.core_type = #tpu.core_type<tc>, window_params = [{transform_indices = @transform_0, window_bounds = array<i64: 56, 896>}, {pipeline_mode = #tpu.pipeline_mode<synchronous>, transform_indices = @transform_1, window_bounds = array<i64: 896, 128>}, {transform_indices = @transform_2, window_bounds = array<i64: 56, 128>}, {transform_indices = @transform_3, window_bounds = array<i64: 1, 2, 128>}]} {
    %c0 = arith.constant 0 : index
    %c0_0 = arith.constant 0 : index
    %0 = vector.load %arg1[%c0, %c0_0] : memref<56x896xbf16, #tpu.memory_space<vmem>>, vector<56x896xbf16>
    %c0_1 = arith.constant 0 : index
    %c0_2 = arith.constant 0 : index
    %1 = vector.load %arg2[%c0_1, %c0_2] : memref<896x128xbf16, #tpu.memory_space<vmem>>, vector<896x128xbf16>
    %cst = arith.constant dense<0.000000e+00> : vector<56x128xf32>
    %2 = tpu.matmul %0, %1, %cst {dimension_numbers = #tpu.dot_dimension_numbers<[1], [0], [0], [1], [0, 0, 1, 1], [], []>} : vector<56x896xbf16>, vector<896x128xbf16>, vector<56x128xf32> -> vector<56x128xf32>
    %3 = arith.truncf %2 : vector<56x128xf32> to vector<56x128xbf16>
    %c0_3 = arith.constant 0 : index
    %c0_4 = arith.constant 0 : index
    %4 = vector.load %arg3[%c0_3, %c0_4] : memref<56x128xbf16, #tpu.memory_space<vmem>>, vector<56x128xbf16>
    tpu.vector_store %arg3[%c0_3, %c0_4], %3 {strides = array<i32>} : memref<56x128xbf16, #tpu.memory_space<vmem>>, vector<56x128xbf16>,
    %cst_5 = arith.constant dense<0.000000e+00> : vector<128xf32>
    %5 = vector.multi_reduction <add>, %2, %cst_5 [0] : vector<56x128xf32> to vector<128xf32>
    %6 = vector.shape_cast %5 : vector<128xf32> to vector<1x128xf32>
    %c0_6 = arith.constant 0 : index
    %c0_7 = arith.constant 0 : index
    %c0_8 = arith.constant 0 : index
    %7 = vector.load %arg4[%c0_6, %c0_7, %c0_8] : memref<1x2x128xf32, #tpu.memory_space<vmem>>, vector<1x1x128xf32>
    %8 = vector.shape_cast %7 : vector<1x1x128xf32> to vector<1x128xf32>
    %9 = vector.shape_cast %6 : vector<1x128xf32> to vector<1x1x128xf32>
    tpu.vector_store %arg4[%c0_6, %c0_7, %c0_8], %9 {strides = array<i32>} : memref<1x2x128xf32, #tpu.memory_space<vmem>>, vector<1x1x128xf32>,
    %10 = arith.mulf %2, %2 : vector<56x128xf32>
    %cst_9 = arith.constant dense<0.000000e+00> : vector<128xf32>
    %11 = vector.multi_reduction <add>, %10, %cst_9 [0] : vector<56x128xf32> to vector<128xf32>
    %12 = vector.shape_cast %11 : vector<128xf32> to vector<1x128xf32>
    %c0_10 = arith.constant 0 : index
    %c1 = arith.constant 1 : index
    %c0_11 = arith.constant 0 : index
    %13 = vector.load %arg4[%c0_10, %c1, %c0_11] : memref<1x2x128xf32, #tpu.memory_space<vmem>>, vector<1x1x128xf32>
    %14 = vector.shape_cast %13 : vector<1x1x128xf32> to vector<1x128xf32>
    %15 = vector.shape_cast %12 : vector<1x128xf32> to vector<1x1x128xf32>
    tpu.vector_store %arg4[%c0_10, %c1, %c0_11], %15 {strides = array<i32>} : memref<1x2x128xf32, #tpu.memory_space<vmem>>, vector<1x1x128xf32>,
    return
  }
  func.func @transform_0(%arg0: i32) -> (i32, i32) {
    %c0_i32 = arith.constant 0 : i32
    %c0_i32_0 = arith.constant 0 : i32
    return %arg0, %c0_i32 : i32, i32
  }
  func.func @transform_1(%arg0: i32) -> (i32, i32) {
    %c0_i32 = arith.constant 0 : i32
    %c0_i32_0 = arith.constant 0 : i32
    %c0_i32_1 = arith.constant 0 : i32
    return %c0_i32, %c0_i32_0 : i32, i32
  }
  func.func @transform_2(%arg0: i32) -> (i32, i32) {
    %c0_i32 = arith.constant 0 : i32
    %c0_i32_0 = arith.constant 0 : i32
    return %arg0, %c0_i32 : i32, i32
  }
  func.func @transform_3(%arg0: i32) -> (i32, i32, i32) {
    %c0_i32 = arith.constant 0 : i32
    %c0_i32_0 = arith.constant 0 : i32
    %c0_i32_1 = arith.constant 0 : i32
    return %arg0, %c0_i32, %c0_i32_0 : i32, i32, i32
  }
}

module attributes {stable_mosaic.version = 11 : i64} {
  func.func @_bn_relu_kernel(%arg0: i32, %arg1: memref<56x128xbf16, #tpu.memory_space<vmem>>, %arg2: memref<1x128xf32, #tpu.memory_space<vmem>>, %arg3: memref<1x128xf32, #tpu.memory_space<vmem>>, %arg4: memref<56x128xf32, #tpu.memory_space<vmem>>) attributes {dimension_semantics = [#tpu.dimension_semantics<parallel>], iteration_bounds = array<i64: 2>, scalar_prefetch = 0 : i64, scratch_operands = 0 : i64, tpu.core_type = #tpu.core_type<tc>, window_params = [{transform_indices = @transform_0, window_bounds = array<i64: 56, 128>}, {pipeline_mode = #tpu.pipeline_mode<synchronous>, transform_indices = @transform_1, window_bounds = array<i64: 1, 128>}, {pipeline_mode = #tpu.pipeline_mode<synchronous>, transform_indices = @transform_2, window_bounds = array<i64: 1, 128>}, {transform_indices = @transform_3, window_bounds = array<i64: 56, 128>}]} {
    %c0 = arith.constant 0 : index
    %c0_0 = arith.constant 0 : index
    %0 = vector.load %arg1[%c0, %c0_0] : memref<56x128xbf16, #tpu.memory_space<vmem>>, vector<56x128xbf16>
    %1 = arith.extf %0 : vector<56x128xbf16> to vector<56x128xf32>
    %c0_1 = arith.constant 0 : index
    %c0_2 = arith.constant 0 : index
    %2 = vector.load %arg2[%c0_1, %c0_2] : memref<1x128xf32, #tpu.memory_space<vmem>>, vector<1x128xf32>
    %3 = vector.broadcast %2 : vector<1x128xf32> to vector<56x128xf32>
    %4 = arith.mulf %1, %3 : vector<56x128xf32>
    %c0_3 = arith.constant 0 : index
    %c0_4 = arith.constant 0 : index
    %5 = vector.load %arg3[%c0_3, %c0_4] : memref<1x128xf32, #tpu.memory_space<vmem>>, vector<1x128xf32>
    %6 = vector.broadcast %5 : vector<1x128xf32> to vector<56x128xf32>
    %7 = arith.addf %4, %6 : vector<56x128xf32>
    %cst = arith.constant 0.000000e+00 : f32
    %8 = vector.broadcast %cst : f32 to vector<56x128xf32>
    %9 = arith.maximumf %7, %8 : vector<56x128xf32>
    %c0_5 = arith.constant 0 : index
    %c0_6 = arith.constant 0 : index
    %10 = vector.load %arg4[%c0_5, %c0_6] : memref<56x128xf32, #tpu.memory_space<vmem>>, vector<56x128xf32>
    tpu.vector_store %arg4[%c0_5, %c0_6], %9 {strides = array<i32>} : memref<56x128xf32, #tpu.memory_space<vmem>>, vector<56x128xf32>,
    return
  }
  func.func @transform_0(%arg0: i32) -> (i32, i32) {
    %c0_i32 = arith.constant 0 : i32
    %c0_i32_0 = arith.constant 0 : i32
    return %arg0, %c0_i32 : i32, i32
  }
  func.func @transform_1(%arg0: i32) -> (i32, i32) {
    %c0_i32 = arith.constant 0 : i32
    %c0_i32_0 = arith.constant 0 : i32
    %c0_i32_1 = arith.constant 0 : i32
    return %c0_i32, %c0_i32_0 : i32, i32
  }
  func.func @transform_2(%arg0: i32) -> (i32, i32) {
    %c0_i32 = arith.constant 0 : i32
    %c0_i32_0 = arith.constant 0 : i32
    %c0_i32_1 = arith.constant 0 : i32
    return %c0_i32, %c0_i32_0 : i32, i32
  }
  func.func @transform_3(%arg0: i32) -> (i32, i32) {
    %c0_i32 = arith.constant 0 : i32
    %c0_i32_0 = arith.constant 0 : i32
    return %arg0, %c0_i32 : i32, i32
  }
}

module attributes {stable_mosaic.version = 11 : i64} {
  func.func @_conv_stats_kernel(%arg0: i32, %arg1: memref<56x128xbf16, #tpu.memory_space<vmem>>, %arg2: memref<128x384xbf16, #tpu.memory_space<vmem>>, %arg3: memref<56x384xbf16, #tpu.memory_space<vmem>>, %arg4: memref<1x2x384xf32, #tpu.memory_space<vmem>>) attributes {dimension_semantics = [#tpu.dimension_semantics<parallel>], iteration_bounds = array<i64: 2>, scalar_prefetch = 0 : i64, scratch_operands = 0 : i64, tpu.core_type = #tpu.core_type<tc>, window_params = [{transform_indices = @transform_0, window_bounds = array<i64: 56, 128>}, {pipeline_mode = #tpu.pipeline_mode<synchronous>, transform_indices = @transform_1, window_bounds = array<i64: 128, 384>}, {transform_indices = @transform_2, window_bounds = array<i64: 56, 384>}, {transform_indices = @transform_3, window_bounds = array<i64: 1, 2, 384>}]} {
    %c0 = arith.constant 0 : index
    %c0_0 = arith.constant 0 : index
    %0 = vector.load %arg1[%c0, %c0_0] : memref<56x128xbf16, #tpu.memory_space<vmem>>, vector<56x128xbf16>
    %c0_1 = arith.constant 0 : index
    %c0_2 = arith.constant 0 : index
    %1 = vector.load %arg2[%c0_1, %c0_2] : memref<128x384xbf16, #tpu.memory_space<vmem>>, vector<128x384xbf16>
    %cst = arith.constant dense<0.000000e+00> : vector<56x384xf32>
    %2 = tpu.matmul %0, %1, %cst {dimension_numbers = #tpu.dot_dimension_numbers<[1], [0], [0], [1], [0, 0, 1, 1], [], []>} : vector<56x128xbf16>, vector<128x384xbf16>, vector<56x384xf32> -> vector<56x384xf32>
    %3 = arith.truncf %2 : vector<56x384xf32> to vector<56x384xbf16>
    %c0_3 = arith.constant 0 : index
    %c0_4 = arith.constant 0 : index
    %4 = vector.load %arg3[%c0_3, %c0_4] : memref<56x384xbf16, #tpu.memory_space<vmem>>, vector<56x384xbf16>
    tpu.vector_store %arg3[%c0_3, %c0_4], %3 {strides = array<i32>} : memref<56x384xbf16, #tpu.memory_space<vmem>>, vector<56x384xbf16>,
    %cst_5 = arith.constant dense<0.000000e+00> : vector<384xf32>
    %5 = vector.multi_reduction <add>, %2, %cst_5 [0] : vector<56x384xf32> to vector<384xf32>
    %6 = vector.shape_cast %5 : vector<384xf32> to vector<1x384xf32>
    %c0_6 = arith.constant 0 : index
    %c0_7 = arith.constant 0 : index
    %c0_8 = arith.constant 0 : index
    %7 = vector.load %arg4[%c0_6, %c0_7, %c0_8] : memref<1x2x384xf32, #tpu.memory_space<vmem>>, vector<1x1x384xf32>
    %8 = vector.shape_cast %7 : vector<1x1x384xf32> to vector<1x384xf32>
    %9 = vector.shape_cast %6 : vector<1x384xf32> to vector<1x1x384xf32>
    tpu.vector_store %arg4[%c0_6, %c0_7, %c0_8], %9 {strides = array<i32>} : memref<1x2x384xf32, #tpu.memory_space<vmem>>, vector<1x1x384xf32>,
    %10 = arith.mulf %2, %2 : vector<56x384xf32>
    %cst_9 = arith.constant dense<0.000000e+00> : vector<384xf32>
    %11 = vector.multi_reduction <add>, %10, %cst_9 [0] : vector<56x384xf32> to vector<384xf32>
    %12 = vector.shape_cast %11 : vector<384xf32> to vector<1x384xf32>
    %c0_10 = arith.constant 0 : index
    %c1 = arith.constant 1 : index
    %c0_11 = arith.constant 0 : index
    %13 = vector.load %arg4[%c0_10, %c1, %c0_11] : memref<1x2x384xf32, #tpu.memory_space<vmem>>, vector<1x1x384xf32>
    %14 = vector.shape_cast %13 : vector<1x1x384xf32> to vector<1x384xf32>
    %15 = vector.shape_cast %12 : vector<1x384xf32> to vector<1x1x384xf32>
    tpu.vector_store %arg4[%c0_10, %c1, %c0_11], %15 {strides = array<i32>} : memref<1x2x384xf32, #tpu.memory_space<vmem>>, vector<1x1x384xf32>,
    return
  }
  func.func @transform_0(%arg0: i32) -> (i32, i32) {
    %c0_i32 = arith.constant 0 : i32
    %c0_i32_0 = arith.constant 0 : i32
    return %arg0, %c0_i32 : i32, i32
  }
  func.func @transform_1(%arg0: i32) -> (i32, i32) {
    %c0_i32 = arith.constant 0 : i32
    %c0_i32_0 = arith.constant 0 : i32
    %c0_i32_1 = arith.constant 0 : i32
    return %c0_i32, %c0_i32_0 : i32, i32
  }
  func.func @transform_2(%arg0: i32) -> (i32, i32) {
    %c0_i32 = arith.constant 0 : i32
    %c0_i32_0 = arith.constant 0 : i32
    return %arg0, %c0_i32 : i32, i32
  }
  func.func @transform_3(%arg0: i32) -> (i32, i32, i32) {
    %c0_i32 = arith.constant 0 : i32
    %c0_i32_0 = arith.constant 0 : i32
    %c0_i32_1 = arith.constant 0 : i32
    return %arg0, %c0_i32, %c0_i32_0 : i32, i32, i32
  }
}

module attributes {stable_mosaic.version = 11 : i64} {
  func.func @_bn_relu_kernel(%arg0: i32, %arg1: memref<56x384xbf16, #tpu.memory_space<vmem>>, %arg2: memref<1x384xf32, #tpu.memory_space<vmem>>, %arg3: memref<1x384xf32, #tpu.memory_space<vmem>>, %arg4: memref<56x384xf32, #tpu.memory_space<vmem>>) attributes {dimension_semantics = [#tpu.dimension_semantics<parallel>], iteration_bounds = array<i64: 2>, scalar_prefetch = 0 : i64, scratch_operands = 0 : i64, tpu.core_type = #tpu.core_type<tc>, window_params = [{transform_indices = @transform_0, window_bounds = array<i64: 56, 384>}, {pipeline_mode = #tpu.pipeline_mode<synchronous>, transform_indices = @transform_1, window_bounds = array<i64: 1, 384>}, {pipeline_mode = #tpu.pipeline_mode<synchronous>, transform_indices = @transform_2, window_bounds = array<i64: 1, 384>}, {transform_indices = @transform_3, window_bounds = array<i64: 56, 384>}]} {
    %c0 = arith.constant 0 : index
    %c0_0 = arith.constant 0 : index
    %0 = vector.load %arg1[%c0, %c0_0] : memref<56x384xbf16, #tpu.memory_space<vmem>>, vector<56x384xbf16>
    %1 = arith.extf %0 : vector<56x384xbf16> to vector<56x384xf32>
    %c0_1 = arith.constant 0 : index
    %c0_2 = arith.constant 0 : index
    %2 = vector.load %arg2[%c0_1, %c0_2] : memref<1x384xf32, #tpu.memory_space<vmem>>, vector<1x384xf32>
    %3 = vector.broadcast %2 : vector<1x384xf32> to vector<56x384xf32>
    %4 = arith.mulf %1, %3 : vector<56x384xf32>
    %c0_3 = arith.constant 0 : index
    %c0_4 = arith.constant 0 : index
    %5 = vector.load %arg3[%c0_3, %c0_4] : memref<1x384xf32, #tpu.memory_space<vmem>>, vector<1x384xf32>
    %6 = vector.broadcast %5 : vector<1x384xf32> to vector<56x384xf32>
    %7 = arith.addf %4, %6 : vector<56x384xf32>
    %cst = arith.constant 0.000000e+00 : f32
    %8 = vector.broadcast %cst : f32 to vector<56x384xf32>
    %9 = arith.maximumf %7, %8 : vector<56x384xf32>
    %c0_5 = arith.constant 0 : index
    %c0_6 = arith.constant 0 : index
    %10 = vector.load %arg4[%c0_5, %c0_6] : memref<56x384xf32, #tpu.memory_space<vmem>>, vector<56x384xf32>
    tpu.vector_store %arg4[%c0_5, %c0_6], %9 {strides = array<i32>} : memref<56x384xf32, #tpu.memory_space<vmem>>, vector<56x384xf32>,
    return
  }
  func.func @transform_0(%arg0: i32) -> (i32, i32) {
    %c0_i32 = arith.constant 0 : i32
    %c0_i32_0 = arith.constant 0 : i32
    return %arg0, %c0_i32 : i32, i32
  }
  func.func @transform_1(%arg0: i32) -> (i32, i32) {
    %c0_i32 = arith.constant 0 : i32
    %c0_i32_0 = arith.constant 0 : i32
    %c0_i32_1 = arith.constant 0 : i32
    return %c0_i32, %c0_i32_0 : i32, i32
  }
  func.func @transform_2(%arg0: i32) -> (i32, i32) {
    %c0_i32 = arith.constant 0 : i32
    %c0_i32_0 = arith.constant 0 : i32
    %c0_i32_1 = arith.constant 0 : i32
    return %c0_i32, %c0_i32_0 : i32, i32
  }
  func.func @transform_3(%arg0: i32) -> (i32, i32) {
    %c0_i32 = arith.constant 0 : i32
    %c0_i32_0 = arith.constant 0 : i32
    return %arg0, %c0_i32 : i32, i32
  }
}

module attributes {stable_mosaic.version = 11 : i64} {
  func.func @_maxpool_kernel(%arg0: i32, %arg1: memref<3x56x4xf32, #tpu.memory_space<vmem>>, %arg2: memref<56x4xf32, #tpu.memory_space<vmem>>) attributes {dimension_semantics = [#tpu.dimension_semantics<parallel>], iteration_bounds = array<i64: 2>, scalar_prefetch = 0 : i64, scratch_operands = 0 : i64, tpu.core_type = #tpu.core_type<tc>, window_params = [{transform_indices = @transform_0, window_bounds = array<i64: 3, 56, 4>}, {transform_indices = @transform_1, window_bounds = array<i64: 56, 4>}]} {
    %c0 = arith.constant 0 : index
    %c0_0 = arith.constant 0 : index
    %c0_1 = arith.constant 0 : index
    %0 = vector.load %arg1[%c0, %c0_0, %c0_1] : memref<3x56x4xf32, #tpu.memory_space<vmem>>, vector<1x56x4xf32>
    %1 = vector.shape_cast %0 : vector<1x56x4xf32> to vector<56x4xf32>
    %c1 = arith.constant 1 : index
    %c0_2 = arith.constant 0 : index
    %c0_3 = arith.constant 0 : index
    %2 = vector.load %arg1[%c1, %c0_2, %c0_3] : memref<3x56x4xf32, #tpu.memory_space<vmem>>, vector<1x56x4xf32>
    %3 = vector.shape_cast %2 : vector<1x56x4xf32> to vector<56x4xf32>
    %4 = arith.maximumf %1, %3 : vector<56x4xf32>
    %c2 = arith.constant 2 : index
    %c0_4 = arith.constant 0 : index
    %c0_5 = arith.constant 0 : index
    %5 = vector.load %arg1[%c2, %c0_4, %c0_5] : memref<3x56x4xf32, #tpu.memory_space<vmem>>, vector<1x56x4xf32>
    %6 = vector.shape_cast %5 : vector<1x56x4xf32> to vector<56x4xf32>
    %7 = arith.maximumf %4, %6 : vector<56x4xf32>
    %c0_6 = arith.constant 0 : index
    %c0_7 = arith.constant 0 : index
    %8 = vector.load %arg2[%c0_6, %c0_7] : memref<56x4xf32, #tpu.memory_space<vmem>>, vector<56x4xf32>
    tpu.vector_store %arg2[%c0_6, %c0_7], %7 {strides = array<i32>} : memref<56x4xf32, #tpu.memory_space<vmem>>, vector<56x4xf32>,
    return
  }
  func.func @transform_0(%arg0: i32) -> (i32, i32, i32) {
    %c0_i32 = arith.constant 0 : i32
    %c0_i32_0 = arith.constant 0 : i32
    %c0_i32_1 = arith.constant 0 : i32
    return %c0_i32, %arg0, %c0_i32_0 : i32, i32, i32
  }
  func.func @transform_1(%arg0: i32) -> (i32, i32) {
    %c0_i32 = arith.constant 0 : i32
    %c0_i32_0 = arith.constant 0 : i32
    return %arg0, %c0_i32 : i32, i32
  }
}

</mosaic_0001>

<llo_original>
// kernel: inception_b_forward.12
$region0: #{inception_b_forward.12}
  #allocation0 [shape = 'u32[]', space=smem, size = 0x4, offset = 0x4, fixed_abs, tag = 'smem constant byte address 0x4 - core index']
  #allocation1 [shape = 'u32[144,128]{1,0:T(1,128)}', space=vmem, size = 0x12000, scoped, tag = 'internal scratch']
  %s0 = inlined_call_operand.vmem [shape: bf16[512,128], index: 0, kind: input, shape index: {}]
  %s1 = inlined_call_operand.vmem [shape: f32[1,128], index: 1, kind: input, shape index: {}]
  %s2 = inlined_call_operand.vmem [shape: f32[1,128], index: 2, kind: input, shape index: {}]
  %s3 = inlined_call_operand.vmem [shape: bf16[512,128], index: 3, kind: output, shape index: {}]
  %s4 = sld [smem:[#allocation0]]
  $region45: #{inception_b_forward.12} parent=0
    _
  %s6 = ssub.s32 1, %s4
  %s7 = scalar_select 0, %s6, %s4
  loop: start=0, step=1, limit=4
  $region2: #{inception_b_forward.12} parent=0 // loop_pre_header
    _
  $region3: #{inception_b_forward.12} parent=0 // loop_header
    %s9 = sphi 0, %s13
    %p10 = scmp.ge.s32.totalorder %s9, 4
    %s19 = sphi 0, %s21
    %s22 = sphi 0, %s19
    %s23 = sphi 0, %s22
    %s39 = sphi 0, %s23
    %s43 = sphi 0, %s43
    %s45 = sphi 0, %s43
    %s46 = sphi 0, %s45
    %s60 = sphi 0, %s46
    %s64 = sphi 0, %s64
    %s66 = sphi 0, %s64
    %s67 = sphi 0, %s66
    %s81 = sphi 0, %s67
    %s87 = sphi 0, %s89
    %s90 = sphi 0, %s87
    %s91 = sphi 0, %s90
    %s107 = sphi 0, %s91
  $region4: #{inception_b_forward.12} parent=0 // loop_header_branch
    %12 = sbr.rel (%p10) target = $region8
  $region5: #{inception_b_forward.12} parent=0 // loop_body
    %s14 = ssub.s32 %s9, 1
    %s15 = ssub.s32 %s9, 2
    %s16 = sadd.s32 %s9, 1
    %s17 = ssub.s32 %s9, %s16
    %p18 = scmp.eq.s32.totalorder %s17, 0
    %s20 = sadd.s32 %s19, 1
    %s21 = scalar_select %p18, %s19, %s20
    %p24 = pneg %p18
    %p25 = scmp.eq.s32.totalorder %s9, 1
    %p26 = por %p24, %p25
    %p27 = scmp.ne.s32.totalorder %s19, %s22
    %p28 = scmp.eq.s32.totalorder %s9, 0
    %p29 = por %p27, %p28
    %p30 = scmp.ne.s32.totalorder %s19, %s22
    %p31 = scmp.eq.s32.totalorder %s14, 1
    %p32 = por %p30, %p31
    %p33 = scmp.ne.s32.totalorder %s22, %s23
    %p34 = scmp.eq.s32.totalorder %s14, 0
    %p35 = por %p33, %p34
    %p36 = scmp.ne.s32.totalorder %s22, %s23
    %p37 = scmp.eq.s32.totalorder %s15, 1
    %p38 = por %p36, %p37
    %p40 = scmp.ne.s32.totalorder %s23, %s39
    %p41 = scmp.eq.s32.totalorder %s15, 0
    %p42 = por %p40, %p41
    %s44 = sadd.s32 %s43, 1
    %p47 = scmp.eq.s32.totalorder %s9, 1
    %p48 = scmp.ne.s32.totalorder %s43, %s45
    %p49 = scmp.eq.s32.totalorder %s9, 0
    %p50 = por %p48, %p49
    %p51 = scmp.ne.s32.totalorder %s43, %s45
    %p52 = scmp.eq.s32.totalorder %s14, 1
    %p53 = por %p51, %p52
    %p54 = scmp.ne.s32.totalorder %s45, %s46
    %p55 = scmp.eq.s32.totalorder %s14, 0
    %p56 = por %p54, %p55
    %p57 = scmp.ne.s32.totalorder %s45, %s46
    %p58 = scmp.eq.s32.totalorder %s15, 1
    %p59 = por %p57, %p58
    %p61 = scmp.ne.s32.totalorder %s46, %s60
    %p62 = scmp.eq.s32.totalorder %s15, 0
    %p63 = por %p61, %p62
    %s65 = sadd.s32 %s64, 1
    %p68 = scmp.eq.s32.totalorder %s9, 1
    %p69 = scmp.ne.s32.totalorder %s64, %s66
    %p70 = scmp.eq.s32.totalorder %s9, 0
    %p71 = por %p69, %p70
    %p72 = scmp.ne.s32.totalorder %s64, %s66
    %p73 = scmp.eq.s32.totalorder %s14, 1
    %p74 = por %p72, %p73
    %p75 = scmp.ne.s32.totalorder %s66, %s67
    %p76 = scmp.eq.s32.totalorder %s14, 0
    %p77 = por %p75, %p76
    %p78 = scmp.ne.s32.totalorder %s66, %s67
    %p79 = scmp.eq.s32.totalorder %s15, 1
    %p80 = por %p78, %p79
    %p82 = scmp.ne.s32.totalorder %s67, %s81
    %p83 = scmp.eq.s32.totalorder %s15, 0
    %p84 = por %p82, %p83
    %s85 = ssub.s32 %s9, %s16
    %p86 = scmp.eq.s32.totalorder %s85, 0
    %s88 = sadd.s32 %s87, 1
    %s89 = scalar_select %p86, %s87, %s88
    %p92 = pneg %p86
    %p93 = scmp.eq.s32.totalorder %s9, 1
    %p94 = por %p92, %p93
    %p95 = scmp.ne.s32.totalorder %s87, %s90
    %p96 = scmp.eq.s32.totalorder %s9, 0
    %p97 = por %p95, %p96
    %p98 = scmp.ne.s32.totalorder %s87, %s90
    %p99 = scmp.eq.s32.totalorder %s14, 1
    %p100 = por %p98, %p99
    %p101 = scmp.ne.s32.totalorder %s90, %s91
    %p102 = scmp.eq.s32.totalorder %s14, 0
    %p103 = por %p101, %p102
    %p104 = scmp.ne.s32.totalorder %s90, %s91
    %p105 = scmp.eq.s32.totalorder %s15, 1
    %p106 = por %p104, %p105
    %p108 = scmp.ne.s32.totalorder %s91, %s107
    %p109 = scmp.eq.s32.totalorder %s15, 0
    %p110 = por %p108, %p109
    %p111 = scmp.le.s32.totalorder 1, %s9
    %p112 = scmp.lt.s32.totalorder %s9, 3
    %p113 = pnand %p111, %p112
    %p114 = pneg %p113
    // Predicated region
    $region9: #{inception_b_forward.12} parent=5 // pred_check
      _
    $region10: #{inception_b_forward.12} parent=5 // pred_check_branch
      %116 = sbr.rel (%p113) target = $region12
    $region11: #{inception_b_forward.12} parent=5 // pred_region
      %s117 = ssub.s32 %s9, 1
      // Predicated region
      $region13: #{inception_b_forward.12} parent=11 // pred_check
        %p118 = pneg %p56
      $region14: #{inception_b_forward.12} parent=11 // pred_check_branch
        %120 = sbr.rel (%p118) target = $region16
      $region15: #{inception_b_forward.12} parent=11 // pred_region
        _
      $region16: #{inception_b_forward.12} parent=11 // pred_fallthru
        _
      // Predicated region
      $region17: #{inception_b_forward.12} parent=11 // pred_check
        %p121 = pneg %p77
      $region18: #{inception_b_forward.12} parent=11 // pred_check_branch
        %123 = sbr.rel (%p121) target = $region20
      $region19: #{inception_b_forward.12} parent=11 // pred_region
        _
      $region20: #{inception_b_forward.12} parent=11 // pred_fallthru
        _
    $region12: #{inception_b_forward.12} parent=5 // pred_fallthru
      _
    %p124 = scmp.lt.s32.totalorder %s9, 2
    // Predicated region
    $region21: #{inception_b_forward.12} parent=5 // pred_check
      %p125 = pneg %p124
    $region22: #{inception_b_forward.12} parent=5 // pred_check_branch
      %127 = sbr.rel (%p125) target = $region24
    $region23: #{inception_b_forward.12} parent=5 // pred_region
      // Predicated region
      $region25: #{inception_b_forward.12} parent=23 // pred_check
        %p128 = pneg %p29
      $region26: #{inception_b_forward.12} parent=23 // pred_check_branch
        %130 = sbr.rel (%p128) target = $region28
      $region27: #{inception_b_forward.12} parent=23 // pred_region
        %s131 = smul.u32 32, %s9
        %p132 = scmp.lt.s32.totalorder %s131, 63
        %s133 = scalar_select %p132, %s131, 63
        %s134 = smul.addr %s133, 4
        %s135 = scalar_lea.vmem %s0, %s134
        %s136 = smul.u32 32, %s9
      $region28: #{inception_b_forward.12} parent=23 // pred_fallthru
        _
    $region24: #{inception_b_forward.12} parent=5 // pred_fallthru
      _
    %p137 = scmp.le.s32.totalorder 1, %s9
    %p138 = scmp.lt.s32.totalorder %s9, 3
    %p139 = pnand %p137, %p138
    %p140 = pneg %p139
    // Predicated region
    $region29: #{inception_b_forward.12} parent=5 // pred_check
      _
    $region30: #{inception_b_forward.12} parent=5 // pred_check_branch
      %142 = sbr.rel (%p139) target = $region32
    $region31: #{inception_b_forward.12} parent=5 // pred_region
      %s143 = ssub.s32 %s9, 1
      %s144 = smul.u32 32, %s14
      %p145 = scmp.lt.s32.totalorder %s144, 63
      %s146 = scalar_select %p145, %s144, 63
      %s147 = smul.addr %s146, 4
      %s148 = scalar_lea.vmem %s0, %s147
      %p149 = pneg %p35
      %p150 = pneg %p32
      %p151 = pneg %p56
      %p152 = pneg %p53
      %p153 = pneg %p77
      %p154 = pneg %p74
      %p155 = pneg %p103
      %p156 = pneg %p100
      %s157 = smul.u32 32, %s14
      %p158 = scmp.lt.s32.totalorder %s157, 63
      %s159 = scalar_select %p158, %s157, 63
      %s160 = smul.addr %s159, 4
      %s161 = scalar_lea.vmem %s3, %s160
      %s162 = smul.u32 32, %s14
      %p163 = scmp.lt.s32.totalorder %s162, 63
      %s164 = scalar_select %p163, %s162, 63
      %s165 = smul.addr %s164, 4
      %s166 = scalar_lea.vmem %s0, %s165
      %s167 = smul.u32 32, %s14
      %s168 = smul.u32 32, %s14
      %p169 = scmp.lt.s32.totalorder %s168, 63
      %s170 = scalar_select %p169, %s168, 63
      %s171 = smul.addr %s170, 4
      %s172 = scalar_lea.vmem %s3, %s171
      %s173 = smul.u32 32, %s14
      %v174 = vld [vmem:[%s166] sm:$0xf]
      %v175 = vld [vmem:[%s166 + $0x4] sm:$0xf]
      %v176 = vld [vmem:[%s166 + $0x8] sm:$0xf]
      %v177 = vld [vmem:[%s166 + $0xc] sm:$0xf]
      %v178 = vld [vmem:[%s166 + $0x10] sm:$0xf]
      %v179 = vld [vmem:[%s166 + $0x14] sm:$0xf]
      %v180 = vld [vmem:[%s166 + $0x18] sm:$0xf]
      %v181 = vld [vmem:[%s166 + $0x1c] sm:$0xf]
      %v182 = vld [vmem:[%s166 + $0x20] sm:$0xf]
      %v183 = vld [vmem:[%s166 + $0x24] sm:$0xf]
      %v184 = vld [vmem:[%s166 + $0x28] sm:$0xf]
      %v185 = vld [vmem:[%s166 + $0x2c] sm:$0xf]
      %v186 = vld [vmem:[%s166 + $0x30] sm:$0xf]
      %v187 = vld [vmem:[%s166 + $0x34] sm:$0xf]
      %v188 = vld [vmem:[%s166 + $0x38] sm:$0xf]
      %v189 = vld [vmem:[%s166 + $0x3c] sm:$0xf]
      %v190 = vld [vmem:[%s166 + $0x40] sm:$0xf]
      %v191 = vld [vmem:[%s166 + $0x44] sm:$0xf]
      %v192 = vld [vmem:[%s166 + $0x48] sm:$0xf]
      %v193 = vld [vmem:[%s166 + $0x4c] sm:$0xf]
      %v194 = vld [vmem:[%s166 + $0x50] sm:$0xf]
      %v195 = vld [vmem:[%s166 + $0x54] sm:$0xf]
      %v196 = vld [vmem:[%s166 + $0x58] sm:$0xf]
      %v197 = vld [vmem:[%s166 + $0x5c] sm:$0xf]
      %v198 = vld [vmem:[%s166 + $0x60] sm:$0xf]
      %v199 = vld [vmem:[%s166 + $0x64] sm:$0xf]
      %v200 = vld [vmem:[%s166 + $0x68] sm:$0xf]
      %v201 = vld [vmem:[%s166 + $0x6c] sm:$0xf]
      %v202 = vld [vmem:[%s166 + $0x70] sm:$0xf]
      %v203 = vld [vmem:[%s166 + $0x74] sm:$0xf]
      %v204 = vld [vmem:[%s166 + $0x78] sm:$0xf]
      %v205 = vld [vmem:[%s166 + $0x7c] sm:$0xf]
      %v206 = vunpack.c.l.bf16 %v174
      %v207 = vunpack.c.l.bf16 %v175
      %v208 = vunpack.c.l.bf16 %v176
      %v209 = vunpack.c.l.bf16 %v177
      %v210 = vunpack.c.l.bf16 %v178
      %v211 = vunpack.c.l.bf16 %v179
      %v212 = vunpack.c.l.bf16 %v180
      %v213 = vunpack.c.l.bf16 %v181
      %v214 = vunpack.c.l.bf16 %v182
      %v215 = vunpack.c.l.bf16 %v183
      %v216 = vunpack.c.l.bf16 %v184
      %v217 = vunpack.c.l.bf16 %v185
      %v218 = vunpack.c.l.bf16 %v186
      %v219 = vunpack.c.l.bf16 %v187
      %v220 = vunpack.c.l.bf16 %v188
      %v221 = vunpack.c.l.bf16 %v189
      %v222 = vunpack.c.l.bf16 %v190
      %v223 = vunpack.c.l.bf16 %v191
      %v224 = vunpack.c.l.bf16 %v192
      %v225 = vunpack.c.l.bf16 %v193
      %v226 = vunpack.c.l.bf16 %v194
      %v227 = vunpack.c.l.bf16 %v195
      %v228 = vunpack.c.l.bf16 %v196
      %v229 = vunpack.c.l.bf16 %v197
      %v230 = vunpack.c.l.bf16 %v198
      %v231 = vunpack.c.l.bf16 %v199
      %v232 = vunpack.c.l.bf16 %v200
      %v233 = vunpack.c.l.bf16 %v201
      %v234 = vunpack.c.l.bf16 %v202
      %v235 = vunpack.c.l.bf16 %v203
      %v236 = vunpack.c.l.bf16 %v204
      %v237 = vunpack.c.l.bf16 %v205
      %v238 = vld [vmem:[%s1] sm:$0x1]
      %v240 = vlaneseq
      %v241 = vshrl.u32 %v240, 7
      %v242 = vsub.s32 0, %v241
      %v243 = vrot.slane %v238, %v242
      %v245 = vmul.f32 %v206, %v243
      %v246 = vmul.f32 %v207, %v243
      %v247 = vmul.f32 %v208, %v243
      %v248 = vmul.f32 %v209, %v243
      %v249 = vmul.f32 %v210, %v243
      %v250 = vmul.f32 %v211, %v243
      %v251 = vmul.f32 %v212, %v243
      %v252 = vmul.f32 %v213, %v243
      %v253 = vmul.f32 %v214, %v243
      %v254 = vmul.f32 %v215, %v243
      %v255 = vmul.f32 %v216, %v243
      %v256 = vmul.f32 %v217, %v243
      %v257 = vmul.f32 %v218, %v243
      %v258 = vmul.f32 %v219, %v243
      %v259 = vmul.f32 %v220, %v243
      %v260 = vmul.f32 %v221, %v243
      %v261 = vmul.f32 %v222, %v243
      %v262 = vmul.f32 %v223, %v243
      %v263 = vmul.f32 %v224, %v243
      %v264 = vmul.f32 %v225, %v243
      %v265 = vmul.f32 %v226, %v243
      %v266 = vmul.f32 %v227, %v243
      %v267 = vmul.f32 %v228, %v243
      %v268 = vmul.f32 %v229, %v243
      %v269 = vmul.f32 %v230, %v243
      %v270 = vmul.f32 %v231, %v243
      %v271 = vmul.f32 %v232, %v243
      %v272 = vmul.f32 %v233, %v243
      %v273 = vmul.f32 %v234, %v243
      %v274 = vmul.f32 %v235, %v243
      %v275 = vmul.f32 %v236, %v243
      %v276 = vmul.f32 %v237, %v243
      %v277 = vld [vmem:[%s2] sm:$0x1]
      %v279 = vlaneseq
      %v280 = vshrl.u32 %v279, 7
      %v281 = vsub.s32 0, %v280
      %v282 = vrot.slane %v277, %v281
      %v284 = vadd.f32 %v245, %v282
      %v285 = vadd.f32 %v246, %v282
      %v286 = vadd.f32 %v247, %v282
      %v287 = vadd.f32 %v248, %v282
      %v288 = vadd.f32 %v249, %v282
      %v289 = vadd.f32 %v250, %v282
      %v290 = vadd.f32 %v251, %v282
      %v291 = vadd.f32 %v252, %v282
      %v292 = vadd.f32 %v253, %v282
      %v293 = vadd.f32 %v254, %v282
      %v294 = vadd.f32 %v255, %v282
      %v295 = vadd.f32 %v256, %v282
      %v296 = vadd.f32 %v257, %v282
      %v297 = vadd.f32 %v258, %v282
      %v298 = vadd.f32 %v259, %v282
      %v299 = vadd.f32 %v260, %v282
      %v300 = vadd.f32 %v261, %v282
      %v301 = vadd.f32 %v262, %v282
      %v302 = vadd.f32 %v263, %v282
      %v303 = vadd.f32 %v264, %v282
      %v304 = vadd.f32 %v265, %v282
      %v305 = vadd.f32 %v266, %v282
      %v306 = vadd.f32 %v267, %v282
      %v307 = vadd.f32 %v268, %v282
      %v308 = vadd.f32 %v269, %v282
      %v309 = vadd.f32 %v270, %v282
      %v310 = vadd.f32 %v271, %v282
      %v311 = vadd.f32 %v272, %v282
      %v312 = vadd.f32 %v273, %v282
      %v313 = vadd.f32 %v274, %v282
      %v314 = vadd.f32 %v275, %v282
      %v315 = vadd.f32 %v276, %v282
      %v316 = vmax.f32 %v284, 0.0
      %v317 = vmax.f32 %v285, 0.0
      %v318 = vmax.f32 %v286, 0.0
      %v319 = vmax.f32 %v287, 0.0
      %v320 = vmax.f32 %v288, 0.0
      %v321 = vmax.f32 %v289, 0.0
      %v322 = vmax.f32 %v290, 0.0
      %v323 = vmax.f32 %v291, 0.0
      %v324 = vmax.f32 %v292, 0.0
      %v325 = vmax.f32 %v293, 0.0
      %v326 = vmax.f32 %v294, 0.0
      %v327 = vmax.f32 %v295, 0.0
      %v328 = vmax.f32 %v296, 0.0
      %v329 = vmax.f32 %v297, 0.0
      %v330 = vmax.f32 %v298, 0.0
      %v331 = vmax.f32 %v299, 0.0
      %v332 = vmax.f32 %v300, 0.0
      %v333 = vmax.f32 %v301, 0.0
      %v334 = vmax.f32 %v302, 0.0
      %v335 = vmax.f32 %v303, 0.0
      %v336 = vmax.f32 %v304, 0.0
      %v337 = vmax.f32 %v305, 0.0
      %v338 = vmax.f32 %v306, 0.0
      %v339 = vmax.f32 %v307, 0.0
      %v340 = vmax.f32 %v308, 0.0
      %v341 = vmax.f32 %v309, 0.0
      %v342 = vmax.f32 %v310, 0.0
      %v343 = vmax.f32 %v311, 0.0
      %v344 = vmax.f32 %v312, 0.0
      %v345 = vmax.f32 %v313, 0.0
      %v346 = vmax.f32 %v314, 0.0
      %v347 = vmax.f32 %v315, 0.0
      %v348 = vpack.c.bf16 %v317, %v316
      %v349 = vpack.c.bf16 %v319, %v318
      %v350 = vpack.c.bf16 %v321, %v320
      %v351 = vpack.c.bf16 %v323, %v322
      %v352 = vpack.c.bf16 %v325, %v324
      %v353 = vpack.c.bf16 %v327, %v326
      %v354 = vpack.c.bf16 %v329, %v328
      %v355 = vpack.c.bf16 %v331, %v330
      %v356 = vpack.c.bf16 %v333, %v332
      %v357 = vpack.c.bf16 %v335, %v334
      %v358 = vpack.c.bf16 %v337, %v336
      %v359 = vpack.c.bf16 %v339, %v338
      %v360 = vpack.c.bf16 %v341, %v340
      %v361 = vpack.c.bf16 %v343, %v342
      %v362 = vpack.c.bf16 %v345, %v344
      %v363 = vpack.c.bf16 %v347, %v346
      %v380 = vunpack.c.l.b16 %v348
      %v381 = vunpack.c.h.b16 %v348
      %v382 = vunpack.c.l.b16 %v349
      %v383 = vunpack.c.h.b16 %v349
      %v384 = vunpack.c.l.b16 %v350
      %v385 = vunpack.c.h.b16 %v350
      %v386 = vunpack.c.l.b16 %v351
      %v387 = vunpack.c.h.b16 %v351
      %v388 = vunpack.c.l.b16 %v352
      %v389 = vunpack.c.h.b16 %v352
      %v390 = vunpack.c.l.b16 %v353
      %v391 = vunpack.c.h.b16 %v353
      %v392 = vunpack.c.l.b16 %v354
      %v393 = vunpack.c.h.b16 %v354
      %v394 = vunpack.c.l.b16 %v355
      %v395 = vunpack.c.h.b16 %v355
      %v396 = vunpack.c.l.b16 %v356
      %v397 = vunpack.c.h.b16 %v356
      %v398 = vunpack.c.l.b16 %v357
      %v399 = vunpack.c.h.b16 %v357
      %v400 = vunpack.c.l.b16 %v358
      %v401 = vunpack.c.h.b16 %v358
      %v402 = vunpack.c.l.b16 %v359
      %v403 = vunpack.c.h.b16 %v359
      %v404 = vunpack.c.l.b16 %v360
      %v405 = vunpack.c.h.b16 %v360
      %v406 = vunpack.c.l.b16 %v361
      %v407 = vunpack.c.h.b16 %v361
      %v408 = vunpack.c.l.b16 %v362
      %v409 = vunpack.c.h.b16 %v362
      %v410 = vunpack.c.l.b16 %v363
      %v411 = vunpack.c.h.b16 %v363
      %v412 = vpack.c.b16 %v380, %v380
      %v413 = vpack.c.b16 %v381, %v381
      %v414 = vpack.c.b16 %v382, %v382
      %v415 = vpack.c.b16 %v383, %v383
      %v416 = vpack.c.b16 %v384, %v384
      %v417 = vpack.c.b16 %v385, %v385
      %v418 = vpack.c.b16 %v386, %v386
      %v419 = vpack.c.b16 %v387, %v387
      %v420 = vpack.c.b16 %v388, %v388
      %v421 = vpack.c.b16 %v389, %v389
      %v422 = vpack.c.b16 %v390, %v390
      %v423 = vpack.c.b16 %v391, %v391
      %v424 = vpack.c.b16 %v392, %v392
      %v425 = vpack.c.b16 %v393, %v393
      %v426 = vpack.c.b16 %v394, %v394
      %v427 = vpack.c.b16 %v395, %v395
      %v428 = vpack.c.b16 %v396, %v396
      %v429 = vpack.c.b16 %v397, %v397
      %v430 = vpack.c.b16 %v398, %v398
      %v431 = vpack.c.b16 %v399, %v399
      %v432 = vpack.c.b16 %v400, %v400
      %v433 = vpack.c.b16 %v401, %v401
      %v434 = vpack.c.b16 %v402, %v402
      %v435 = vpack.c.b16 %v403, %v403
      %v436 = vpack.c.b16 %v404, %v404
      %v437 = vpack.c.b16 %v405, %v405
      %v438 = vpack.c.b16 %v406, %v406
      %v439 = vpack.c.b16 %v407, %v407
      %v440 = vpack.c.b16 %v408, %v408
      %v441 = vpack.c.b16 %v409, %v409
      %v442 = vpack.c.b16 %v410, %v410
      %v443 = vpack.c.b16 %v411, %v411
      %476 = vst [vmem:[%s172] sm:$0xf] %v412
      %477 = vst [vmem:[%s172 + $0x4] sm:$0xf] %v413
      %478 = vst [vmem:[%s172 + $0x8] sm:$0xf] %v414
      %479 = vst [vmem:[%s172 + $0xc] sm:$0xf] %v415
      %480 = vst [vmem:[%s172 + $0x10] sm:$0xf] %v416
      %481 = vst [vmem:[%s172 + $0x14] sm:$0xf] %v417
      %482 = vst [vmem:[%s172 + $0x18] sm:$0xf] %v418
      %483 = vst [vmem:[%s172 + $0x1c] sm:$0xf] %v419
      %484 = vst [vmem:[%s172 + $0x20] sm:$0xf] %v420
      %485 = vst [vmem:[%s172 + $0x24] sm:$0xf] %v421
      %486 = vst [vmem:[%s172 + $0x28] sm:$0xf] %v422
      %487 = vst [vmem:[%s172 + $0x2c] sm:$0xf] %v423
      %488 = vst [vmem:[%s172 + $0x30] sm:$0xf] %v424
      %489 = vst [vmem:[%s172 + $0x34] sm:$0xf] %v425
      %490 = vst [vmem:[%s172 + $0x38] sm:$0xf] %v426
      %491 = vst [vmem:[%s172 + $0x3c] sm:$0xf] %v427
      %492 = vst [vmem:[%s172 + $0x40] sm:$0xf] %v428
      %493 = vst [vmem:[%s172 + $0x44] sm:$0xf] %v429
      %494 = vst [vmem:[%s172 + $0x48] sm:$0xf] %v430
      %495 = vst [vmem:[%s172 + $0x4c] sm:$0xf] %v431
      %496 = vst [vmem:[%s172 + $0x50] sm:$0xf] %v432
      %497 = vst [vmem:[%s172 + $0x54] sm:$0xf] %v433
      %498 = vst [vmem:[%s172 + $0x58] sm:$0xf] %v434
      %499 = vst [vmem:[%s172 + $0x5c] sm:$0xf] %v435
      %500 = vst [vmem:[%s172 + $0x60] sm:$0xf] %v436
      %501 = vst [vmem:[%s172 + $0x64] sm:$0xf] %v437
      %502 = vst [vmem:[%s172 + $0x68] sm:$0xf] %v438
      %503 = vst [vmem:[%s172 + $0x6c] sm:$0xf] %v439
      %504 = vst [vmem:[%s172 + $0x70] sm:$0xf] %v440
      %505 = vst [vmem:[%s172 + $0x74] sm:$0xf] %v441
      %506 = vst [vmem:[%s172 + $0x78] sm:$0xf] %v442
      %507 = vst [vmem:[%s172 + $0x7c] sm:$0xf] %v443
      %s508 = smul.u32 32, %s14
      %p509 = scmp.lt.s32.totalorder %s508, 63
      %s510 = scalar_select %p509, %s508, 63
      %s511 = smul.addr %s510, 4
      %s512 = scalar_lea.vmem %s3, %s511
      // Predicated region
      $region33: #{inception_b_forward.12} parent=31 // pred_check
        %p513 = pneg %p100
      $region34: #{inception_b_forward.12} parent=31 // pred_check_branch
        %515 = sbr.rel (%p513) target = $region36
      $region35: #{inception_b_forward.12} parent=31 // pred_region
        %s516 = smul.u32 32, %s14
      $region36: #{inception_b_forward.12} parent=31 // pred_fallthru
        _
    $region32: #{inception_b_forward.12} parent=5 // pred_fallthru
      _
    %p517 = scmp.le.s32.totalorder 2, %s9
    // Predicated region
    $region37: #{inception_b_forward.12} parent=5 // pred_check
      %p518 = pneg %p517
    $region38: #{inception_b_forward.12} parent=5 // pred_check_branch
      %520 = sbr.rel (%p518) target = $region40
    $region39: #{inception_b_forward.12} parent=5 // pred_region
      %s521 = ssub.s32 %s9, 2
      // Predicated region
      $region41: #{inception_b_forward.12} parent=39 // pred_check
        %p522 = pneg %p106
      $region42: #{inception_b_forward.12} parent=39 // pred_check_branch
        %524 = sbr.rel (%p522) target = $region44
      $region43: #{inception_b_forward.12} parent=39 // pred_region
        %s525 = smul.u32 32, %s15
        %p526 = scmp.lt.s32.totalorder %s525, 63
        %s527 = scalar_select %p526, %s525, 63
        %s528 = smul.addr %s527, 4
        %s529 = scalar_lea.vmem %s3, %s528
      $region44: #{inception_b_forward.12} parent=39 // pred_fallthru
        _
    $region40: #{inception_b_forward.12} parent=5 // pred_fallthru
      _
  $region6: #{inception_b_forward.12} parent=0 // loop_footer
    %s13 = sadd.s32 1, %s9
  $region7: #{inception_b_forward.12} parent=0 // loop_footer_branch
    %8 = sbr.rel target = $region3
  $region8: #{inception_b_forward.12} parent=0 // loop_exit
    _

// kernel: inception_b_forward.11
$region0: #{inception_b_forward.11}
  #allocation0 [shape = 'u32[]', space=smem, size = 0x4, offset = 0x4, fixed_abs, tag = 'smem constant byte address 0x4 - core index']
  #allocation1 [shape = 'u32[144,128]{1,0:T(1,128)}', space=vmem, size = 0x12000, scoped, tag = 'internal scratch']
  %s0 = inlined_call_operand.vmem [shape: bf16[512,128], index: 0, kind: input, shape index: {}]
  %s1 = inlined_call_operand.hbm [shape: bf16[128,128], index: 1, kind: input, shape index: {}]
  %s2 = inlined_call_operand.vmem [shape: bf16[512,128], index: 2, kind: output, shape index: {0}]
  %s3 = inlined_call_operand.vmem [shape: f32[2,2,128], index: 3, kind: output, shape index: {1}]
  %4 = xla_tuple %s2, %s3
  %s5 = sld [smem:[#allocation0]]
  $region53: #{inception_b_forward.11} parent=0
    _
  %s7 = ssub.s32 1, %s5
  %s8 = scalar_select 0, %s7, %s5
  $region1: #{inception_b_forward.11} parent=0
    #allocation2 [shape = 'u8[32768]{0}', space=vmem, size = 0x8000, scoped, tag = 'input window, operand 1, single buffered']
    #allocation3 [shape = 's32[2]{0}', space=sflag, size = 0x8, scoped, tag = 'scoped memory for inception_b_forward.11']
    %9 = vsyncpa [#allocation3], 0
    loop: start=0, step=1, limit=4
    $region2: #{inception_b_forward.11} parent=1 // loop_pre_header
      _
    $region3: #{inception_b_forward.11} parent=1 // loop_header
      %s11 = sphi 0, %s15
      %p12 = scmp.ge.s32.totalorder %s11, 4
      %s21 = sphi 0, %s23
      %s24 = sphi 0, %s21
      %s25 = sphi 0, %s24
      %s41 = sphi 0, %s25
      %s45 = sphi 0, %s45
      %s47 = sphi 0, %s45
      %s48 = sphi 0, %s47
      %s62 = sphi 0, %s48
      %s68 = sphi 0, %s70
      %s71 = sphi 0, %s68
      %s72 = sphi 0, %s71
      %s88 = sphi 0, %s72
      %s94 = sphi 0, %s96
      %s97 = sphi 0, %s94
      %s98 = sphi 0, %s97
      %s114 = sphi 0, %s98
    $region4: #{inception_b_forward.11} parent=1 // loop_header_branch
      %14 = sbr.rel (%p12) target = $region8
    $region5: #{inception_b_forward.11} parent=1 // loop_body
      %s16 = ssub.s32 %s11, 1
      %s17 = ssub.s32 %s11, 2
      %s18 = sadd.s32 %s11, 1
      %s19 = ssub.s32 %s11, %s18
      %p20 = scmp.eq.s32.totalorder %s19, 0
      %s22 = sadd.s32 %s21, 1
      %s23 = scalar_select %p20, %s21, %s22
      %p26 = pneg %p20
      %p27 = scmp.eq.s32.totalorder %s11, 1
      %p28 = por %p26, %p27
      %p29 = scmp.ne.s32.totalorder %s21, %s24
      %p30 = scmp.eq.s32.totalorder %s11, 0
      %p31 = por %p29, %p30
      %p32 = scmp.ne.s32.totalorder %s21, %s24
      %p33 = scmp.eq.s32.totalorder %s16, 1
      %p34 = por %p32, %p33
      %p35 = scmp.ne.s32.totalorder %s24, %s25
      %p36 = scmp.eq.s32.totalorder %s16, 0
      %p37 = por %p35, %p36
      %p38 = scmp.ne.s32.totalorder %s24, %s25
      %p39 = scmp.eq.s32.totalorder %s17, 1
      %p40 = por %p38, %p39
      %p42 = scmp.ne.s32.totalorder %s25, %s41
      %p43 = scmp.eq.s32.totalorder %s17, 0
      %p44 = por %p42, %p43
      %s46 = sadd.s32 %s45, 1
      %p49 = scmp.eq.s32.totalorder %s11, 1
      %p50 = scmp.ne.s32.totalorder %s45, %s47
      %p51 = scmp.eq.s32.totalorder %s11, 0
      %p52 = por %p50, %p51
      %p53 = scmp.ne.s32.totalorder %s45, %s47
      %p54 = scmp.eq.s32.totalorder %s16, 1
      %p55 = por %p53, %p54
      %p56 = scmp.ne.s32.totalorder %s47, %s48
      %p57 = scmp.eq.s32.totalorder %s16, 0
      %p58 = por %p56, %p57
      %p59 = scmp.ne.s32.totalorder %s47, %s48
      %p60 = scmp.eq.s32.totalorder %s17, 1
      %p61 = por %p59, %p60
      %p63 = scmp.ne.s32.totalorder %s48, %s62
      %p64 = scmp.eq.s32.totalorder %s17, 0
      %p65 = por %p63, %p64
      %s66 = ssub.s32 %s11, %s18
      %p67 = scmp.eq.s32.totalorder %s66, 0
      %s69 = sadd.s32 %s68, 1
      %s70 = scalar_select %p67, %s68, %s69
      %p73 = pneg %p67
      %p74 = scmp.eq.s32.totalorder %s11, 1
      %p75 = por %p73, %p74
      %p76 = scmp.ne.s32.totalorder %s68, %s71
      %p77 = scmp.eq.s32.totalorder %s11, 0
      %p78 = por %p76, %p77
      %p79 = scmp.ne.s32.totalorder %s68, %s71
      %p80 = scmp.eq.s32.totalorder %s16, 1
      %p81 = por %p79, %p80
      %p82 = scmp.ne.s32.totalorder %s71, %s72
      %p83 = scmp.eq.s32.totalorder %s16, 0
      %p84 = por %p82, %p83
      %p85 = scmp.ne.s32.totalorder %s71, %s72
      %p86 = scmp.eq.s32.totalorder %s17, 1
      %p87 = por %p85, %p86
      %p89 = scmp.ne.s32.totalorder %s72, %s88
      %p90 = scmp.eq.s32.totalorder %s17, 0
      %p91 = por %p89, %p90
      %s92 = ssub.s32 %s11, %s18
      %p93 = scmp.eq.s32.totalorder %s92, 0
      %s95 = sadd.s32 %s94, 1
      %s96 = scalar_select %p93, %s94, %s95
      %p99 = pneg %p93
      %p100 = scmp.eq.s32.totalorder %s11, 1
      %p101 = por %p99, %p100
      %p102 = scmp.ne.s32.totalorder %s94, %s97
      %p103 = scmp.eq.s32.totalorder %s11, 0
      %p104 = por %p102, %p103
      %p105 = scmp.ne.s32.totalorder %s94, %s97
      %p106 = scmp.eq.s32.totalorder %s16, 1
      %p107 = por %p105, %p106
      %p108 = scmp.ne.s32.totalorder %s97, %s98
      %p109 = scmp.eq.s32.totalorder %s16, 0
      %p110 = por %p108, %p109
      %p111 = scmp.ne.s32.totalorder %s97, %s98
      %p112 = scmp.eq.s32.totalorder %s17, 1
      %p113 = por %p111, %p112
      %p115 = scmp.ne.s32.totalorder %s98, %s114
      %p116 = scmp.eq.s32.totalorder %s17, 0
      %p117 = por %p115, %p116
      %p118 = scmp.le.s32.totalorder 1, %s11
      %p119 = scmp.lt.s32.totalorder %s11, 3
      %p120 = pnand %p118, %p119
      %p121 = pneg %p120
      // Predicated region
      $region9: #{inception_b_forward.11} parent=5 // pred_check
        _
      $region10: #{inception_b_forward.11} parent=5 // pred_check_branch
        %123 = sbr.rel (%p120) target = $region12
      $region11: #{inception_b_forward.11} parent=5 // pred_region
        %s124 = ssub.s32 %s11, 1
        // Predicated region
        $region13: #{inception_b_forward.11} parent=11 // pred_check
          %p125 = pneg %p58
        $region14: #{inception_b_forward.11} parent=11 // pred_check_branch
          %127 = sbr.rel (%p125) target = $region16
        $region15: #{inception_b_forward.11} parent=11 // pred_region
          %s129 = ssub.s32 1024, 1024
          %130 = vsyncadd [#allocation3], %s129
          %s131 = sshll.u32 [#allocation2], 4
          %s132 = int_to_ptr.vmem [resolvable:$true] %s131
          %137 = dma.hbm_to_vmem [thread:$0]  %s1, 1024, %s132, [#allocation3], 64, 64, 4
        $region16: #{inception_b_forward.11} parent=11 // pred_fallthru
          _
      $region12: #{inception_b_forward.11} parent=5 // pred_fallthru
        _
      %p138 = scmp.lt.s32.totalorder %s11, 2
      // Predicated region
      $region17: #{inception_b_forward.11} parent=5 // pred_check
        %p139 = pneg %p138
      $region18: #{inception_b_forward.11} parent=5 // pred_check_branch
        %141 = sbr.rel (%p139) target = $region20
      $region19: #{inception_b_forward.11} parent=5 // pred_region
        // Predicated region
        $region21: #{inception_b_forward.11} parent=19 // pred_check
          %p142 = pneg %p31
        $region22: #{inception_b_forward.11} parent=19 // pred_check_branch
          %144 = sbr.rel (%p142) target = $region24
        $region23: #{inception_b_forward.11} parent=19 // pred_region
          %s145 = smul.u32 32, %s11
          %p146 = scmp.lt.s32.totalorder %s145, 63
          %s147 = scalar_select %p146, %s145, 63
          %s148 = smul.addr %s147, 4
          %s149 = scalar_lea.vmem %s0, %s148
          %s150 = smul.u32 32, %s11
        $region24: #{inception_b_forward.11} parent=19 // pred_fallthru
          _
      $region20: #{inception_b_forward.11} parent=5 // pred_fallthru
        _
      %p151 = scmp.le.s32.totalorder 1, %s11
      %p152 = scmp.lt.s32.totalorder %s11, 3
      %p153 = pnand %p151, %p152
      %p154 = pneg %p153
      // Predicated region
      $region25: #{inception_b_forward.11} parent=5 // pred_check
        _
      $region26: #{inception_b_forward.11} parent=5 // pred_check_branch
        %156 = sbr.rel (%p153) target = $region28
      $region27: #{inception_b_forward.11} parent=5 // pred_region
        %s157 = ssub.s32 %s11, 1
        // Predicated region
        $region29: #{inception_b_forward.11} parent=27 // pred_check
          %p158 = pneg %p58
        $region30: #{inception_b_forward.11} parent=27 // pred_check_branch
          %160 = sbr.rel (%p158) target = $region32
        $region31: #{inception_b_forward.11} parent=27 // pred_region
          %161 = dma.done [#allocation3], 1024
        $region32: #{inception_b_forward.11} parent=27 // pred_fallthru
          _
        %s162 = smul.u32 32, %s16
        %p163 = scmp.lt.s32.totalorder %s162, 63
        %s164 = scalar_select %p163, %s162, 63
        %s165 = smul.addr %s164, 4
        %s166 = scalar_lea.vmem %s0, %s165
        %p167 = pneg %p37
        %p168 = pneg %p34
        %p169 = pneg %p58
        %p170 = pneg %p55
        %p171 = pneg %p84
        %p172 = pneg %p81
        %s173 = smul.u32 32, %s16
        %p174 = scmp.lt.s32.totalorder %s173, 63
        %s175 = scalar_select %p174, %s173, 63
        %s176 = smul.addr %s175, 4
        %s177 = scalar_lea.vmem %s2, %s176
        %p178 = pneg %p110
        %p179 = pneg %p107
        %p180 = scmp.lt.s32.totalorder %s16, 1
        %s181 = scalar_select %p180, %s16, 1
        %s182 = smul.addr %s181, 2
        %s183 = scalar_lea.vmem %s3, %s182
        %s184 = smul.u32 32, %s16
        %p185 = scmp.lt.s32.totalorder %s184, 63
        %s186 = scalar_select %p185, %s184, 63
        %s187 = smul.addr %s186, 4
        %s188 = scalar_lea.vmem %s0, %s187
        %s189 = smul.u32 32, %s16
        %s190 = smul.u32 32, %s16
        %p191 = scmp.lt.s32.totalorder %s190, 63
        %s192 = scalar_select %p191, %s190, 63
        %s193 = smul.addr %s192, 4
        %s194 = scalar_lea.vmem %s2, %s193
        %s195 = smul.u32 32, %s16
        %p196 = scmp.lt.s32.totalorder %s16, 1
        %s197 = scalar_select %p196, %s16, 1
        %s198 = smul.addr %s197, 2
        %s199 = scalar_lea.vmem %s3, %s198
        %v201 = vld [vmem:[%s188] sm:$0xf]
        %v202 = vld [vmem:[%s188 + $0x4] sm:$0xf]
        %v203 = vld [vmem:[%s188 + $0x8] sm:$0xf]
        %v204 = vld [vmem:[%s188 + $0xc] sm:$0xf]
        %v205 = vld [vmem:[%s188 + $0x10] sm:$0xf]
        %v206 = vld [vmem:[%s188 + $0x14] sm:$0xf]
        %v207 = vld [vmem:[%s188 + $0x18] sm:$0xf]
        %v208 = vld [vmem:[%s188 + $0x1c] sm:$0xf]
        %v209 = vld [vmem:[%s188 + $0x20] sm:$0xf]
        %v210 = vld [vmem:[%s188 + $0x24] sm:$0xf]
        %v211 = vld [vmem:[%s188 + $0x28] sm:$0xf]
        %v212 = vld [vmem:[%s188 + $0x2c] sm:$0xf]
        %v213 = vld [vmem:[%s188 + $0x30] sm:$0xf]
        %v214 = vld [vmem:[%s188 + $0x34] sm:$0xf]
        %v215 = vld [vmem:[%s188 + $0x38] sm:$0xf]
        %v216 = vld [vmem:[%s188 + $0x3c] sm:$0xf]
        %v217 = vld [vmem:[%s188 + $0x40] sm:$0xf]
        %v218 = vld [vmem:[%s188 + $0x44] sm:$0xf]
        %v219 = vld [vmem:[%s188 + $0x48] sm:$0xf]
        %v220 = vld [vmem:[%s188 + $0x4c] sm:$0xf]
        %v221 = vld [vmem:[%s188 + $0x50] sm:$0xf]
        %v222 = vld [vmem:[%s188 + $0x54] sm:$0xf]
        %v223 = vld [vmem:[%s188 + $0x58] sm:$0xf]
        %v224 = vld [vmem:[%s188 + $0x5c] sm:$0xf]
        %v225 = vld [vmem:[%s188 + $0x60] sm:$0xf]
        %v226 = vld [vmem:[%s188 + $0x64] sm:$0xf]
        %v227 = vld [vmem:[%s188 + $0x68] sm:$0xf]
        %v228 = vld [vmem:[%s188 + $0x6c] sm:$0xf]
        %v229 = vld [vmem:[%s188 + $0x70] sm:$0xf]
        %v230 = vld [vmem:[%s188 + $0x74] sm:$0xf]
        %v231 = vld [vmem:[%s188 + $0x78] sm:$0xf]
        %v232 = vld [vmem:[%s188 + $0x7c] sm:$0xf]
        %v233 = vld [vmem:[#allocation2] sm:$0xf]
        %v234 = vld [vmem:[#allocation2 + $0x4] sm:$0xf]
        %v235 = vld [vmem:[#allocation2 + $0x8] sm:$0xf]
        %v236 = vld [vmem:[#allocation2 + $0xc] sm:$0xf]
        %v237 = vld [vmem:[#allocation2 + $0x10] sm:$0xf]
        %v238 = vld [vmem:[#allocation2 + $0x14] sm:$0xf]
        %v239 = vld [vmem:[#allocation2 + $0x18] sm:$0xf]
        %v240 = vld [vmem:[#allocation2 + $0x1c] sm:$0xf]
        %v241 = vld [vmem:[#allocation2 + $0x20] sm:$0xf]
        %v242 = vld [vmem:[#allocation2 + $0x24] sm:$0xf]
        %v243 = vld [vmem:[#allocation2 + $0x28] sm:$0xf]
        %v244 = vld [vmem:[#allocation2 + $0x2c] sm:$0xf]
        %v245 = vld [vmem:[#allocation2 + $0x30] sm:$0xf]
        %v246 = vld [vmem:[#allocation2 + $0x34] sm:$0xf]
        %v247 = vld [vmem:[#allocation2 + $0x38] sm:$0xf]
        %v248 = vld [vmem:[#allocation2 + $0x3c] sm:$0xf]
        %v281 = vunpack.c.l.b16 %v201
        %v282 = vunpack.c.l.b16 %v202
        %v283 = vunpack.c.l.b16 %v203
        %v284 = vunpack.c.l.b16 %v204
        %v285 = vunpack.c.l.b16 %v205
        %v286 = vunpack.c.l.b16 %v206
        %v287 = vunpack.c.l.b16 %v207
        %v288 = vunpack.c.l.b16 %v208
        %v289 = vunpack.c.l.b16 %v209
        %v290 = vunpack.c.l.b16 %v210
        %v291 = vunpack.c.l.b16 %v211
        %v292 = vunpack.c.l.b16 %v212
        %v293 = vunpack.c.l.b16 %v213
        %v294 = vunpack.c.l.b16 %v214
        %v295 = vunpack.c.l.b16 %v215
        %v296 = vunpack.c.l.b16 %v216
        %v297 = vunpack.c.l.b16 %v217
        %v298 = vunpack.c.l.b16 %v218
        %v299 = vunpack.c.l.b16 %v219
        %v300 = vunpack.c.l.b16 %v220
        %v301 = vunpack.c.l.b16 %v221
        %v302 = vunpack.c.l.b16 %v222
        %v303 = vunpack.c.l.b16 %v223
        %v304 = vunpack.c.l.b16 %v224
        %v305 = vunpack.c.l.b16 %v225
        %v306 = vunpack.c.l.b16 %v226
        %v307 = vunpack.c.l.b16 %v227
        %v308 = vunpack.c.l.b16 %v228
        %v309 = vunpack.c.l.b16 %v229
        %v310 = vunpack.c.l.b16 %v230
        %v311 = vunpack.c.l.b16 %v231
        %v312 = vunpack.c.l.b16 %v232
        %v313 = vpack.c.b16 %v282, %v281
        %v314 = vpack.c.b16 %v284, %v283
        %v315 = vpack.c.b16 %v286, %v285
        %v316 = vpack.c.b16 %v288, %v287
        %v317 = vpack.c.b16 %v290, %v289
        %v318 = vpack.c.b16 %v292, %v291
        %v319 = vpack.c.b16 %v294, %v293
        %v320 = vpack.c.b16 %v296, %v295
        %v321 = vpack.c.b16 %v298, %v297
        %v322 = vpack.c.b16 %v300, %v299
        %v323 = vpack.c.b16 %v302, %v301
        %v324 = vpack.c.b16 %v304, %v303
        %v325 = vpack.c.b16 %v306, %v305
        %v326 = vpack.c.b16 %v308, %v307
        %v327 = vpack.c.b16 %v310, %v309
        %v328 = vpack.c.b16 %v312, %v311
        %v361 = vunpack.c.l.b16 %v233
        %v362 = vunpack.c.l.b16 %v234
        %v363 = vunpack.c.l.b16 %v235
        %v364 = vunpack.c.l.b16 %v236
        %v365 = vunpack.c.l.b16 %v237
        %v366 = vunpack.c.l.b16 %v238
        %v367 = vunpack.c.l.b16 %v239
        %v368 = vunpack.c.l.b16 %v240
        %v369 = vunpack.c.l.b16 %v241
        %v370 = vunpack.c.l.b16 %v242
        %v371 = vunpack.c.l.b16 %v243
        %v372 = vunpack.c.l.b16 %v244
        %v373 = vunpack.c.l.b16 %v245
        %v374 = vunpack.c.l.b16 %v246
        %v375 = vunpack.c.l.b16 %v247
        %v376 = vunpack.c.l.b16 %v248
        %v377 = vpack.c.b16 %v362, %v361
        %v378 = vpack.c.b16 %v364, %v363
        %v379 = vpack.c.b16 %v366, %v365
        %v380 = vpack.c.b16 %v368, %v367
        %v381 = vpack.c.b16 %v370, %v369
        %v382 = vpack.c.b16 %v372, %v371
        %v383 = vpack.c.b16 %v374, %v373
        %v384 = vpack.c.b16 %v376, %v375
        %393 = vmatprep.subr.bf16.mxu0 0
        %394 = vmatpush1.bf16.msra.mxu0 %v377
        %395 = vmatprep.subr.bf16.mxu0 0
        %396 = vmatpush1.bf16.msra.mxu0 %v378
        %397 = vmatprep.subr.bf16.mxu0 0
        %398 = vmatpush1.bf16.msra.mxu0 %v379
        %399 = vmatprep.subr.bf16.mxu0 0
        %400 = vmatpush1.bf16.msra.mxu0 %v380
        %401 = vmatprep.subr.bf16.mxu0 0
        %402 = vmatpush1.bf16.msra.mxu0 %v381
        %403 = vmatprep.subr.bf16.mxu0 0
        %404 = vmatpush1.bf16.msra.mxu0 %v382
        %405 = vmatprep.subr.bf16.mxu0 0
        %406 = vmatpush1.bf16.msra.mxu0 %v383
        %407 = vmatprep.subr.bf16.mxu0 0
        %408 = vmatpush1.bf16.msra.mxu0 %v384
        %409 = vmatprep.subr.bf16.mxu0 0
        %410 = vmatpush1.bf16.msra.mxu0 0
        %411 = vmatprep.subr.bf16.mxu0 0
        %412 = vmatpush1.bf16.msra.mxu0 0
        %413 = vmatprep.subr.bf16.mxu0 0
        %414 = vmatpush1.bf16.msra.mxu0 0
        %415 = vmatprep.subr.bf16.mxu0 0
        %416 = vmatpush1.bf16.msra.mxu0 0
        %417 = vmatprep.subr.bf16.mxu0 0
        %418 = vmatpush1.bf16.msra.mxu0 0
        %419 = vmatprep.subr.bf16.mxu0 0
        %420 = vmatpush1.bf16.msra.mxu0 0
        %421 = vmatprep.subr.bf16.mxu0 0
        %422 = vmatpush1.bf16.msra.mxu0 0
        %423 = vmatprep.subr.bf16.mxu0 0
        %424 = vmatpush1.bf16.msra.mxu0 0
        %425 = vmatprep.mubr.bf16.mxu0 0
        %426 = vmatmul.mubr.bf16.gmra.mrb[0].mxu0 %v313
        %v427 = vpop.f32.mrb[0].mxu0
        %v428 = vadd.f32 0.0, %v427
        %v429 = vpop.f32.mrb[0].mxu0
        %v430 = vpop.f32.mrb[0].mxu0
        %v431 = vadd.f32 0.0, %v430
        %v432 = vpop.f32.mrb[0].mxu0
        %433 = vmatprep.mubr.bf16.mxu0 0
        %434 = vmatmul.mubr.bf16.gmra.mrb[0].mxu0 %v314
        %v435 = vpop.f32.mrb[0].mxu0
        %v436 = vadd.f32 0.0, %v435
        %v437 = vpop.f32.mrb[0].mxu0
        %v438 = vpop.f32.mrb[0].mxu0
        %v439 = vadd.f32 0.0, %v438
        %v440 = vpop.f32.mrb[0].mxu0
        %441 = vmatprep.mubr.bf16.mxu0 0
        %442 = vmatmul.mubr.bf16.gmra.mrb[0].mxu0 %v315
        %v443 = vpop.f32.mrb[0].mxu0
        %v444 = vadd.f32 0.0, %v443
        %v445 = vpop.f32.mrb[0].mxu0
        %v446 = vpop.f32.mrb[0].mxu0
        %v447 = vadd.f32 0.0, %v446
        %v448 = vpop.f32.mrb[0].mxu0
        %449 = vmatprep.mubr.bf16.mxu0 0
        %450 = vmatmul.mubr.bf16.gmra.mrb[0].mxu0 %v316
        %v451 = vpop.f32.mrb[0].mxu0
        %v452 = vadd.f32 0.0, %v451
        %v453 = vpop.f32.mrb[0].mxu0
        %v454 = vpop.f32.mrb[0].mxu0
        %v455 = vadd.f32 0.0, %v454
        %v456 = vpop.f32.mrb[0].mxu0
        %457 = vmatprep.mubr.bf16.mxu0 0
        %458 = vmatmul.mubr.bf16.gmra.mrb[0].mxu0 %v317
        %v459 = vpop.f32.mrb[0].mxu0
        %v460 = vadd.f32 0.0, %v459
        %v461 = vpop.f32.mrb[0].mxu0
        %v462 = vpop.f32.mrb[0].mxu0
        %v463 = vadd.f32 0.0, %v462
        %v464 = vpop.f32.mrb[0].mxu0
        %465 = vmatprep.mubr.bf16.mxu0 0
        %466 = vmatmul.mubr.bf16.gmra.mrb[0].mxu0 %v318
        %v467 = vpop.f32.mrb[0].mxu0
        %v468 = vadd.f32 0.0, %v467
        %v469 = vpop.f32.mrb[0].mxu0
        %v470 = vpop.f32.mrb[0].mxu0
        %v471 = vadd.f32 0.0, %v470
        %v472 = vpop.f32.mrb[0].mxu0
        %473 = vmatprep.mubr.bf16.mxu0 0
        %474 = vmatmul.mubr.bf16.gmra.mrb[0].mxu0 %v319
        %v475 = vpop.f32.mrb[0].mxu0
        %v476 = vadd.f32 0.0, %v475
        %v477 = vpop.f32.mrb[0].mxu0
        %v478 = vpop.f32.mrb[0].mxu0
        %v479 = vadd.f32 0.0, %v478
        %v480 = vpop.f32.mrb[0].mxu0
        %481 = vmatprep.mubr.bf16.mxu0 0
        %482 = vmatmul.mubr.bf16.gmra.mrb[0].mxu0 %v320
        %v483 = vpop.f32.mrb[0].mxu0
        %v484 = vadd.f32 0.0, %v483
        %v485 = vpop.f32.mrb[0].mxu0
        %v486 = vpop.f32.mrb[0].mxu0
        %v487 = vadd.f32 0.0, %v486
        %v488 = vpop.f32.mrb[0].mxu0
        %489 = vmatprep.mubr.bf16.mxu0 0
        %490 = vmatmul.mubr.bf16.gmra.mrb[0].mxu0 %v321
        %v491 = vpop.f32.mrb[0].mxu0
        %v492 = vadd.f32 0.0, %v491
        %v493 = vpop.f32.mrb[0].mxu0
        %v494 = vpop.f32.mrb[0].mxu0
        %v495 = vadd.f32 0.0, %v494
        %v496 = vpop.f32.mrb[0].mxu0
        %497 = vmatprep.mubr.bf16.mxu0 0
        %498 = vmatmul.mubr.bf16.gmra.mrb[0].mxu0 %v322
        %v499 = vpop.f32.mrb[0].mxu0
        %v500 = vadd.f32 0.0, %v499
        %v501 = vpop.f32.mrb[0].mxu0
        %v502 = vpop.f32.mrb[0].mxu0
        %v503 = vadd.f32 0.0, %v502
        %v504 = vpop.f32.mrb[0].mxu0
        %505 = vmatprep.mubr.bf16.mxu0 0
        %506 = vmatmul.mubr.bf16.gmra.mrb[0].mxu0 %v323
        %v507 = vpop.f32.mrb[0].mxu0
        %v508 = vadd.f32 0.0, %v507
        %v509 = vpop.f32.mrb[0].mxu0
        %v510 = vpop.f32.mrb[0].mxu0
        %v511 = vadd.f32 0.0, %v510
        %v512 = vpop.f32.mrb[0].mxu0
        %513 = vmatprep.mubr.bf16.mxu0 0
        %514 = vmatmul.mubr.bf16.gmra.mrb[0].mxu0 %v324
        %v515 = vpop.f32.mrb[0].mxu0
        %v516 = vadd.f32 0.0, %v515
        %v517 = vpop.f32.mrb[0].mxu0
        %v518 = vpop.f32.mrb[0].mxu0
        %v519 = vadd.f32 0.0, %v518
        %v520 = vpop.f32.mrb[0].mxu0
        %521 = vmatprep.mubr.bf16.mxu0 0
        %522 = vmatmul.mubr.bf16.gmra.mrb[0].mxu0 %v325
        %v523 = vpop.f32.mrb[0].mxu0
        %v524 = vadd.f32 0.0, %v523
        %v525 = vpop.f32.mrb[0].mxu0
        %v526 = vpop.f32.mrb[0].mxu0
        %v527 = vadd.f32 0.0, %v526
        %v528 = vpop.f32.mrb[0].mxu0
        %529 = vmatprep.mubr.bf16.mxu0 0
        %530 = vmatmul.mubr.bf16.gmra.mrb[0].mxu0 %v326
        %v531 = vpop.f32.mrb[0].mxu0
        %v532 = vadd.f32 0.0, %v531
        %v533 = vpop.f32.mrb[0].mxu0
        %v534 = vpop.f32.mrb[0].mxu0
        %v535 = vadd.f32 0.0, %v534
        %v536 = vpop.f32.mrb[0].mxu0
        %537 = vmatprep.mubr.bf16.mxu0 0
        %538 = vmatmul.mubr.bf16.gmra.mrb[0].mxu0 %v327
        %v539 = vpop.f32.mrb[0].mxu0
        %v540 = vadd.f32 0.0, %v539
        %v541 = vpop.f32.mrb[0].mxu0
        %v542 = vpop.f32.mrb[0].mxu0
        %v543 = vadd.f32 0.0, %v542
        %v544 = vpop.f32.mrb[0].mxu0
        %545 = vmatprep.mubr.bf16.mxu0 0
        %546 = vmatmul.mubr.bf16.gmra.mrb[0].mxu0 %v328
        %v547 = vpop.f32.mrb[0].mxu0
        %v548 = vadd.f32 0.0, %v547
        %v549 = vpop.f32.mrb[0].mxu0
        %v550 = vpop.f32.mrb[0].mxu0
        %v551 = vadd.f32 0.0, %v550
        %v552 = vpop.f32.mrb[0].mxu0
        %553 = vdwg.mxu0
        %v554 = vpack.c.bf16 %v431, %v428
        %v555 = vpack.c.bf16 %v439, %v436
        %v556 = vpack.c.bf16 %v447, %v444
        %v557 = vpack.c.bf16 %v455, %v452
        %v558 = vpack.c.bf16 %v463, %v460
        %v559 = vpack.c.bf16 %v471, %v468
        %v560 = vpack.c.bf16 %v479, %v476
        %v561 = vpack.c.bf16 %v487, %v484
        %v562 = vpack.c.bf16 %v495, %v492
        %v563 = vpack.c.bf16 %v503, %v500
        %v564 = vpack.c.bf16 %v511, %v508
        %v565 = vpack.c.bf16 %v519, %v516
        %v566 = vpack.c.bf16 %v527, %v524
        %v567 = vpack.c.bf16 %v535, %v532
        %v568 = vpack.c.bf16 %v543, %v540
        %v569 = vpack.c.bf16 %v551, %v548
        %v586 = vunpack.c.l.b16 %v554
        %v587 = vunpack.c.h.b16 %v554
        %v588 = vunpack.c.l.b16 %v555
        %v589 = vunpack.c.h.b16 %v555
        %v590 = vunpack.c.l.b16 %v556
        %v591 = vunpack.c.h.b16 %v556
        %v592 = vunpack.c.l.b16 %v557
        %v593 = vunpack.c.h.b16 %v557
        %v594 = vunpack.c.l.b16 %v558
        %v595 = vunpack.c.h.b16 %v558
        %v596 = vunpack.c.l.b16 %v559
        %v597 = vunpack.c.h.b16 %v559
        %v598 = vunpack.c.l.b16 %v560
        %v599 = vunpack.c.h.b16 %v560
        %v600 = vunpack.c.l.b16 %v561
        %v601 = vunpack.c.h.b16 %v561
        %v602 = vunpack.c.l.b16 %v562
        %v603 = vunpack.c.h.b16 %v562
        %v604 = vunpack.c.l.b16 %v563
        %v605 = vunpack.c.h.b16 %v563
        %v606 = vunpack.c.l.b16 %v564
        %v607 = vunpack.c.h.b16 %v564
        %v608 = vunpack.c.l.b16 %v565
        %v609 = vunpack.c.h.b16 %v565
        %v610 = vunpack.c.l.b16 %v566
        %v611 = vunpack.c.h.b16 %v566
        %v612 = vunpack.c.l.b16 %v567
        %v613 = vunpack.c.h.b16 %v567
        %v614 = vunpack.c.l.b16 %v568
        %v615 = vunpack.c.h.b16 %v568
        %v616 = vunpack.c.l.b16 %v569
        %v617 = vunpack.c.h.b16 %v569
        %v618 = vpack.c.b16 %v586, %v586
        %v619 = vpack.c.b16 %v587, %v587
        %v620 = vpack.c.b16 %v588, %v588
        %v621 = vpack.c.b16 %v589, %v589
        %v622 = vpack.c.b16 %v590, %v590
        %v623 = vpack.c.b16 %v591, %v591
        %v624 = vpack.c.b16 %v592, %v592
        %v625 = vpack.c.b16 %v593, %v593
        %v626 = vpack.c.b16 %v594, %v594
        %v627 = vpack.c.b16 %v595, %v595
        %v628 = vpack.c.b16 %v596, %v596
        %v629 = vpack.c.b16 %v597, %v597
        %v630 = vpack.c.b16 %v598, %v598
        %v631 = vpack.c.b16 %v599, %v599
        %v632 = vpack.c.b16 %v600, %v600
        %v633 = vpack.c.b16 %v601, %v601
        %v634 = vpack.c.b16 %v602, %v602
        %v635 = vpack.c.b16 %v603, %v603
        %v636 = vpack.c.b16 %v604, %v604
        %v637 = vpack.c.b16 %v605, %v605
        %v638 = vpack.c.b16 %v606, %v606
        %v639 = vpack.c.b16 %v607, %v607
        %v640 = vpack.c.b16 %v608, %v608
        %v641 = vpack.c.b16 %v609, %v609
        %v642 = vpack.c.b16 %v610, %v610
        %v643 = vpack.c.b16 %v611, %v611
        %v644 = vpack.c.b16 %v612, %v612
        %v645 = vpack.c.b16 %v613, %v613
        %v646 = vpack.c.b16 %v614, %v614
        %v647 = vpack.c.b16 %v615, %v615
        %v648 = vpack.c.b16 %v616, %v616
        %v649 = vpack.c.b16 %v617, %v617
        %682 = vst [vmem:[%s194] sm:$0xf] %v618
        %683 = vst [vmem:[%s194 + $0x4] sm:$0xf] %v619
        %684 = vst [vmem:[%s194 + $0x8] sm:$0xf] %v620
        %685 = vst [vmem:[%s194 + $0xc] sm:$0xf] %v621
        %686 = vst [vmem:[%s194 + $0x10] sm:$0xf] %v622
        %687 = vst [vmem:[%s194 + $0x14] sm:$0xf] %v623
        %688 = vst [vmem:[%s194 + $0x18] sm:$0xf] %v624
        %689 = vst [vmem:[%s194 + $0x1c] sm:$0xf] %v625
        %690 = vst [vmem:[%s194 + $0x20] sm:$0xf] %v626
        %691 = vst [vmem:[%s194 + $0x24] sm:$0xf] %v627
        %692 = vst [vmem:[%s194 + $0x28] sm:$0xf] %v628
        %693 = vst [vmem:[%s194 + $0x2c] sm:$0xf] %v629
        %694 = vst [vmem:[%s194 + $0x30] sm:$0xf] %v630
        %695 = vst [vmem:[%s194 + $0x34] sm:$0xf] %v631
        %696 = vst [vmem:[%s194 + $0x38] sm:$0xf] %v632
        %697 = vst [vmem:[%s194 + $0x3c] sm:$0xf] %v633
        %698 = vst [vmem:[%s194 + $0x40] sm:$0xf] %v634
        %699 = vst [vmem:[%s194 + $0x44] sm:$0xf] %v635
        %700 = vst [vmem:[%s194 + $0x48] sm:$0xf] %v636
        %701 = vst [vmem:[%s194 + $0x4c] sm:$0xf] %v637
        %702 = vst [vmem:[%s194 + $0x50] sm:$0xf] %v638
        %703 = vst [vmem:[%s194 + $0x54] sm:$0xf] %v639
        %704 = vst [vmem:[%s194 + $0x58] sm:$0xf] %v640
        %705 = vst [vmem:[%s194 + $0x5c] sm:$0xf] %v641
        %706 = vst [vmem:[%s194 + $0x60] sm:$0xf] %v642
        %707 = vst [vmem:[%s194 + $0x64] sm:$0xf] %v643
        %708 = vst [vmem:[%s194 + $0x68] sm:$0xf] %v644
        %709 = vst [vmem:[%s194 + $0x6c] sm:$0xf] %v645
        %710 = vst [vmem:[%s194 + $0x70] sm:$0xf] %v646
        %711 = vst [vmem:[%s194 + $0x74] sm:$0xf] %v647
        %712 = vst [vmem:[%s194 + $0x78] sm:$0xf] %v648
        %713 = vst [vmem:[%s194 + $0x7c] sm:$0xf] %v649
        %v714 = vadd.f32 %v428, %v431
        %v715 = vadd.f32 %v714, %v436
        %v716 = vadd.f32 %v715, %v439
        %v717 = vadd.f32 %v716, %v444
        %v718 = vadd.f32 %v717, %v447
        %v719 = vadd.f32 %v718, %v452
        %v720 = vadd.f32 %v719, %v455
        %v721 = vadd.f32 %v720, %v460
        %v722 = vadd.f32 %v721, %v463
        %v723 = vadd.f32 %v722, %v468
        %v724 = vadd.f32 %v723, %v471
        %v725 = vadd.f32 %v724, %v476
        %v726 = vadd.f32 %v725, %v479
        %v727 = vadd.f32 %v726, %v484
        %v728 = vadd.f32 %v727, %v487
        %v729 = vadd.f32 %v728, %v492
        %v730 = vadd.f32 %v729, %v495
        %v731 = vadd.f32 %v730, %v500
        %v732 = vadd.f32 %v731, %v503
        %v733 = vadd.f32 %v732, %v508
        %v734 = vadd.f32 %v733, %v511
        %v735 = vadd.f32 %v734, %v516
        %v736 = vadd.f32 %v735, %v519
        %v737 = vadd.f32 %v736, %v524
        %v738 = vadd.f32 %v737, %v527
        %v739 = vadd.f32 %v738, %v532
        %v740 = vadd.f32 %v739, %v535
        %v741 = vadd.f32 %v740, %v540
        %v742 = vadd.f32 %v741, %v543
        %v743 = vadd.f32 %v742, %v548
        %v744 = vadd.f32 %v743, %v551
        %v745 = vrot.slane %v744, 4
        %v746 = vadd.f32 %v744, %v745
        %v747 = vrot.slane %v746, 2
        %v748 = vadd.f32 %v746, %v747
        %v749 = vrot.slane %v748, 1
        %v750 = vadd.f32 %v748, %v749
        %751 = vst [vmem:[%s199] sm:$0x1] %v750
        %v752 = vmul.f32 %v428, %v428
        %v753 = vmul.f32 %v431, %v431
        %v754 = vmul.f32 %v436, %v436
        %v755 = vmul.f32 %v439, %v439
        %v756 = vmul.f32 %v444, %v444
        %v757 = vmul.f32 %v447, %v447
        %v758 = vmul.f32 %v452, %v452
        %v759 = vmul.f32 %v455, %v455
        %v760 = vmul.f32 %v460, %v460
        %v761 = vmul.f32 %v463, %v463
        %v762 = vmul.f32 %v468, %v468
        %v763 = vmul.f32 %v471, %v471
        %v764 = vmul.f32 %v476, %v476
        %v765 = vmul.f32 %v479, %v479
        %v766 = vmul.f32 %v484, %v484
        %v767 = vmul.f32 %v487, %v487
        %v768 = vmul.f32 %v492, %v492
        %v769 = vmul.f32 %v495, %v495
        %v770 = vmul.f32 %v500, %v500
        %v771 = vmul.f32 %v503, %v503
        %v772 = vmul.f32 %v508, %v508
        %v773 = vmul.f32 %v511, %v511
        %v774 = vmul.f32 %v516, %v516
        %v775 = vmul.f32 %v519, %v519
        %v776 = vmul.f32 %v524, %v524
        %v777 = vmul.f32 %v527, %v527
        %v778 = vmul.f32 %v532, %v532
        %v779 = vmul.f32 %v535, %v535
        %v780 = vmul.f32 %v540, %v540
        %v781 = vmul.f32 %v543, %v543
        %v782 = vmul.f32 %v548, %v548
        %v783 = vmul.f32 %v551, %v551
        %v784 = vadd.f32 %v752, %v753
        %v785 = vadd.f32 %v784, %v754
        %v786 = vadd.f32 %v785, %v755
        %v787 = vadd.f32 %v786, %v756
        %v788 = vadd.f32 %v787, %v757
        %v789 = vadd.f32 %v788, %v758
        %v790 = vadd.f32 %v789, %v759
        %v791 = vadd.f32 %v790, %v760
        %v792 = vadd.f32 %v791, %v761
        %v793 = vadd.f32 %v792, %v762
        %v794 = vadd.f32 %v793, %v763
        %v795 = vadd.f32 %v794, %v764
        %v796 = vadd.f32 %v795, %v765
        %v797 = vadd.f32 %v796, %v766
        %v798 = vadd.f32 %v797, %v767
        %v799 = vadd.f32 %v798, %v768
        %v800 = vadd.f32 %v799, %v769
        %v801 = vadd.f32 %v800, %v770
        %v802 = vadd.f32 %v801, %v771
        %v803 = vadd.f32 %v802, %v772
        %v804 = vadd.f32 %v803, %v773
        %v805 = vadd.f32 %v804, %v774
        %v806 = vadd.f32 %v805, %v775
        %v807 = vadd.f32 %v806, %v776
        %v808 = vadd.f32 %v807, %v777
        %v809 = vadd.f32 %v808, %v778
        %v810 = vadd.f32 %v809, %v779
        %v811 = vadd.f32 %v810, %v780
        %v812 = vadd.f32 %v811, %v781
        %v813 = vadd.f32 %v812, %v782
        %v814 = vadd.f32 %v813, %v783
        %v815 = vrot.slane %v814, 4
        %v816 = vadd.f32 %v814, %v815
        %v817 = vrot.slane %v816, 2
        %v818 = vadd.f32 %v816, %v817
        %v819 = vrot.slane %v818, 1
        %v820 = vadd.f32 %v818, %v819
        %821 = vst [vmem:[%s199 + $0x1] sm:$0x1] %v820
        %s822 = smul.u32 32, %s16
        %p823 = scmp.lt.s32.totalorder %s822, 63
        %s824 = scalar_select %p823, %s822, 63
        %s825 = smul.addr %s824, 4
        %s826 = scalar_lea.vmem %s2, %s825
        %p827 = scmp.lt.s32.totalorder %s16, 1
        %s828 = scalar_select %p827, %s16, 1
        %s829 = smul.addr %s828, 2
        %s830 = scalar_lea.vmem %s3, %s829
        // Predicated region
        $region33: #{inception_b_forward.11} parent=27 // pred_check
          %p831 = pneg %p81
        $region34: #{inception_b_forward.11} parent=27 // pred_check_branch
          %833 = sbr.rel (%p831) target = $region36
        $region35: #{inception_b_forward.11} parent=27 // pred_region
          %s834 = smul.u32 32, %s16
        $region36: #{inception_b_forward.11} parent=27 // pred_fallthru
          _
        // Predicated region
        $region37: #{inception_b_forward.11} parent=27 // pred_check
          %p835 = pneg %p107
        $region38: #{inception_b_forward.11} parent=27 // pred_check_branch
          %837 = sbr.rel (%p835) target = $region40
        $region39: #{inception_b_forward.11} parent=27 // pred_region
          _
        $region40: #{inception_b_forward.11} parent=27 // pred_fallthru
          _
      $region28: #{inception_b_forward.11} parent=5 // pred_fallthru
        _
      %p838 = scmp.le.s32.totalorder 2, %s11
      // Predicated region
      $region41: #{inception_b_forward.11} parent=5 // pred_check
        %p839 = pneg %p838
      $region42: #{inception_b_forward.11} parent=5 // pred_check_branch
        %841 = sbr.rel (%p839) target = $region44
      $region43: #{inception_b_forward.11} parent=5 // pred_region
        %s842 = ssub.s32 %s11, 2
        // Predicated region
        $region45: #{inception_b_forward.11} parent=43 // pred_check
          %p843 = pneg %p87
        $region46: #{inception_b_forward.11} parent=43 // pred_check_branch
          %845 = sbr.rel (%p843) target = $region48
        $region47: #{inception_b_forward.11} parent=43 // pred_region
          %s846 = smul.u32 32, %s17
          %p847 = scmp.lt.s32.totalorder %s846, 63
          %s848 = scalar_select %p847, %s846, 63
          %s849 = smul.addr %s848, 4
          %s850 = scalar_lea.vmem %s2, %s849
        $region48: #{inception_b_forward.11} parent=43 // pred_fallthru
          _
        // Predicated region
        $region49: #{inception_b_forward.11} parent=43 // pred_check
          %p851 = pneg %p113
        $region50: #{inception_b_forward.11} parent=43 // pred_check_branch
          %853 = sbr.rel (%p851) target = $region52
        $region51: #{inception_b_forward.11} parent=43 // pred_region
          %p854 = scmp.lt.s32.totalorder %s17, 1
          %s855 = scalar_select %p854, %s17, 1
          %s856 = smul.addr %s855, 2
          %s857 = scalar_lea.vmem %s3, %s856
        $region52: #{inception_b_forward.11} parent=43 // pred_fallthru
          _
      $region44: #{inception_b_forward.11} parent=5 // pred_fallthru
        _
    $region6: #{inception_b_forward.11} parent=1 // loop_footer
      %s15 = sadd.s32 1, %s11
    $region7: #{inception_b_forward.11} parent=1 // loop_footer_branch
      %10 = sbr.rel target = $region3
    $region8: #{inception_b_forward.11} parent=1 // loop_exit
      _
    %858 = vsyncpa [#allocation3], 1
    %s859 = scalar_lea.sflag [#allocation3], 1
    %860 = vsyncpa %s859, 1

// kernel: inception_b_forward.13
$region0: #{inception_b_forward.13}
  #allocation0 [shape = 'u32[]', space=smem, size = 0x4, offset = 0x4, fixed_abs, tag = 'smem constant byte address 0x4 - core index']
  #allocation1 [shape = 'u32[144,128]{1,0:T(1,128)}', space=vmem, size = 0x12000, scoped, tag = 'internal scratch']
  %s0 = inlined_call_operand.vmem [shape: bf16[512,640], index: 0, kind: input, shape index: {}]
  %s1 = inlined_call_operand.vmem [shape: bf16[640,128], index: 1, kind: input, shape index: {}]
  %s2 = inlined_call_operand.vmem [shape: bf16[512,128], index: 2, kind: output, shape index: {0}]
  %s3 = inlined_call_operand.vmem [shape: f32[2,2,128], index: 3, kind: output, shape index: {1}]
  %4 = xla_tuple %s2, %s3
  %s5 = sld [smem:[#allocation0]]
  $region49: #{inception_b_forward.13} parent=0
    _
  %s7 = ssub.s32 1, %s5
  %s8 = scalar_select 0, %s7, %s5
  loop: start=0, step=1, limit=4
  $region2: #{inception_b_forward.13} parent=0 // loop_pre_header
    _
  $region3: #{inception_b_forward.13} parent=0 // loop_header
    %s10 = sphi 0, %s14
    %p11 = scmp.ge.s32.totalorder %s10, 4
    %s20 = sphi 0, %s22
    %s23 = sphi 0, %s20
    %s24 = sphi 0, %s23
    %s40 = sphi 0, %s24
    %s44 = sphi 0, %s44
    %s46 = sphi 0, %s44
    %s47 = sphi 0, %s46
    %s61 = sphi 0, %s47
    %s67 = sphi 0, %s69
    %s70 = sphi 0, %s67
    %s71 = sphi 0, %s70
    %s87 = sphi 0, %s71
    %s93 = sphi 0, %s95
    %s96 = sphi 0, %s93
    %s97 = sphi 0, %s96
    %s113 = sphi 0, %s97
  $region4: #{inception_b_forward.13} parent=0 // loop_header_branch
    %13 = sbr.rel (%p11) target = $region8
  $region5: #{inception_b_forward.13} parent=0 // loop_body
    %s15 = ssub.s32 %s10, 1
    %s16 = ssub.s32 %s10, 2
    %s17 = sadd.s32 %s10, 1
    %s18 = ssub.s32 %s10, %s17
    %p19 = scmp.eq.s32.totalorder %s18, 0
    %s21 = sadd.s32 %s20, 1
    %s22 = scalar_select %p19, %s20, %s21
    %p25 = pneg %p19
    %p26 = scmp.eq.s32.totalorder %s10, 1
    %p27 = por %p25, %p26
    %p28 = scmp.ne.s32.totalorder %s20, %s23
    %p29 = scmp.eq.s32.totalorder %s10, 0
    %p30 = por %p28, %p29
    %p31 = scmp.ne.s32.totalorder %s20, %s23
    %p32 = scmp.eq.s32.totalorder %s15, 1
    %p33 = por %p31, %p32
    %p34 = scmp.ne.s32.totalorder %s23, %s24
    %p35 = scmp.eq.s32.totalorder %s15, 0
    %p36 = por %p34, %p35
    %p37 = scmp.ne.s32.totalorder %s23, %s24
    %p38 = scmp.eq.s32.totalorder %s16, 1
    %p39 = por %p37, %p38
    %p41 = scmp.ne.s32.totalorder %s24, %s40
    %p42 = scmp.eq.s32.totalorder %s16, 0
    %p43 = por %p41, %p42
    %s45 = sadd.s32 %s44, 1
    %p48 = scmp.eq.s32.totalorder %s10, 1
    %p49 = scmp.ne.s32.totalorder %s44, %s46
    %p50 = scmp.eq.s32.totalorder %s10, 0
    %p51 = por %p49, %p50
    %p52 = scmp.ne.s32.totalorder %s44, %s46
    %p53 = scmp.eq.s32.totalorder %s15, 1
    %p54 = por %p52, %p53
    %p55 = scmp.ne.s32.totalorder %s46, %s47
    %p56 = scmp.eq.s32.totalorder %s15, 0
    %p57 = por %p55, %p56
    %p58 = scmp.ne.s32.totalorder %s46, %s47
    %p59 = scmp.eq.s32.totalorder %s16, 1
    %p60 = por %p58, %p59
    %p62 = scmp.ne.s32.totalorder %s47, %s61
    %p63 = scmp.eq.s32.totalorder %s16, 0
    %p64 = por %p62, %p63
    %s65 = ssub.s32 %s10, %s17
    %p66 = scmp.eq.s32.totalorder %s65, 0
    %s68 = sadd.s32 %s67, 1
    %s69 = scalar_select %p66, %s67, %s68
    %p72 = pneg %p66
    %p73 = scmp.eq.s32.totalorder %s10, 1
    %p74 = por %p72, %p73
    %p75 = scmp.ne.s32.totalorder %s67, %s70
    %p76 = scmp.eq.s32.totalorder %s10, 0
    %p77 = por %p75, %p76
    %p78 = scmp.ne.s32.totalorder %s67, %s70
    %p79 = scmp.eq.s32.totalorder %s15, 1
    %p80 = por %p78, %p79
    %p81 = scmp.ne.s32.totalorder %s70, %s71
    %p82 = scmp.eq.s32.totalorder %s15, 0
    %p83 = por %p81, %p82
    %p84 = scmp.ne.s32.totalorder %s70, %s71
    %p85 = scmp.eq.s32.totalorder %s16, 1
    %p86 = por %p84, %p85
    %p88 = scmp.ne.s32.totalorder %s71, %s87
    %p89 = scmp.eq.s32.totalorder %s16, 0
    %p90 = por %p88, %p89
    %s91 = ssub.s32 %s10, %s17
    %p92 = scmp.eq.s32.totalorder %s91, 0
    %s94 = sadd.s32 %s93, 1
    %s95 = scalar_select %p92, %s93, %s94
    %p98 = pneg %p92
    %p99 = scmp.eq.s32.totalorder %s10, 1
    %p100 = por %p98, %p99
    %p101 = scmp.ne.s32.totalorder %s93, %s96
    %p102 = scmp.eq.s32.totalorder %s10, 0
    %p103 = por %p101, %p102
    %p104 = scmp.ne.s32.totalorder %s93, %s96
    %p105 = scmp.eq.s32.totalorder %s15, 1
    %p106 = por %p104, %p105
    %p107 = scmp.ne.s32.totalorder %s96, %s97
    %p108 = scmp.eq.s32.totalorder %s15, 0
    %p109 = por %p107, %p108
    %p110 = scmp.ne.s32.totalorder %s96, %s97
    %p111 = scmp.eq.s32.totalorder %s16, 1
    %p112 = por %p110, %p111
    %p114 = scmp.ne.s32.totalorder %s97, %s113
    %p115 = scmp.eq.s32.totalorder %s16, 0
    %p116 = por %p114, %p115
    %p117 = scmp.le.s32.totalorder 1, %s10
    %p118 = scmp.lt.s32.totalorder %s10, 3
    %p119 = pnand %p117, %p118
    %p120 = pneg %p119
    // Predicated region
    $region9: #{inception_b_forward.13} parent=5 // pred_check
      _
    $region10: #{inception_b_forward.13} parent=5 // pred_check_branch
      %122 = sbr.rel (%p119) target = $region12
    $region11: #{inception_b_forward.13} parent=5 // pred_region
      %s123 = ssub.s32 %s10, 1
      // Predicated region
      $region13: #{inception_b_forward.13} parent=11 // pred_check
        %p124 = pneg %p57
      $region14: #{inception_b_forward.13} parent=11 // pred_check_branch
        %126 = sbr.rel (%p124) target = $region16
      $region15: #{inception_b_forward.13} parent=11 // pred_region
        _
      $region16: #{inception_b_forward.13} parent=11 // pred_fallthru
        _
    $region12: #{inception_b_forward.13} parent=5 // pred_fallthru
      _
    %p127 = scmp.lt.s32.totalorder %s10, 2
    // Predicated region
    $region17: #{inception_b_forward.13} parent=5 // pred_check
      %p128 = pneg %p127
    $region18: #{inception_b_forward.13} parent=5 // pred_check_branch
      %130 = sbr.rel (%p128) target = $region20
    $region19: #{inception_b_forward.13} parent=5 // pred_region
      // Predicated region
      $region21: #{inception_b_forward.13} parent=19 // pred_check
        %p131 = pneg %p30
      $region22: #{inception_b_forward.13} parent=19 // pred_check_branch
        %133 = sbr.rel (%p131) target = $region24
      $region23: #{inception_b_forward.13} parent=19 // pred_region
        %s134 = smul.u32 32, %s10
        %p135 = scmp.lt.s32.totalorder %s134, 63
        %s136 = scalar_select %p135, %s134, 63
        %s137 = smul.addr %s136, 5
        %s138 = smul.addr %s137, 4
        %s139 = scalar_lea.vmem %s0, %s138
        %s140 = smul.u32 32, %s10
      $region24: #{inception_b_forward.13} parent=19 // pred_fallthru
        _
    $region20: #{inception_b_forward.13} parent=5 // pred_fallthru
      _
    %p141 = scmp.le.s32.totalorder 1, %s10
    %p142 = scmp.lt.s32.totalorder %s10, 3
    %p143 = pnand %p141, %p142
    %p144 = pneg %p143
    // Predicated region
    $region25: #{inception_b_forward.13} parent=5 // pred_check
      _
    $region26: #{inception_b_forward.13} parent=5 // pred_check_branch
      %146 = sbr.rel (%p143) target = $region28
    $region27: #{inception_b_forward.13} parent=5 // pred_region
      %s147 = ssub.s32 %s10, 1
      %s148 = smul.u32 32, %s15
      %p149 = scmp.lt.s32.totalorder %s148, 63
      %s150 = scalar_select %p149, %s148, 63
      %s151 = smul.addr %s150, 5
      %s152 = smul.addr %s151, 4
      %s153 = scalar_lea.vmem %s0, %s152
      %p154 = pneg %p36
      %p155 = pneg %p33
      %p156 = pneg %p57
      %p157 = pneg %p54
      %p158 = pneg %p83
      %p159 = pneg %p80
      %s160 = smul.u32 32, %s15
      %p161 = scmp.lt.s32.totalorder %s160, 63
      %s162 = scalar_select %p161, %s160, 63
      %s163 = smul.addr %s162, 4
      %s164 = scalar_lea.vmem %s2, %s163
      %p165 = pneg %p109
      %p166 = pneg %p106
      %p167 = scmp.lt.s32.totalorder %s15, 1
      %s168 = scalar_select %p167, %s15, 1
      %s169 = smul.addr %s168, 2
      %s170 = scalar_lea.vmem %s3, %s169
      %s171 = smul.u32 32, %s15
      %p172 = scmp.lt.s32.totalorder %s171, 63
      %s173 = scalar_select %p172, %s171, 63
      %s174 = smul.addr %s173, 5
      %s175 = smul.addr %s174, 4
      %s176 = scalar_lea.vmem %s0, %s175
      %s177 = smul.u32 32, %s15
      %s178 = smul.u32 32, %s15
      %p179 = scmp.lt.s32.totalorder %s178, 63
      %s180 = scalar_select %p179, %s178, 63
      %s181 = smul.addr %s180, 4
      %s182 = scalar_lea.vmem %s2, %s181
      %s183 = smul.u32 32, %s15
      %p184 = scmp.lt.s32.totalorder %s15, 1
      %s185 = scalar_select %p184, %s15, 1
      %s186 = smul.addr %s185, 2
      %s187 = scalar_lea.vmem %s3, %s186
      %v189 = vld [vmem:[%s176] sm:$0xff]
      %v190 = vld [vmem:[%s176 + $0x8] sm:$0xff]
      %v191 = vld [vmem:[%s176 + $0x10] sm:$0xf]
      %v192 = vld [vmem:[%s176 + $0x14] sm:$0xff]
      %v193 = vld [vmem:[%s176 + $0x1c] sm:$0xff]
      %v194 = vld [vmem:[%s176 + $0x24] sm:$0xf]
      %v195 = vld [vmem:[%s176 + $0x28] sm:$0xff]
      %v196 = vld [vmem:[%s176 + $0x30] sm:$0xff]
      %v197 = vld [vmem:[%s176 + $0x38] sm:$0xf]
      %v198 = vld [vmem:[%s176 + $0x3c] sm:$0xff]
      %v199 = vld [vmem:[%s176 + $0x44] sm:$0xff]
      %v200 = vld [vmem:[%s176 + $0x4c] sm:$0xf]
      %v201 = vld [vmem:[%s176 + $0x50] sm:$0xff]
      %v202 = vld [vmem:[%s176 + $0x58] sm:$0xff]
      %v203 = vld [vmem:[%s176 + $0x60] sm:$0xf]
      %v204 = vld [vmem:[%s176 + $0x64] sm:$0xff]
      %v205 = vld [vmem:[%s176 + $0x6c] sm:$0xff]
      %v206 = vld [vmem:[%s176 + $0x74] sm:$0xf]
      %v207 = vld [vmem:[%s176 + $0x78] sm:$0xff]
      %v208 = vld [vmem:[%s176 + $0x80] sm:$0xff]
      %v209 = vld [vmem:[%s176 + $0x88] sm:$0xf]
      %v210 = vld [vmem:[%s176 + $0x8c] sm:$0xff]
      %v211 = vld [vmem:[%s176 + $0x94] sm:$0xff]
      %v212 = vld [vmem:[%s176 + $0x9c] sm:$0xf]
      %v213 = vld [vmem:[%s176 + $0xa0] sm:$0xff]
      %v214 = vld [vmem:[%s176 + $0xa8] sm:$0xff]
      %v215 = vld [vmem:[%s176 + $0xb0] sm:$0xf]
      %v216 = vld [vmem:[%s176 + $0xb4] sm:$0xff]
      %v217 = vld [vmem:[%s176 + $0xbc] sm:$0xff]
      %v218 = vld [vmem:[%s176 + $0xc4] sm:$0xf]
      %v219 = vld [vmem:[%s176 + $0xc8] sm:$0xff]
      %v220 = vld [vmem:[%s176 + $0xd0] sm:$0xff]
      %v221 = vld [vmem:[%s176 + $0xd8] sm:$0xf]
      %v222 = vld [vmem:[%s176 + $0xdc] sm:$0xff]
      %v223 = vld [vmem:[%s176 + $0xe4] sm:$0xff]
      %v224 = vld [vmem:[%s176 + $0xec] sm:$0xf]
      %v225 = vld [vmem:[%s176 + $0xf0] sm:$0xff]
      %v226 = vld [vmem:[%s176 + $0xf8] sm:$0xff]
      %v227 = vld [vmem:[%s176 + $0x100] sm:$0xf]
      %v228 = vld [vmem:[%s176 + $0x104] sm:$0xff]
      %v229 = vld [vmem:[%s176 + $0x10c] sm:$0xff]
      %v230 = vld [vmem:[%s176 + $0x114] sm:$0xf]
      %v231 = vld [vmem:[%s176 + $0x118] sm:$0xff]
      %v232 = vld [vmem:[%s176 + $0x120] sm:$0xff]
      %v233 = vld [vmem:[%s176 + $0x128] sm:$0xf]
      %v234 = vld [vmem:[%s176 + $0x12c] sm:$0xff]
      %v235 = vld [vmem:[%s176 + $0x134] sm:$0xff]
      %v236 = vld [vmem:[%s176 + $0x13c] sm:$0xf]
      %v237 = vld [vmem:[%s176 + $0x140] sm:$0xff]
      %v238 = vld [vmem:[%s176 + $0x148] sm:$0xff]
      %v239 = vld [vmem:[%s176 + $0x150] sm:$0xf]
      %v240 = vld [vmem:[%s176 + $0x154] sm:$0xff]
      %v241 = vld [vmem:[%s176 + $0x15c] sm:$0xff]
      %v242 = vld [vmem:[%s176 + $0x164] sm:$0xf]
      %v243 = vld [vmem:[%s176 + $0x168] sm:$0xff]
      %v244 = vld [vmem:[%s176 + $0x170] sm:$0xff]
      %v245 = vld [vmem:[%s176 + $0x178] sm:$0xf]
      %v246 = vld [vmem:[%s176 + $0x17c] sm:$0xff]
      %v247 = vld [vmem:[%s176 + $0x184] sm:$0xff]
      %v248 = vld [vmem:[%s176 + $0x18c] sm:$0xf]
      %v249 = vld [vmem:[%s176 + $0x190] sm:$0xff]
      %v250 = vld [vmem:[%s176 + $0x198] sm:$0xff]
      %v251 = vld [vmem:[%s176 + $0x1a0] sm:$0xf]
      %v252 = vld [vmem:[%s176 + $0x1a4] sm:$0xff]
      %v253 = vld [vmem:[%s176 + $0x1ac] sm:$0xff]
      %v254 = vld [vmem:[%s176 + $0x1b4] sm:$0xf]
      %v255 = vld [vmem:[%s176 + $0x1b8] sm:$0xff]
      %v256 = vld [vmem:[%s176 + $0x1c0] sm:$0xff]
      %v257 = vld [vmem:[%s176 + $0x1c8] sm:$0xf]
      %v258 = vld [vmem:[%s176 + $0x1cc] sm:$0xff]
      %v259 = vld [vmem:[%s176 + $0x1d4] sm:$0xff]
      %v260 = vld [vmem:[%s176 + $0x1dc] sm:$0xf]
      %v261 = vld [vmem:[%s176 + $0x1e0] sm:$0xff]
      %v262 = vld [vmem:[%s176 + $0x1e8] sm:$0xff]
      %v263 = vld [vmem:[%s176 + $0x1f0] sm:$0xf]
      %v264 = vld [vmem:[%s176 + $0x1f4] sm:$0xff]
      %v265 = vld [vmem:[%s176 + $0x1fc] sm:$0xff]
      %v266 = vld [vmem:[%s176 + $0x204] sm:$0xf]
      %v267 = vld [vmem:[%s176 + $0x208] sm:$0xff]
      %v268 = vld [vmem:[%s176 + $0x210] sm:$0xff]
      %v269 = vld [vmem:[%s176 + $0x218] sm:$0xf]
      %v270 = vld [vmem:[%s176 + $0x21c] sm:$0xff]
      %v271 = vld [vmem:[%s176 + $0x224] sm:$0xff]
      %v272 = vld [vmem:[%s176 + $0x22c] sm:$0xf]
      %v273 = vld [vmem:[%s176 + $0x230] sm:$0xff]
      %v274 = vld [vmem:[%s176 + $0x238] sm:$0xff]
      %v275 = vld [vmem:[%s176 + $0x240] sm:$0xf]
      %v276 = vld [vmem:[%s176 + $0x244] sm:$0xff]
      %v277 = vld [vmem:[%s176 + $0x24c] sm:$0xff]
      %v278 = vld [vmem:[%s176 + $0x254] sm:$0xf]
      %v279 = vld [vmem:[%s176 + $0x258] sm:$0xff]
      %v280 = vld [vmem:[%s176 + $0x260] sm:$0xff]
      %v281 = vld [vmem:[%s176 + $0x268] sm:$0xf]
      %v282 = vld [vmem:[%s176 + $0x26c] sm:$0xff]
      %v283 = vld [vmem:[%s176 + $0x274] sm:$0xff]
      %v284 = vld [vmem:[%s176 + $0x27c] sm:$0xf]
      %v285 = vld [vmem:[%s1] sm:$0xf]
      %v286 = vld [vmem:[%s1 + $0x4] sm:$0xf]
      %v287 = vld [vmem:[%s1 + $0x8] sm:$0xf]
      %v288 = vld [vmem:[%s1 + $0xc] sm:$0xf]
      %v289 = vld [vmem:[%s1 + $0x10] sm:$0xf]
      %v290 = vld [vmem:[%s1 + $0x14] sm:$0xf]
      %v291 = vld [vmem:[%s1 + $0x18] sm:$0xf]
      %v292 = vld [vmem:[%s1 + $0x1c] sm:$0xf]
      %v293 = vld [vmem:[%s1 + $0x20] sm:$0xf]
      %v294 = vld [vmem:[%s1 + $0x24] sm:$0xf]
      %v295 = vld [vmem:[%s1 + $0x28] sm:$0xf]
      %v296 = vld [vmem:[%s1 + $0x2c] sm:$0xf]
      %v297 = vld [vmem:[%s1 + $0x30] sm:$0xf]
      %v298 = vld [vmem:[%s1 + $0x34] sm:$0xf]
      %v299 = vld [vmem:[%s1 + $0x38] sm:$0xf]
      %v300 = vld [vmem:[%s1 + $0x3c] sm:$0xf]
      %v301 = vld [vmem:[%s1 + $0x40] sm:$0xf]
      %v302 = vld [vmem:[%s1 + $0x44] sm:$0xf]
      %v303 = vld [vmem:[%s1 + $0x48] sm:$0xf]
      %v304 = vld [vmem:[%s1 + $0x4c] sm:$0xf]
      %v305 = vld [vmem:[%s1 + $0x50] sm:$0xf]
      %v306 = vld [vmem:[%s1 + $0x54] sm:$0xf]
      %v307 = vld [vmem:[%s1 + $0x58] sm:$0xf]
      %v308 = vld [vmem:[%s1 + $0x5c] sm:$0xf]
      %v309 = vld [vmem:[%s1 + $0x60] sm:$0xf]
      %v310 = vld [vmem:[%s1 + $0x64] sm:$0xf]
      %v311 = vld [vmem:[%s1 + $0x68] sm:$0xf]
      %v312 = vld [vmem:[%s1 + $0x6c] sm:$0xf]
      %v313 = vld [vmem:[%s1 + $0x70] sm:$0xf]
      %v314 = vld [vmem:[%s1 + $0x74] sm:$0xf]
      %v315 = vld [vmem:[%s1 + $0x78] sm:$0xf]
      %v316 = vld [vmem:[%s1 + $0x7c] sm:$0xf]
      %v317 = vld [vmem:[%s1 + $0x80] sm:$0xf]
      %v318 = vld [vmem:[%s1 + $0x84] sm:$0xf]
      %v319 = vld [vmem:[%s1 + $0x88] sm:$0xf]
      %v320 = vld [vmem:[%s1 + $0x8c] sm:$0xf]
      %v321 = vld [vmem:[%s1 + $0x90] sm:$0xf]
      %v322 = vld [vmem:[%s1 + $0x94] sm:$0xf]
      %v323 = vld [vmem:[%s1 + $0x98] sm:$0xf]
      %v324 = vld [vmem:[%s1 + $0x9c] sm:$0xf]
      %v325 = vld [vmem:[%s1 + $0xa0] sm:$0xf]
      %v326 = vld [vmem:[%s1 + $0xa4] sm:$0xf]
      %v327 = vld [vmem:[%s1 + $0xa8] sm:$0xf]
      %v328 = vld [vmem:[%s1 + $0xac] sm:$0xf]
      %v329 = vld [vmem:[%s1 + $0xb0] sm:$0xf]
      %v330 = vld [vmem:[%s1 + $0xb4] sm:$0xf]
      %v331 = vld [vmem:[%s1 + $0xb8] sm:$0xf]
      %v332 = vld [vmem:[%s1 + $0xbc] sm:$0xf]
      %v333 = vld [vmem:[%s1 + $0xc0] sm:$0xf]
      %v334 = vld [vmem:[%s1 + $0xc4] sm:$0xf]
      %v335 = vld [vmem:[%s1 + $0xc8] sm:$0xf]
      %v336 = vld [vmem:[%s1 + $0xcc] sm:$0xf]
      %v337 = vld [vmem:[%s1 + $0xd0] sm:$0xf]
      %v338 = vld [vmem:[%s1 + $0xd4] sm:$0xf]
      %v339 = vld [vmem:[%s1 + $0xd8] sm:$0xf]
      %v340 = vld [vmem:[%s1 + $0xdc] sm:$0xf]
      %v341 = vld [vmem:[%s1 + $0xe0] sm:$0xf]
      %v342 = vld [vmem:[%s1 + $0xe4] sm:$0xf]
      %v343 = vld [vmem:[%s1 + $0xe8] sm:$0xf]
      %v344 = vld [vmem:[%s1 + $0xec] sm:$0xf]
      %v345 = vld [vmem:[%s1 + $0xf0] sm:$0xf]
      %v346 = vld [vmem:[%s1 + $0xf4] sm:$0xf]
      %v347 = vld [vmem:[%s1 + $0xf8] sm:$0xf]
      %v348 = vld [vmem:[%s1 + $0xfc] sm:$0xf]
      %v349 = vld [vmem:[%s1 + $0x100] sm:$0xf]
      %v350 = vld [vmem:[%s1 + $0x104] sm:$0xf]
      %v351 = vld [vmem:[%s1 + $0x108] sm:$0xf]
      %v352 = vld [vmem:[%s1 + $0x10c] sm:$0xf]
      %v353 = vld [vmem:[%s1 + $0x110] sm:$0xf]
      %v354 = vld [vmem:[%s1 + $0x114] sm:$0xf]
      %v355 = vld [vmem:[%s1 + $0x118] sm:$0xf]
      %v356 = vld [vmem:[%s1 + $0x11c] sm:$0xf]
      %v357 = vld [vmem:[%s1 + $0x120] sm:$0xf]
      %v358 = vld [vmem:[%s1 + $0x124] sm:$0xf]
      %v359 = vld [vmem:[%s1 + $0x128] sm:$0xf]
      %v360 = vld [vmem:[%s1 + $0x12c] sm:$0xf]
      %v361 = vld [vmem:[%s1 + $0x130] sm:$0xf]
      %v362 = vld [vmem:[%s1 + $0x134] sm:$0xf]
      %v363 = vld [vmem:[%s1 + $0x138] sm:$0xf]
      %v364 = vld [vmem:[%s1 + $0x13c] sm:$0xf]
      %v461 = vunpack.c.l.b16 %v189
      %v462 = vunpack.c.h.b16 %v189
      %v463 = vunpack.c.l.b16 %v190
      %v464 = vunpack.c.h.b16 %v190
      %v465 = vunpack.c.l.b16 %v191
      %v466 = vunpack.c.l.b16 %v192
      %v467 = vunpack.c.h.b16 %v192
      %v468 = vunpack.c.l.b16 %v193
      %v469 = vunpack.c.h.b16 %v193
      %v470 = vunpack.c.l.b16 %v194
      %v471 = vunpack.c.l.b16 %v195
      %v472 = vunpack.c.h.b16 %v195
      %v473 = vunpack.c.l.b16 %v196
      %v474 = vunpack.c.h.b16 %v196
      %v475 = vunpack.c.l.b16 %v197
      %v476 = vunpack.c.l.b16 %v198
      %v477 = vunpack.c.h.b16 %v198
      %v478 = vunpack.c.l.b16 %v199
      %v479 = vunpack.c.h.b16 %v199
      %v480 = vunpack.c.l.b16 %v200
      %v481 = vunpack.c.l.b16 %v201
      %v482 = vunpack.c.h.b16 %v201
      %v483 = vunpack.c.l.b16 %v202
      %v484 = vunpack.c.h.b16 %v202
      %v485 = vunpack.c.l.b16 %v203
      %v486 = vunpack.c.l.b16 %v204
      %v487 = vunpack.c.h.b16 %v204
      %v488 = vunpack.c.l.b16 %v205
      %v489 = vunpack.c.h.b16 %v205
      %v490 = vunpack.c.l.b16 %v206
      %v491 = vunpack.c.l.b16 %v207
      %v492 = vunpack.c.h.b16 %v207
      %v493 = vunpack.c.l.b16 %v208
      %v494 = vunpack.c.h.b16 %v208
      %v495 = vunpack.c.l.b16 %v209
      %v496 = vunpack.c.l.b16 %v210
      %v497 = vunpack.c.h.b16 %v210
      %v498 = vunpack.c.l.b16 %v211
      %v499 = vunpack.c.h.b16 %v211
      %v500 = vunpack.c.l.b16 %v212
      %v501 = vunpack.c.l.b16 %v213
      %v502 = vunpack.c.h.b16 %v213
      %v503 = vunpack.c.l.b16 %v214
      %v504 = vunpack.c.h.b16 %v214
      %v505 = vunpack.c.l.b16 %v215
      %v506 = vunpack.c.l.b16 %v216
      %v507 = vunpack.c.h.b16 %v216
      %v508 = vunpack.c.l.b16 %v217
      %v509 = vunpack.c.h.b16 %v217
      %v510 = vunpack.c.l.b16 %v218
      %v511 = vunpack.c.l.b16 %v219
      %v512 = vunpack.c.h.b16 %v219
      %v513 = vunpack.c.l.b16 %v220
      %v514 = vunpack.c.h.b16 %v220
      %v515 = vunpack.c.l.b16 %v221
      %v516 = vunpack.c.l.b16 %v222
      %v517 = vunpack.c.h.b16 %v222
      %v518 = vunpack.c.l.b16 %v223
      %v519 = vunpack.c.h.b16 %v223
      %v520 = vunpack.c.l.b16 %v224
      %v521 = vunpack.c.l.b16 %v225
      %v522 = vunpack.c.h.b16 %v225
      %v523 = vunpack.c.l.b16 %v226
      %v524 = vunpack.c.h.b16 %v226
      %v525 = vunpack.c.l.b16 %v227
      %v526 = vunpack.c.l.b16 %v228
      %v527 = vunpack.c.h.b16 %v228
      %v528 = vunpack.c.l.b16 %v229
      %v529 = vunpack.c.h.b16 %v229
      %v530 = vunpack.c.l.b16 %v230
      %v531 = vunpack.c.l.b16 %v231
      %v532 = vunpack.c.h.b16 %v231
      %v533 = vunpack.c.l.b16 %v232
      %v534 = vunpack.c.h.b16 %v232
      %v535 = vunpack.c.l.b16 %v233
      %v536 = vunpack.c.l.b16 %v234
      %v537 = vunpack.c.h.b16 %v234
      %v538 = vunpack.c.l.b16 %v235
      %v539 = vunpack.c.h.b16 %v235
      %v540 = vunpack.c.l.b16 %v236
      %v541 = vunpack.c.l.b16 %v237
      %v542 = vunpack.c.h.b16 %v237
      %v543 = vunpack.c.l.b16 %v238
      %v544 = vunpack.c.h.b16 %v238
      %v545 = vunpack.c.l.b16 %v239
      %v546 = vunpack.c.l.b16 %v240
      %v547 = vunpack.c.h.b16 %v240
      %v548 = vunpack.c.l.b16 %v241
      %v549 = vunpack.c.h.b16 %v241
      %v550 = vunpack.c.l.b16 %v242
      %v551 = vunpack.c.l.b16 %v243
      %v552 = vunpack.c.h.b16 %v243
      %v553 = vunpack.c.l.b16 %v244
      %v554 = vunpack.c.h.b16 %v244
      %v555 = vunpack.c.l.b16 %v245
      %v556 = vunpack.c.l.b16 %v246
      %v557 = vunpack.c.h.b16 %v246
      %v558 = vunpack.c.l.b16 %v247
      %v559 = vunpack.c.h.b16 %v247
      %v560 = vunpack.c.l.b16 %v248
      %v561 = vunpack.c.l.b16 %v249
      %v562 = vunpack.c.h.b16 %v249
      %v563 = vunpack.c.l.b16 %v250
      %v564 = vunpack.c.h.b16 %v250
      %v565 = vunpack.c.l.b16 %v251
      %v566 = vunpack.c.l.b16 %v252
      %v567 = vunpack.c.h.b16 %v252
      %v568 = vunpack.c.l.b16 %v253
      %v569 = vunpack.c.h.b16 %v253
      %v570 = vunpack.c.l.b16 %v254
      %v571 = vunpack.c.l.b16 %v255
      %v572 = vunpack.c.h.b16 %v255
      %v573 = vunpack.c.l.b16 %v256
      %v574 = vunpack.c.h.b16 %v256
      %v575 = vunpack.c.l.b16 %v257
      %v576 = vunpack.c.l.b16 %v258
      %v577 = vunpack.c.h.b16 %v258
      %v578 = vunpack.c.l.b16 %v259
      %v579 = vunpack.c.h.b16 %v259
      %v580 = vunpack.c.l.b16 %v260
      %v581 = vunpack.c.l.b16 %v261
      %v582 = vunpack.c.h.b16 %v261
      %v583 = vunpack.c.l.b16 %v262
      %v584 = vunpack.c.h.b16 %v262
      %v585 = vunpack.c.l.b16 %v263
      %v586 = vunpack.c.l.b16 %v264
      %v587 = vunpack.c.h.b16 %v264
      %v588 = vunpack.c.l.b16 %v265
      %v589 = vunpack.c.h.b16 %v265
      %v590 = vunpack.c.l.b16 %v266
      %v591 = vunpack.c.l.b16 %v267
      %v592 = vunpack.c.h.b16 %v267
      %v593 = vunpack.c.l.b16 %v268
      %v594 = vunpack.c.h.b16 %v268
      %v595 = vunpack.c.l.b16 %v269
      %v596 = vunpack.c.l.b16 %v270
      %v597 = vunpack.c.h.b16 %v270
      %v598 = vunpack.c.l.b16 %v271
      %v599 = vunpack.c.h.b16 %v271
      %v600 = vunpack.c.l.b16 %v272
      %v601 = vunpack.c.l.b16 %v273
      %v602 = vunpack.c.h.b16 %v273
      %v603 = vunpack.c.l.b16 %v274
      %v604 = vunpack.c.h.b16 %v274
      %v605 = vunpack.c.l.b16 %v275
      %v606 = vunpack.c.l.b16 %v276
      %v607 = vunpack.c.h.b16 %v276
      %v608 = vunpack.c.l.b16 %v277
      %v609 = vunpack.c.h.b16 %v277
      %v610 = vunpack.c.l.b16 %v278
      %v611 = vunpack.c.l.b16 %v279
      %v612 = vunpack.c.h.b16 %v279
      %v613 = vunpack.c.l.b16 %v280
      %v614 = vunpack.c.h.b16 %v280
      %v615 = vunpack.c.l.b16 %v281
      %v616 = vunpack.c.l.b16 %v282
      %v617 = vunpack.c.h.b16 %v282
      %v618 = vunpack.c.l.b16 %v283
      %v619 = vunpack.c.h.b16 %v283
      %v620 = vunpack.c.l.b16 %v284
      %v621 = vpack.c.b16 %v466, %v461
      %v622 = vpack.c.b16 %v467, %v462
      %v623 = vpack.c.b16 %v468, %v463
      %v624 = vpack.c.b16 %v469, %v464
      %v625 = vpack.c.b16 %v470, %v465
      %v626 = vpack.c.b16 %v476, %v471
      %v627 = vpack.c.b16 %v477, %v472
      %v628 = vpack.c.b16 %v478, %v473
      %v629 = vpack.c.b16 %v479, %v474
      %v630 = vpack.c.b16 %v480, %v475
      %v631 = vpack.c.b16 %v486, %v481
      %v632 = vpack.c.b16 %v487, %v482
      %v633 = vpack.c.b16 %v488, %v483
      %v634 = vpack.c.b16 %v489, %v484
      %v635 = vpack.c.b16 %v490, %v485
      %v636 = vpack.c.b16 %v496, %v491
      %v637 = vpack.c.b16 %v497, %v492
      %v638 = vpack.c.b16 %v498, %v493
      %v639 = vpack.c.b16 %v499, %v494
      %v640 = vpack.c.b16 %v500, %v495
      %v641 = vpack.c.b16 %v506, %v501
      %v642 = vpack.c.b16 %v507, %v502
      %v643 = vpack.c.b16 %v508, %v503
      %v644 = vpack.c.b16 %v509, %v504
      %v645 = vpack.c.b16 %v510, %v505
      %v646 = vpack.c.b16 %v516, %v511
      %v647 = vpack.c.b16 %v517, %v512
      %v648 = vpack.c.b16 %v518, %v513
      %v649 = vpack.c.b16 %v519, %v514
      %v650 = vpack.c.b16 %v520, %v515
      %v651 = vpack.c.b16 %v526, %v521
      %v652 = vpack.c.b16 %v527, %v522
      %v653 = vpack.c.b16 %v528, %v523
      %v654 = vpack.c.b16 %v529, %v524
      %v655 = vpack.c.b16 %v530, %v525
      %v656 = vpack.c.b16 %v536, %v531
      %v657 = vpack.c.b16 %v537, %v532
      %v658 = vpack.c.b16 %v538, %v533
      %v659 = vpack.c.b16 %v539, %v534
      %v660 = vpack.c.b16 %v540, %v535
      %v661 = vpack.c.b16 %v546, %v541
      %v662 = vpack.c.b16 %v547, %v542
      %v663 = vpack.c.b16 %v548, %v543
      %v664 = vpack.c.b16 %v549, %v544
      %v665 = vpack.c.b16 %v550, %v545
      %v666 = vpack.c.b16 %v556, %v551
      %v667 = vpack.c.b16 %v557, %v552
      %v668 = vpack.c.b16 %v558, %v553
      %v669 = vpack.c.b16 %v559, %v554
      %v670 = vpack.c.b16 %v560, %v555
      %v671 = vpack.c.b16 %v566, %v561
      %v672 = vpack.c.b16 %v567, %v562
      %v673 = vpack.c.b16 %v568, %v563
      %v674 = vpack.c.b16 %v569, %v564
      %v675 = vpack.c.b16 %v570, %v565
      %v676 = vpack.c.b16 %v576, %v571
      %v677 = vpack.c.b16 %v577, %v572
      %v678 = vpack.c.b16 %v578, %v573
      %v679 = vpack.c.b16 %v579, %v574
      %v680 = vpack.c.b16 %v580, %v575
      %v681 = vpack.c.b16 %v586, %v581
      %v682 = vpack.c.b16 %v587, %v582
      %v683 = vpack.c.b16 %v588, %v583
      %v684 = vpack.c.b16 %v589, %v584
      %v685 = vpack.c.b16 %v590, %v585
      %v686 = vpack.c.b16 %v596, %v591
      %v687 = vpack.c.b16 %v597, %v592
      %v688 = vpack.c.b16 %v598, %v593
      %v689 = vpack.c.b16 %v599, %v594
      %v690 = vpack.c.b16 %v600, %v595
      %v691 = vpack.c.b16 %v606, %v601
      %v692 = vpack.c.b16 %v607, %v602
      %v693 = vpack.c.b16 %v608, %v603
      %v694 = vpack.c.b16 %v609, %v604
      %v695 = vpack.c.b16 %v610, %v605
      %v696 = vpack.c.b16 %v616, %v611
      %v697 = vpack.c.b16 %v617, %v612
      %v698 = vpack.c.b16 %v618, %v613
      %v699 = vpack.c.b16 %v619, %v614
      %v700 = vpack.c.b16 %v620, %v615
      %v861 = vunpack.c.l.b16 %v285
      %v862 = vunpack.c.l.b16 %v286
      %v863 = vunpack.c.l.b16 %v287
      %v864 = vunpack.c.l.b16 %v288
      %v865 = vunpack.c.l.b16 %v289
      %v866 = vunpack.c.l.b16 %v290
      %v867 = vunpack.c.l.b16 %v291
      %v868 = vunpack.c.l.b16 %v292
      %v869 = vunpack.c.l.b16 %v293
      %v870 = vunpack.c.l.b16 %v294
      %v871 = vunpack.c.l.b16 %v295
      %v872 = vunpack.c.l.b16 %v296
      %v873 = vunpack.c.l.b16 %v297
      %v874 = vunpack.c.l.b16 %v298
      %v875 = vunpack.c.l.b16 %v299
      %v876 = vunpack.c.l.b16 %v300
      %v877 = vunpack.c.l.b16 %v301
      %v878 = vunpack.c.l.b16 %v302
      %v879 = vunpack.c.l.b16 %v303
      %v880 = vunpack.c.l.b16 %v304
      %v881 = vunpack.c.l.b16 %v305
      %v882 = vunpack.c.l.b16 %v306
      %v883 = vunpack.c.l.b16 %v307
      %v884 = vunpack.c.l.b16 %v308
      %v885 = vunpack.c.l.b16 %v309
      %v886 = vunpack.c.l.b16 %v310
      %v887 = vunpack.c.l.b16 %v311
      %v888 = vunpack.c.l.b16 %v312
      %v889 = vunpack.c.l.b16 %v313
      %v890 = vunpack.c.l.b16 %v314
      %v891 = vunpack.c.l.b16 %v315
      %v892 = vunpack.c.l.b16 %v316
      %v893 = vunpack.c.l.b16 %v317
      %v894 = vunpack.c.l.b16 %v318
      %v895 = vunpack.c.l.b16 %v319
      %v896 = vunpack.c.l.b16 %v320
      %v897 = vunpack.c.l.b16 %v321
      %v898 = vunpack.c.l.b16 %v322
      %v899 = vunpack.c.l.b16 %v323
      %v900 = vunpack.c.l.b16 %v324
      %v901 = vunpack.c.l.b16 %v325
      %v902 = vunpack.c.l.b16 %v326
      %v903 = vunpack.c.l.b16 %v327
      %v904 = vunpack.c.l.b16 %v328
      %v905 = vunpack.c.l.b16 %v329
      %v906 = vunpack.c.l.b16 %v330
      %v907 = vunpack.c.l.b16 %v331
      %v908 = vunpack.c.l.b16 %v332
      %v909 = vunpack.c.l.b16 %v333
      %v910 = vunpack.c.l.b16 %v334
      %v911 = vunpack.c.l.b16 %v335
      %v912 = vunpack.c.l.b16 %v336
      %v913 = vunpack.c.l.b16 %v337
      %v914 = vunpack.c.l.b16 %v338
      %v915 = vunpack.c.l.b16 %v339
      %v916 = vunpack.c.l.b16 %v340
      %v917 = vunpack.c.l.b16 %v341
      %v918 = vunpack.c.l.b16 %v342
      %v919 = vunpack.c.l.b16 %v343
      %v920 = vunpack.c.l.b16 %v344
      %v921 = vunpack.c.l.b16 %v345
      %v922 = vunpack.c.l.b16 %v346
      %v923 = vunpack.c.l.b16 %v347
      %v924 = vunpack.c.l.b16 %v348
      %v925 = vunpack.c.l.b16 %v349
      %v926 = vunpack.c.l.b16 %v350
      %v927 = vunpack.c.l.b16 %v351
      %v928 = vunpack.c.l.b16 %v352
      %v929 = vunpack.c.l.b16 %v353
      %v930 = vunpack.c.l.b16 %v354
      %v931 = vunpack.c.l.b16 %v355
      %v932 = vunpack.c.l.b16 %v356
      %v933 = vunpack.c.l.b16 %v357
      %v934 = vunpack.c.l.b16 %v358
      %v935 = vunpack.c.l.b16 %v359
      %v936 = vunpack.c.l.b16 %v360
      %v937 = vunpack.c.l.b16 %v361
      %v938 = vunpack.c.l.b16 %v362
      %v939 = vunpack.c.l.b16 %v363
      %v940 = vunpack.c.l.b16 %v364
      %v941 = vpack.c.b16 %v862, %v861
      %v942 = vpack.c.b16 %v864, %v863
      %v943 = vpack.c.b16 %v866, %v865
      %v944 = vpack.c.b16 %v868, %v867
      %v945 = vpack.c.b16 %v870, %v869
      %v946 = vpack.c.b16 %v872, %v871
      %v947 = vpack.c.b16 %v874, %v873
      %v948 = vpack.c.b16 %v876, %v875
      %v949 = vpack.c.b16 %v878, %v877
      %v950 = vpack.c.b16 %v880, %v879
      %v951 = vpack.c.b16 %v882, %v881
      %v952 = vpack.c.b16 %v884, %v883
      %v953 = vpack.c.b16 %v886, %v885
      %v954 = vpack.c.b16 %v888, %v887
      %v955 = vpack.c.b16 %v890, %v889
      %v956 = vpack.c.b16 %v892, %v891
      %v957 = vpack.c.b16 %v894, %v893
      %v958 = vpack.c.b16 %v896, %v895
      %v959 = vpack.c.b16 %v898, %v897
      %v960 = vpack.c.b16 %v900, %v899
      %v961 = vpack.c.b16 %v902, %v901
      %v962 = vpack.c.b16 %v904, %v903
      %v963 = vpack.c.b16 %v906, %v905
      %v964 = vpack.c.b16 %v908, %v907
      %v965 = vpack.c.b16 %v910, %v909
      %v966 = vpack.c.b16 %v912, %v911
      %v967 = vpack.c.b16 %v914, %v913
      %v968 = vpack.c.b16 %v916, %v915
      %v969 = vpack.c.b16 %v918, %v917
      %v970 = vpack.c.b16 %v920, %v919
      %v971 = vpack.c.b16 %v922, %v921
      %v972 = vpack.c.b16 %v924, %v923
      %v973 = vpack.c.b16 %v926, %v925
      %v974 = vpack.c.b16 %v928, %v927
      %v975 = vpack.c.b16 %v930, %v929
      %v976 = vpack.c.b16 %v932, %v931
      %v977 = vpack.c.b16 %v934, %v933
      %v978 = vpack.c.b16 %v936, %v935
      %v979 = vpack.c.b16 %v938, %v937
      %v980 = vpack.c.b16 %v940, %v939
      %1021 = vmatprep.subr.bf16.mxu0 0
      %1022 = vmatpush1.bf16.msra.mxu0 %v941
      %1023 = vmatprep.subr.bf16.mxu0 0
      %1024 = vmatpush1.bf16.msra.mxu0 %v942
      %1025 = vmatprep.subr.bf16.mxu0 0
      %1026 = vmatpush1.bf16.msra.mxu0 %v943
      %1027 = vmatprep.subr.bf16.mxu0 0
      %1028 = vmatpush1.bf16.msra.mxu0 %v944
      %1029 = vmatprep.subr.bf16.mxu0 0
      %1030 = vmatpush1.bf16.msra.mxu0 %v945
      %1031 = vmatprep.subr.bf16.mxu0 0
      %1032 = vmatpush1.bf16.msra.mxu0 %v946
      %1033 = vmatprep.subr.bf16.mxu0 0
      %1034 = vmatpush1.bf16.msra.mxu0 %v947
      %1035 = vmatprep.subr.bf16.mxu0 0
      %1036 = vmatpush1.bf16.msra.mxu0 %v948
      %1037 = vmatprep.subr.bf16.mxu0 0
      %1038 = vmatpush1.bf16.msra.mxu0 %v949
      %1039 = vmatprep.subr.bf16.mxu0 0
      %1040 = vmatpush1.bf16.msra.mxu0 %v950
      %1041 = vmatprep.subr.bf16.mxu0 0
      %1042 = vmatpush1.bf16.msra.mxu0 %v951
      %1043 = vmatprep.subr.bf16.mxu0 0
      %1044 = vmatpush1.bf16.msra.mxu0 %v952
      %1045 = vmatprep.subr.bf16.mxu0 0
      %1046 = vmatpush1.bf16.msra.mxu0 %v953
      %1047 = vmatprep.subr.bf16.mxu0 0
      %1048 = vmatpush1.bf16.msra.mxu0 %v954
      %1049 = vmatprep.subr.bf16.mxu0 0
      %1050 = vmatpush1.bf16.msra.mxu0 %v955
      %1051 = vmatprep.subr.bf16.mxu0 0
      %1052 = vmatpush1.bf16.msra.mxu0 %v956
      %1053 = vmatprep.mubr.bf16.mxu0 %v622
      %1054 = vmatmul.mubr.bf16.gmra.mrb[0].mxu0 %v621
      %v1055 = vpop.f32.mrb[0].mxu0
      %v1056 = vadd.f32 0.0, %v1055
      %v1057 = vpop.f32.mrb[0].mxu0
      %v1058 = vpop.f32.mrb[0].mxu0
      %v1059 = vadd.f32 0.0, %v1058
      %v1060 = vpop.f32.mrb[0].mxu0
      %1061 = vmatprep.mubr.bf16.mxu0 %v627
      %1062 = vmatmul.mubr.bf16.gmra.mrb[0].mxu0 %v626
      %v1063 = vpop.f32.mrb[0].mxu0
      %v1064 = vadd.f32 0.0, %v1063
      %v1065 = vpop.f32.mrb[0].mxu0
      %v1066 = vpop.f32.mrb[0].mxu0
      %v1067 = vadd.f32 0.0, %v1066
      %v1068 = vpop.f32.mrb[0].mxu0
      %1069 = vmatprep.mubr.bf16.mxu0 %v632
      %1070 = vmatmul.mubr.bf16.gmra.mrb[0].mxu0 %v631
      %v1071 = vpop.f32.mrb[0].mxu0
      %v1072 = vadd.f32 0.0, %v1071
      %v1073 = vpop.f32.mrb[0].mxu0
      %v1074 = vpop.f32.mrb[0].mxu0
      %v1075 = vadd.f32 0.0, %v1074
      %v1076 = vpop.f32.mrb[0].mxu0
      %1077 = vmatprep.mubr.bf16.mxu0 %v637
      %1078 = vmatmul.mubr.bf16.gmra.mrb[0].mxu0 %v636
      %v1079 = vpop.f32.mrb[0].mxu0
      %v1080 = vadd.f32 0.0, %v1079
      %v1081 = vpop.f32.mrb[0].mxu0
      %v1082 = vpop.f32.mrb[0].mxu0
      %v1083 = vadd.f32 0.0, %v1082
      %v1084 = vpop.f32.mrb[0].mxu0
      %1085 = vmatprep.mubr.bf16.mxu0 %v642
      %1086 = vmatmul.mubr.bf16.gmra.mrb[0].mxu0 %v641
      %v1087 = vpop.f32.mrb[0].mxu0
      %v1088 = vadd.f32 0.0, %v1087
      %v1089 = vpop.f32.mrb[0].mxu0
      %v1090 = vpop.f32.mrb[0].mxu0
      %v1091 = vadd.f32 0.0, %v1090
      %v1092 = vpop.f32.mrb[0].mxu0
      %1093 = vmatprep.mubr.bf16.mxu0 %v647
      %1094 = vmatmul.mubr.bf16.gmra.mrb[0].mxu0 %v646
      %v1095 = vpop.f32.mrb[0].mxu0
      %v1096 = vadd.f32 0.0, %v1095
      %v1097 = vpop.f32.mrb[0].mxu0
      %v1098 = vpop.f32.mrb[0].mxu0
      %v1099 = vadd.f32 0.0, %v1098
      %v1100 = vpop.f32.mrb[0].mxu0
      %1101 = vmatprep.mubr.bf16.mxu0 %v652
      %1102 = vmatmul.mubr.bf16.gmra.mrb[0].mxu0 %v651
      %v1103 = vpop.f32.mrb[0].mxu0
      %v1104 = vadd.f32 0.0, %v1103
      %v1105 = vpop.f32.mrb[0].mxu0
      %v1106 = vpop.f32.mrb[0].mxu0
      %v1107 = vadd.f32 0.0, %v1106
      %v1108 = vpop.f32.mrb[0].mxu0
      %1109 = vmatprep.mubr.bf16.mxu0 %v657
      %1110 = vmatmul.mubr.bf16.gmra.mrb[0].mxu0 %v656
      %v1111 = vpop.f32.mrb[0].mxu0
      %v1112 = vadd.f32 0.0, %v1111
      %v1113 = vpop.f32.mrb[0].mxu0
      %v1114 = vpop.f32.mrb[0].mxu0
      %v1115 = vadd.f32 0.0, %v1114
      %v1116 = vpop.f32.mrb[0].mxu0
      %1117 = vmatprep.mubr.bf16.mxu0 %v662
      %1118 = vmatmul.mubr.bf16.gmra.mrb[0].mxu0 %v661
      %v1119 = vpop.f32.mrb[0].mxu0
      %v1120 = vadd.f32 0.0, %v1119
      %v1121 = vpop.f32.mrb[0].mxu0
      %v1122 = vpop.f32.mrb[0].mxu0
      %v1123 = vadd.f32 0.0, %v1122
      %v1124 = vpop.f32.mrb[0].mxu0
      %1125 = vmatprep.mubr.bf16.mxu0 %v667
      %1126 = vmatmul.mubr.bf16.gmra.mrb[0].mxu0 %v666
      %v1127 = vpop.f32.mrb[0].mxu0
      %v1128 = vadd.f32 0.0, %v1127
      %v1129 = vpop.f32.mrb[0].mxu0
      %v1130 = vpop.f32.mrb[0].mxu0
      %v1131 = vadd.f32 0.0, %v1130
      %v1132 = vpop.f32.mrb[0].mxu0
      %1133 = vmatprep.mubr.bf16.mxu0 %v672
      %1134 = vmatmul.mubr.bf16.gmra.mrb[0].mxu0 %v671
      %v1135 = vpop.f32.mrb[0].mxu0
      %v1136 = vadd.f32 0.0, %v1135
      %v1137 = vpop.f32.mrb[0].mxu0
      %v1138 = vpop.f32.mrb[0].mxu0
      %v1139 = vadd.f32 0.0, %v1138
      %v1140 = vpop.f32.mrb[0].mxu0
      %1141 = vmatprep.mubr.bf16.mxu0 %v677
      %1142 = vmatmul.mubr.bf16.gmra.mrb[0].mxu0 %v676
      %v1143 = vpop.f32.mrb[0].mxu0
      %v1144 = vadd.f32 0.0, %v1143
      %v1145 = vpop.f32.mrb[0].mxu0
      %v1146 = vpop.f32.mrb[0].mxu0
      %v1147 = vadd.f32 0.0, %v1146
      %v1148 = vpop.f32.mrb[0].mxu0
      %1149 = vmatprep.mubr.bf16.mxu0 %v682
      %1150 = vmatmul.mubr.bf16.gmra.mrb[0].mxu0 %v681
      %v1151 = vpop.f32.mrb[0].mxu0
      %v1152 = vadd.f32 0.0, %v1151
      %v1153 = vpop.f32.mrb[0].mxu0
      %v1154 = vpop.f32.mrb[0].mxu0
      %v1155 = vadd.f32 0.0, %v1154
      %v1156 = vpop.f32.mrb[0].mxu0
      %1157 = vmatprep.mubr.bf16.mxu0 %v687
      %1158 = vmatmul.mubr.bf16.gmra.mrb[0].mxu0 %v686
      %v1159 = vpop.f32.mrb[0].mxu0
      %v1160 = vadd.f32 0.0, %v1159
      %v1161 = vpop.f32.mrb[0].mxu0
      %v1162 = vpop.f32.mrb[0].mxu0
      %v1163 = vadd.f32 0.0, %v1162
      %v1164 = vpop.f32.mrb[0].mxu0
      %1165 = vmatprep.mubr.bf16.mxu0 %v692
      %1166 = vmatmul.mubr.bf16.gmra.mrb[0].mxu0 %v691
      %v1167 = vpop.f32.mrb[0].mxu0
      %v1168 = vadd.f32 0.0, %v1167
      %v1169 = vpop.f32.mrb[0].mxu0
      %v1170 = vpop.f32.mrb[0].mxu0
      %v1171 = vadd.f32 0.0, %v1170
      %v1172 = vpop.f32.mrb[0].mxu0
      %1173 = vmatprep.mubr.bf16.mxu0 %v697
      %1174 = vmatmul.mubr.bf16.gmra.mrb[0].mxu0 %v696
      %v1175 = vpop.f32.mrb[0].mxu0
      %v1176 = vadd.f32 0.0, %v1175
      %v1177 = vpop.f32.mrb[0].mxu0
      %v1178 = vpop.f32.mrb[0].mxu0
      %v1179 = vadd.f32 0.0, %v1178
      %v1180 = vpop.f32.mrb[0].mxu0
      %1181 = vdwg.mxu0
      %1182 = vmatprep.subr.bf16.mxu0 0
      %1183 = vmatpush1.bf16.msra.mxu0 %v957
      %1184 = vmatprep.subr.bf16.mxu0 0
      %1185 = vmatpush1.bf16.msra.mxu0 %v958
      %1186 = vmatprep.subr.bf16.mxu0 0
      %1187 = vmatpush1.bf16.msra.mxu0 %v959
      %1188 = vmatprep.subr.bf16.mxu0 0
      %1189 = vmatpush1.bf16.msra.mxu0 %v960
      %1190 = vmatprep.subr.bf16.mxu0 0
      %1191 = vmatpush1.bf16.msra.mxu0 %v961
      %1192 = vmatprep.subr.bf16.mxu0 0
      %1193 = vmatpush1.bf16.msra.mxu0 %v962
      %1194 = vmatprep.subr.bf16.mxu0 0
      %1195 = vmatpush1.bf16.msra.mxu0 %v963
      %1196 = vmatprep.subr.bf16.mxu0 0
      %1197 = vmatpush1.bf16.msra.mxu0 %v964
      %1198 = vmatprep.subr.bf16.mxu0 0
      %1199 = vmatpush1.bf16.msra.mxu0 %v965
      %1200 = vmatprep.subr.bf16.mxu0 0
      %1201 = vmatpush1.bf16.msra.mxu0 %v966
      %1202 = vmatprep.subr.bf16.mxu0 0
      %1203 = vmatpush1.bf16.msra.mxu0 %v967
      %1204 = vmatprep.subr.bf16.mxu0 0
      %1205 = vmatpush1.bf16.msra.mxu0 %v968
      %1206 = vmatprep.subr.bf16.mxu0 0
      %1207 = vmatpush1.bf16.msra.mxu0 %v969
      %1208 = vmatprep.subr.bf16.mxu0 0
      %1209 = vmatpush1.bf16.msra.mxu0 %v970
      %1210 = vmatprep.subr.bf16.mxu0 0
      %1211 = vmatpush1.bf16.msra.mxu0 %v971
      %1212 = vmatprep.subr.bf16.mxu0 0
      %1213 = vmatpush1.bf16.msra.mxu0 %v972
      %1214 = vmatprep.mubr.bf16.mxu0 %v624
      %1215 = vmatmul.mubr.bf16.gmra.mrb[0].mxu0 %v623
      %v1216 = vpop.f32.mrb[0].mxu0
      %v1217 = vadd.f32 %v1056, %v1216
      %v1218 = vpop.f32.mrb[0].mxu0
      %v1219 = vpop.f32.mrb[0].mxu0
      %v1220 = vadd.f32 %v1059, %v1219
      %v1221 = vpop.f32.mrb[0].mxu0
      %1222 = vmatprep.mubr.bf16.mxu0 %v629
      %1223 = vmatmul.mubr.bf16.gmra.mrb[0].mxu0 %v628
      %v1224 = vpop.f32.mrb[0].mxu0
      %v1225 = vadd.f32 %v1064, %v1224
      %v1226 = vpop.f32.mrb[0].mxu0
      %v1227 = vpop.f32.mrb[0].mxu0
      %v1228 = vadd.f32 %v1067, %v1227
      %v1229 = vpop.f32.mrb[0].mxu0
      %1230 = vmatprep.mubr.bf16.mxu0 %v634
      %1231 = vmatmul.mubr.bf16.gmra.mrb[0].mxu0 %v633
      %v1232 = vpop.f32.mrb[0].mxu0
      %v1233 = vadd.f32 %v1072, %v1232
      %v1234 = vpop.f32.mrb[0].mxu0
      %v1235 = vpop.f32.mrb[0].mxu0
      %v1236 = vadd.f32 %v1075, %v1235
      %v1237 = vpop.f32.mrb[0].mxu0
      %1238 = vmatprep.mubr.bf16.mxu0 %v639
      %1239 = vmatmul.mubr.bf16.gmra.mrb[0].mxu0 %v638
      %v1240 = vpop.f32.mrb[0].mxu0
      %v1241 = vadd.f32 %v1080, %v1240
      %v1242 = vpop.f32.mrb[0].mxu0
      %v1243 = vpop.f32.mrb[0].mxu0
      %v1244 = vadd.f32 %v1083, %v1243
      %v1245 = vpop.f32.mrb[0].mxu0
      %1246 = vmatprep.mubr.bf16.mxu0 %v644
      %1247 = vmatmul.mubr.bf16.gmra.mrb[0].mxu0 %v643
      %v1248 = vpop.f32.mrb[0].mxu0
      %v1249 = vadd.f32 %v1088, %v1248
      %v1250 = vpop.f32.mrb[0].mxu0
      %v1251 = vpop.f32.mrb[0].mxu0
      %v1252 = vadd.f32 %v1091, %v1251
      %v1253 = vpop.f32.mrb[0].mxu0
      %1254 = vmatprep.mubr.bf16.mxu0 %v649
      %1255 = vmatmul.mubr.bf16.gmra.mrb[0].mxu0 %v648
      %v1256 = vpop.f32.mrb[0].mxu0
      %v1257 = vadd.f32 %v1096, %v1256
      %v1258 = vpop.f32.mrb[0].mxu0
      %v1259 = vpop.f32.mrb[0].mxu0
      %v1260 = vadd.f32 %v1099, %v1259
      %v1261 = vpop.f32.mrb[0].mxu0
      %1262 = vmatprep.mubr.bf16.mxu0 %v654
      %1263 = vmatmul.mubr.bf16.gmra.mrb[0].mxu0 %v653
      %v1264 = vpop.f32.mrb[0].mxu0
      %v1265 = vadd.f32 %v1104, %v1264
      %v1266 = vpop.f32.mrb[0].mxu0
      %v1267 = vpop.f32.mrb[0].mxu0
      %v1268 = vadd.f32 %v1107, %v1267
      %v1269 = vpop.f32.mrb[0].mxu0
      %1270 = vmatprep.mubr.bf16.mxu0 %v659
      %1271 = vmatmul.mubr.bf16.gmra.mrb[0].mxu0 %v658
      %v1272 = vpop.f32.mrb[0].mxu0
      %v1273 = vadd.f32 %v1112, %v1272
      %v1274 = vpop.f32.mrb[0].mxu0
      %v1275 = vpop.f32.mrb[0].mxu0
      %v1276 = vadd.f32 %v1115, %v1275
      %v1277 = vpop.f32.mrb[0].mxu0
      %1278 = vmatprep.mubr.bf16.mxu0 %v664
      %1279 = vmatmul.mubr.bf16.gmra.mrb[0].mxu0 %v663
      %v1280 = vpop.f32.mrb[0].mxu0
      %v1281 = vadd.f32 %v1120, %v1280
      %v1282 = vpop.f32.mrb[0].mxu0
      %v1283 = vpop.f32.mrb[0].mxu0
      %v1284 = vadd.f32 %v1123, %v1283
      %v1285 = vpop.f32.mrb[0].mxu0
      %1286 = vmatprep.mubr.bf16.mxu0 %v669
      %1287 = vmatmul.mubr.bf16.gmra.mrb[0].mxu0 %v668
      %v1288 = vpop.f32.mrb[0].mxu0
      %v1289 = vadd.f32 %v1128, %v1288
      %v1290 = vpop.f32.mrb[0].mxu0
      %v1291 = vpop.f32.mrb[0].mxu0
      %v1292 = vadd.f32 %v1131, %v1291
      %v1293 = vpop.f32.mrb[0].mxu0
      %1294 = vmatprep.mubr.bf16.mxu0 %v674
      %1295 = vmatmul.mubr.bf16.gmra.mrb[0].mxu0 %v673
      %v1296 = vpop.f32.mrb[0].mxu0
      %v1297 = vadd.f32 %v1136, %v1296
      %v1298 = vpop.f32.mrb[0].mxu0
      %v1299 = vpop.f32.mrb[0].mxu0
      %v1300 = vadd.f32 %v1139, %v1299
      %v1301 = vpop.f32.mrb[0].mxu0
      %1302 = vmatprep.mubr.bf16.mxu0 %v679
      %1303 = vmatmul.mubr.bf16.gmra.mrb[0].mxu0 %v678
      %v1304 = vpop.f32.mrb[0].mxu0
      %v1305 = vadd.f32 %v1144, %v1304
      %v1306 = vpop.f32.mrb[0].mxu0
      %v1307 = vpop.f32.mrb[0].mxu0
      %v1308 = vadd.f32 %v1147, %v1307
      %v1309 = vpop.f32.mrb[0].mxu0
      %1310 = vmatprep.mubr.bf16.mxu0 %v684
      %1311 = vmatmul.mubr.bf16.gmra.mrb[0].mxu0 %v683
      %v1312 = vpop.f32.mrb[0].mxu0
      %v1313 = vadd.f32 %v1152, %v1312
      %v1314 = vpop.f32.mrb[0].mxu0
      %v1315 = vpop.f32.mrb[0].mxu0
      %v1316 = vadd.f32 %v1155, %v1315
      %v1317 = vpop.f32.mrb[0].mxu0
      %1318 = vmatprep.mubr.bf16.mxu0 %v689
      %1319 = vmatmul.mubr.bf16.gmra.mrb[0].mxu0 %v688
      %v1320 = vpop.f32.mrb[0].mxu0
      %v1321 = vadd.f32 %v1160, %v1320
      %v1322 = vpop.f32.mrb[0].mxu0
      %v1323 = vpop.f32.mrb[0].mxu0
      %v1324 = vadd.f32 %v1163, %v1323
      %v1325 = vpop.f32.mrb[0].mxu0
      %1326 = vmatprep.mubr.bf16.mxu0 %v694
      %1327 = vmatmul.mubr.bf16.gmra.mrb[0].mxu0 %v693
      %v1328 = vpop.f32.mrb[0].mxu0
      %v1329 = vadd.f32 %v1168, %v1328
      %v1330 = vpop.f32.mrb[0].mxu0
      %v1331 = vpop.f32.mrb[0].mxu0
      %v1332 = vadd.f32 %v1171, %v1331
      %v1333 = vpop.f32.mrb[0].mxu0
      %1334 = vmatprep.mubr.bf16.mxu0 %v699
      %1335 = vmatmul.mubr.bf16.gmra.mrb[0].mxu0 %v698
      %v1336 = vpop.f32.mrb[0].mxu0
      %v1337 = vadd.f32 %v1176, %v1336
      %v1338 = vpop.f32.mrb[0].mxu0
      %v1339 = vpop.f32.mrb[0].mxu0
      %v1340 = vadd.f32 %v1179, %v1339
      %v1341 = vpop.f32.mrb[0].mxu0
      %1342 = vdwg.mxu0
      %1343 = vmatprep.subr.bf16.mxu0 0
      %1344 = vmatpush1.bf16.msra.mxu0 %v973
      %1345 = vmatprep.subr.bf16.mxu0 0
      %1346 = vmatpush1.bf16.msra.mxu0 %v974
      %1347 = vmatprep.subr.bf16.mxu0 0
      %1348 = vmatpush1.bf16.msra.mxu0 %v975
      %1349 = vmatprep.subr.bf16.mxu0 0
      %1350 = vmatpush1.bf16.msra.mxu0 %v976
      %1351 = vmatprep.subr.bf16.mxu0 0
      %1352 = vmatpush1.bf16.msra.mxu0 %v977
      %1353 = vmatprep.subr.bf16.mxu0 0
      %1354 = vmatpush1.bf16.msra.mxu0 %v978
      %1355 = vmatprep.subr.bf16.mxu0 0
      %1356 = vmatpush1.bf16.msra.mxu0 %v979
      %1357 = vmatprep.subr.bf16.mxu0 0
      %1358 = vmatpush1.bf16.msra.mxu0 %v980
      %1359 = vmatprep.subr.bf16.mxu0 0
      %1360 = vmatpush1.bf16.msra.mxu0 0
      %1361 = vmatprep.subr.bf16.mxu0 0
      %1362 = vmatpush1.bf16.msra.mxu0 0
      %1363 = vmatprep.subr.bf16.mxu0 0
      %1364 = vmatpush1.bf16.msra.mxu0 0
      %1365 = vmatprep.subr.bf16.mxu0 0
      %1366 = vmatpush1.bf16.msra.mxu0 0
      %1367 = vmatprep.subr.bf16.mxu0 0
      %1368 = vmatpush1.bf16.msra.mxu0 0
      %1369 = vmatprep.subr.bf16.mxu0 0
      %1370 = vmatpush1.bf16.msra.mxu0 0
      %1371 = vmatprep.subr.bf16.mxu0 0
      %1372 = vmatpush1.bf16.msra.mxu0 0
      %1373 = vmatprep.subr.bf16.mxu0 0
      %1374 = vmatpush1.bf16.msra.mxu0 0
      %1375 = vmatprep.mubr.bf16.mxu0 0
      %1376 = vmatmul.mubr.bf16.gmra.mrb[0].mxu0 %v625
      %v1377 = vpop.f32.mrb[0].mxu0
      %v1378 = vadd.f32 %v1217, %v1377
      %v1379 = vpop.f32.mrb[0].mxu0
      %v1380 = vpop.f32.mrb[0].mxu0
      %v1381 = vadd.f32 %v1220, %v1380
      %v1382 = vpop.f32.mrb[0].mxu0
      %1383 = vmatprep.mubr.bf16.mxu0 0
      %1384 = vmatmul.mubr.bf16.gmra.mrb[0].mxu0 %v630
      %v1385 = vpop.f32.mrb[0].mxu0
      %v1386 = vadd.f32 %v1225, %v1385
      %v1387 = vpop.f32.mrb[0].mxu0
      %v1388 = vpop.f32.mrb[0].mxu0
      %v1389 = vadd.f32 %v1228, %v1388
      %v1390 = vpop.f32.mrb[0].mxu0
      %1391 = vmatprep.mubr.bf16.mxu0 0
      %1392 = vmatmul.mubr.bf16.gmra.mrb[0].mxu0 %v635
      %v1393 = vpop.f32.mrb[0].mxu0
      %v1394 = vadd.f32 %v1233, %v1393
      %v1395 = vpop.f32.mrb[0].mxu0
      %v1396 = vpop.f32.mrb[0].mxu0
      %v1397 = vadd.f32 %v1236, %v1396
      %v1398 = vpop.f32.mrb[0].mxu0
      %1399 = vmatprep.mubr.bf16.mxu0 0
      %1400 = vmatmul.mubr.bf16.gmra.mrb[0].mxu0 %v640
      %v1401 = vpop.f32.mrb[0].mxu0
      %v1402 = vadd.f32 %v1241, %v1401
      %v1403 = vpop.f32.mrb[0].mxu0
      %v1404 = vpop.f32.mrb[0].mxu0
      %v1405 = vadd.f32 %v1244, %v1404
      %v1406 = vpop.f32.mrb[0].mxu0
      %1407 = vmatprep.mubr.bf16.mxu0 0
      %1408 = vmatmul.mubr.bf16.gmra.mrb[0].mxu0 %v645
      %v1409 = vpop.f32.mrb[0].mxu0
      %v1410 = vadd.f32 %v1249, %v1409
      %v1411 = vpop.f32.mrb[0].mxu0
      %v1412 = vpop.f32.mrb[0].mxu0
      %v1413 = vadd.f32 %v1252, %v1412
      %v1414 = vpop.f32.mrb[0].mxu0
      %1415 = vmatprep.mubr.bf16.mxu0 0
      %1416 = vmatmul.mubr.bf16.gmra.mrb[0].mxu0 %v650
      %v1417 = vpop.f32.mrb[0].mxu0
      %v1418 = vadd.f32 %v1257, %v1417
      %v1419 = vpop.f32.mrb[0].mxu0
      %v1420 = vpop.f32.mrb[0].mxu0
      %v1421 = vadd.f32 %v1260, %v1420
      %v1422 = vpop.f32.mrb[0].mxu0
      %1423 = vmatprep.mubr.bf16.mxu0 0
      %1424 = vmatmul.mubr.bf16.gmra.mrb[0].mxu0 %v655
      %v1425 = vpop.f32.mrb[0].mxu0
      %v1426 = vadd.f32 %v1265, %v1425
      %v1427 = vpop.f32.mrb[0].mxu0
      %v1428 = vpop.f32.mrb[0].mxu0
      %v1429 = vadd.f32 %v1268, %v1428
      %v1430 = vpop.f32.mrb[0].mxu0
      %1431 = vmatprep.mubr.bf16.mxu0 0
      %1432 = vmatmul.mubr.bf16.gmra.mrb[0].mxu0 %v660
      %v1433 = vpop.f32.mrb[0].mxu0
      %v1434 = vadd.f32 %v1273, %v1433
      %v1435 = vpop.f32.mrb[0].mxu0
      %v1436 = vpop.f32.mrb[0].mxu0
      %v1437 = vadd.f32 %v1276, %v1436
      %v1438 = vpop.f32.mrb[0].mxu0
      %1439 = vmatprep.mubr.bf16.mxu0 0
      %1440 = vmatmul.mubr.bf16.gmra.mrb[0].mxu0 %v665
      %v1441 = vpop.f32.mrb[0].mxu0
      %v1442 = vadd.f32 %v1281, %v1441
      %v1443 = vpop.f32.mrb[0].mxu0
      %v1444 = vpop.f32.mrb[0].mxu0
      %v1445 = vadd.f32 %v1284, %v1444
      %v1446 = vpop.f32.mrb[0].mxu0
      %1447 = vmatprep.mubr.bf16.mxu0 0
      %1448 = vmatmul.mubr.bf16.gmra.mrb[0].mxu0 %v670
      %v1449 = vpop.f32.mrb[0].mxu0
      %v1450 = vadd.f32 %v1289, %v1449
      %v1451 = vpop.f32.mrb[0].mxu0
      %v1452 = vpop.f32.mrb[0].mxu0
      %v1453 = vadd.f32 %v1292, %v1452
      %v1454 = vpop.f32.mrb[0].mxu0
      %1455 = vmatprep.mubr.bf16.mxu0 0
      %1456 = vmatmul.mubr.bf16.gmra.mrb[0].mxu0 %v675
      %v1457 = vpop.f32.mrb[0].mxu0
      %v1458 = vadd.f32 %v1297, %v1457
      %v1459 = vpop.f32.mrb[0].mxu0
      %v1460 = vpop.f32.mrb[0].mxu0
      %v1461 = vadd.f32 %v1300, %v1460
      %v1462 = vpop.f32.mrb[0].mxu0
      %1463 = vmatprep.mubr.bf16.mxu0 0
      %1464 = vmatmul.mubr.bf16.gmra.mrb[0].mxu0 %v680
      %v1465 = vpop.f32.mrb[0].mxu0
      %v1466 = vadd.f32 %v1305, %v1465
      %v1467 = vpop.f32.mrb[0].mxu0
      %v1468 = vpop.f32.mrb[0].mxu0
      %v1469 = vadd.f32 %v1308, %v1468
      %v1470 = vpop.f32.mrb[0].mxu0
      %1471 = vmatprep.mubr.bf16.mxu0 0
      %1472 = vmatmul.mubr.bf16.gmra.mrb[0].mxu0 %v685
      %v1473 = vpop.f32.mrb[0].mxu0
      %v1474 = vadd.f32 %v1313, %v1473
      %v1475 = vpop.f32.mrb[0].mxu0
      %v1476 = vpop.f32.mrb[0].mxu0
      %v1477 = vadd.f32 %v1316, %v1476
      %v1478 = vpop.f32.mrb[0].mxu0
      %1479 = vmatprep.mubr.bf16.mxu0 0
      %1480 = vmatmul.mubr.bf16.gmra.mrb[0].mxu0 %v690
      %v1481 = vpop.f32.mrb[0].mxu0
      %v1482 = vadd.f32 %v1321, %v1481
      %v1483 = vpop.f32.mrb[0].mxu0
      %v1484 = vpop.f32.mrb[0].mxu0
      %v1485 = vadd.f32 %v1324, %v1484
      %v1486 = vpop.f32.mrb[0].mxu0
      %1487 = vmatprep.mubr.bf16.mxu0 0
      %1488 = vmatmul.mubr.bf16.gmra.mrb[0].mxu0 %v695
      %v1489 = vpop.f32.mrb[0].mxu0
      %v1490 = vadd.f32 %v1329, %v1489
      %v1491 = vpop.f32.mrb[0].mxu0
      %v1492 = vpop.f32.mrb[0].mxu0
      %v1493 = vadd.f32 %v1332, %v1492
      %v1494 = vpop.f32.mrb[0].mxu0
      %1495 = vmatprep.mubr.bf16.mxu0 0
      %1496 = vmatmul.mubr.bf16.gmra.mrb[0].mxu0 %v700
      %v1497 = vpop.f32.mrb[0].mxu0
      %v1498 = vadd.f32 %v1337, %v1497
      %v1499 = vpop.f32.mrb[0].mxu0
      %v1500 = vpop.f32.mrb[0].mxu0
      %v1501 = vadd.f32 %v1340, %v1500
      %v1502 = vpop.f32.mrb[0].mxu0
      %1503 = vdwg.mxu0
      %v1504 = vpack.c.bf16 %v1381, %v1378
      %v1505 = vpack.c.bf16 %v1389, %v1386
      %v1506 = vpack.c.bf16 %v1397, %v1394
      %v1507 = vpack.c.bf16 %v1405, %v1402
      %v1508 = vpack.c.bf16 %v1413, %v1410
      %v1509 = vpack.c.bf16 %v1421, %v1418
      %v1510 = vpack.c.bf16 %v1429, %v1426
      %v1511 = vpack.c.bf16 %v1437, %v1434
      %v1512 = vpack.c.bf16 %v1445, %v1442
      %v1513 = vpack.c.bf16 %v1453, %v1450
      %v1514 = vpack.c.bf16 %v1461, %v1458
      %v1515 = vpack.c.bf16 %v1469, %v1466
      %v1516 = vpack.c.bf16 %v1477, %v1474
      %v1517 = vpack.c.bf16 %v1485, %v1482
      %v1518 = vpack.c.bf16 %v1493, %v1490
      %v1519 = vpack.c.bf16 %v1501, %v1498
      %v1536 = vunpack.c.l.b16 %v1504
      %v1537 = vunpack.c.h.b16 %v1504
      %v1538 = vunpack.c.l.b16 %v1505
      %v1539 = vunpack.c.h.b16 %v1505
      %v1540 = vunpack.c.l.b16 %v1506
      %v1541 = vunpack.c.h.b16 %v1506
      %v1542 = vunpack.c.l.b16 %v1507
      %v1543 = vunpack.c.h.b16 %v1507
      %v1544 = vunpack.c.l.b16 %v1508
      %v1545 = vunpack.c.h.b16 %v1508
      %v1546 = vunpack.c.l.b16 %v1509
      %v1547 = vunpack.c.h.b16 %v1509
      %v1548 = vunpack.c.l.b16 %v1510
      %v1549 = vunpack.c.h.b16 %v1510
      %v1550 = vunpack.c.l.b16 %v1511
      %v1551 = vunpack.c.h.b16 %v1511
      %v1552 = vunpack.c.l.b16 %v1512
      %v1553 = vunpack.c.h.b16 %v1512
      %v1554 = vunpack.c.l.b16 %v1513
      %v1555 = vunpack.c.h.b16 %v1513
      %v1556 = vunpack.c.l.b16 %v1514
      %v1557 = vunpack.c.h.b16 %v1514
      %v1558 = vunpack.c.l.b16 %v1515
      %v1559 = vunpack.c.h.b16 %v1515
      %v1560 = vunpack.c.l.b16 %v1516
      %v1561 = vunpack.c.h.b16 %v1516
      %v1562 = vunpack.c.l.b16 %v1517
      %v1563 = vunpack.c.h.b16 %v1517
      %v1564 = vunpack.c.l.b16 %v1518
      %v1565 = vunpack.c.h.b16 %v1518
      %v1566 = vunpack.c.l.b16 %v1519
      %v1567 = vunpack.c.h.b16 %v1519
      %v1568 = vpack.c.b16 %v1536, %v1536
      %v1569 = vpack.c.b16 %v1537, %v1537
      %v1570 = vpack.c.b16 %v1538, %v1538
      %v1571 = vpack.c.b16 %v1539, %v1539
      %v1572 = vpack.c.b16 %v1540, %v1540
      %v1573 = vpack.c.b16 %v1541, %v1541
      %v1574 = vpack.c.b16 %v1542, %v1542
      %v1575 = vpack.c.b16 %v1543, %v1543
      %v1576 = vpack.c.b16 %v1544, %v1544
      %v1577 = vpack.c.b16 %v1545, %v1545
      %v1578 = vpack.c.b16 %v1546, %v1546
      %v1579 = vpack.c.b16 %v1547, %v1547
      %v1580 = vpack.c.b16 %v1548, %v1548
      %v1581 = vpack.c.b16 %v1549, %v1549
      %v1582 = vpack.c.b16 %v1550, %v1550
      %v1583 = vpack.c.b16 %v1551, %v1551
      %v1584 = vpack.c.b16 %v1552, %v1552
      %v1585 = vpack.c.b16 %v1553, %v1553
      %v1586 = vpack.c.b16 %v1554, %v1554
      %v1587 = vpack.c.b16 %v1555, %v1555
      %v1588 = vpack.c.b16 %v1556, %v1556
      %v1589 = vpack.c.b16 %v1557, %v1557
      %v1590 = vpack.c.b16 %v1558, %v1558
      %v1591 = vpack.c.b16 %v1559, %v1559
      %v1592 = vpack.c.b16 %v1560, %v1560
      %v1593 = vpack.c.b16 %v1561, %v1561
      %v1594 = vpack.c.b16 %v1562, %v1562
      %v1595 = vpack.c.b16 %v1563, %v1563
      %v1596 = vpack.c.b16 %v1564, %v1564
      %v1597 = vpack.c.b16 %v1565, %v1565
      %v1598 = vpack.c.b16 %v1566, %v1566
      %v1599 = vpack.c.b16 %v1567, %v1567
      %1632 = vst [vmem:[%s182] sm:$0xf] %v1568
      %1633 = vst [vmem:[%s182 + $0x4] sm:$0xf] %v1569
      %1634 = vst [vmem:[%s182 + $0x8] sm:$0xf] %v1570
      %1635 = vst [vmem:[%s182 + $0xc] sm:$0xf] %v1571
      %1636 = vst [vmem:[%s182 + $0x10] sm:$0xf] %v1572
      %1637 = vst [vmem:[%s182 + $0x14] sm:$0xf] %v1573
      %1638 = vst [vmem:[%s182 + $0x18] sm:$0xf] %v1574
      %1639 = vst [vmem:[%s182 + $0x1c] sm:$0xf] %v1575
      %1640 = vst [vmem:[%s182 + $0x20] sm:$0xf] %v1576
      %1641 = vst [vmem:[%s182 + $0x24] sm:$0xf] %v1577
      %1642 = vst [vmem:[%s182 + $0x28] sm:$0xf] %v1578
      %1643 = vst [vmem:[%s182 + $0x2c] sm:$0xf] %v1579
      %1644 = vst [vmem:[%s182 + $0x30] sm:$0xf] %v1580
      %1645 = vst [vmem:[%s182 + $0x34] sm:$0xf] %v1581
      %1646 = vst [vmem:[%s182 + $0x38] sm:$0xf] %v1582
      %1647 = vst [vmem:[%s182 + $0x3c] sm:$0xf] %v1583
      %1648 = vst [vmem:[%s182 + $0x40] sm:$0xf] %v1584
      %1649 = vst [vmem:[%s182 + $0x44] sm:$0xf] %v1585
      %1650 = vst [vmem:[%s182 + $0x48] sm:$0xf] %v1586
      %1651 = vst [vmem:[%s182 + $0x4c] sm:$0xf] %v1587
      %1652 = vst [vmem:[%s182 + $0x50] sm:$0xf] %v1588
      %1653 = vst [vmem:[%s182 + $0x54] sm:$0xf] %v1589
      %1654 = vst [vmem:[%s182 + $0x58] sm:$0xf] %v1590
      %1655 = vst [vmem:[%s182 + $0x5c] sm:$0xf] %v1591
      %1656 = vst [vmem:[%s182 + $0x60] sm:$0xf] %v1592
      %1657 = vst [vmem:[%s182 + $0x64] sm:$0xf] %v1593
      %1658 = vst [vmem:[%s182 + $0x68] sm:$0xf] %v1594
      %1659 = vst [vmem:[%s182 + $0x6c] sm:$0xf] %v1595
      %1660 = vst [vmem:[%s182 + $0x70] sm:$0xf] %v1596
      %1661 = vst [vmem:[%s182 + $0x74] sm:$0xf] %v1597
      %1662 = vst [vmem:[%s182 + $0x78] sm:$0xf] %v1598
      %1663 = vst [vmem:[%s182 + $0x7c] sm:$0xf] %v1599
      %v1664 = vadd.f32 %v1378, %v1381
      %v1665 = vadd.f32 %v1664, %v1386
      %v1666 = vadd.f32 %v1665, %v1389
      %v1667 = vadd.f32 %v1666, %v1394
      %v1668 = vadd.f32 %v1667, %v1397
      %v1669 = vadd.f32 %v1668, %v1402
      %v1670 = vadd.f32 %v1669, %v1405
      %v1671 = vadd.f32 %v1670, %v1410
      %v1672 = vadd.f32 %v1671, %v1413
      %v1673 = vadd.f32 %v1672, %v1418
      %v1674 = vadd.f32 %v1673, %v1421
      %v1675 = vadd.f32 %v1674, %v1426
      %v1676 = vadd.f32 %v1675, %v1429
      %v1677 = vadd.f32 %v1676, %v1434
      %v1678 = vadd.f32 %v1677, %v1437
      %v1679 = vadd.f32 %v1678, %v1442
      %v1680 = vadd.f32 %v1679, %v1445
      %v1681 = vadd.f32 %v1680, %v1450
      %v1682 = vadd.f32 %v1681, %v1453
      %v1683 = vadd.f32 %v1682, %v1458
      %v1684 = vadd.f32 %v1683, %v1461
      %v1685 = vadd.f32 %v1684, %v1466
      %v1686 = vadd.f32 %v1685, %v1469
      %v1687 = vadd.f32 %v1686, %v1474
      %v1688 = vadd.f32 %v1687, %v1477
      %v1689 = vadd.f32 %v1688, %v1482
      %v1690 = vadd.f32 %v1689, %v1485
      %v1691 = vadd.f32 %v1690, %v1490
      %v1692 = vadd.f32 %v1691, %v1493
      %v1693 = vadd.f32 %v1692, %v1498
      %v1694 = vadd.f32 %v1693, %v1501
      %v1695 = vrot.slane %v1694, 4
      %v1696 = vadd.f32 %v1694, %v1695
      %v1697 = vrot.slane %v1696, 2
      %v1698 = vadd.f32 %v1696, %v1697
      %v1699 = vrot.slane %v1698, 1
      %v1700 = vadd.f32 %v1698, %v1699
      %1701 = vst [vmem:[%s187] sm:$0x1] %v1700
      %v1702 = vmul.f32 %v1378, %v1378
      %v1703 = vmul.f32 %v1381, %v1381
      %v1704 = vmul.f32 %v1386, %v1386
      %v1705 = vmul.f32 %v1389, %v1389
      %v1706 = vmul.f32 %v1394, %v1394
      %v1707 = vmul.f32 %v1397, %v1397
      %v1708 = vmul.f32 %v1402, %v1402
      %v1709 = vmul.f32 %v1405, %v1405
      %v1710 = vmul.f32 %v1410, %v1410
      %v1711 = vmul.f32 %v1413, %v1413
      %v1712 = vmul.f32 %v1418, %v1418
      %v1713 = vmul.f32 %v1421, %v1421
      %v1714 = vmul.f32 %v1426, %v1426
      %v1715 = vmul.f32 %v1429, %v1429
      %v1716 = vmul.f32 %v1434, %v1434
      %v1717 = vmul.f32 %v1437, %v1437
      %v1718 = vmul.f32 %v1442, %v1442
      %v1719 = vmul.f32 %v1445, %v1445
      %v1720 = vmul.f32 %v1450, %v1450
      %v1721 = vmul.f32 %v1453, %v1453
      %v1722 = vmul.f32 %v1458, %v1458
      %v1723 = vmul.f32 %v1461, %v1461
      %v1724 = vmul.f32 %v1466, %v1466
      %v1725 = vmul.f32 %v1469, %v1469
      %v1726 = vmul.f32 %v1474, %v1474
      %v1727 = vmul.f32 %v1477, %v1477
      %v1728 = vmul.f32 %v1482, %v1482
      %v1729 = vmul.f32 %v1485, %v1485
      %v1730 = vmul.f32 %v1490, %v1490
      %v1731 = vmul.f32 %v1493, %v1493
      %v1732 = vmul.f32 %v1498, %v1498
      %v1733 = vmul.f32 %v1501, %v1501
      %v1734 = vadd.f32 %v1702, %v1703
      %v1735 = vadd.f32 %v1734, %v1704
      %v1736 = vadd.f32 %v1735, %v1705
      %v1737 = vadd.f32 %v1736, %v1706
      %v1738 = vadd.f32 %v1737, %v1707
      %v1739 = vadd.f32 %v1738, %v1708
      %v1740 = vadd.f32 %v1739, %v1709
      %v1741 = vadd.f32 %v1740, %v1710
      %v1742 = vadd.f32 %v1741, %v1711
      %v1743 = vadd.f32 %v1742, %v1712
      %v1744 = vadd.f32 %v1743, %v1713
      %v1745 = vadd.f32 %v1744, %v1714
      %v1746 = vadd.f32 %v1745, %v1715
      %v1747 = vadd.f32 %v1746, %v1716
      %v1748 = vadd.f32 %v1747, %v1717
      %v1749 = vadd.f32 %v1748, %v1718
      %v1750 = vadd.f32 %v1749, %v1719
      %v1751 = vadd.f32 %v1750, %v1720
      %v1752 = vadd.f32 %v1751, %v1721
      %v1753 = vadd.f32 %v1752, %v1722
      %v1754 = vadd.f32 %v1753, %v1723
      %v1755 = vadd.f32 %v1754, %v1724
      %v1756 = vadd.f32 %v1755, %v1725
      %v1757 = vadd.f32 %v1756, %v1726
      %v1758 = vadd.f32 %v1757, %v1727
      %v1759 = vadd.f32 %v1758, %v1728
      %v1760 = vadd.f32 %v1759, %v1729
      %v1761 = vadd.f32 %v1760, %v1730
      %v1762 = vadd.f32 %v1761, %v1731
      %v1763 = vadd.f32 %v1762, %v1732
      %v1764 = vadd.f32 %v1763, %v1733
      %v1765 = vrot.slane %v1764, 4
      %v1766 = vadd.f32 %v1764, %v1765
      %v1767 = vrot.slane %v1766, 2
      %v1768 = vadd.f32 %v1766, %v1767
      %v1769 = vrot.slane %v1768, 1
      %v1770 = vadd.f32 %v1768, %v1769
      %1771 = vst [vmem:[%s187 + $0x1] sm:$0x1] %v1770
      %s1772 = smul.u32 32, %s15
      %p1773 = scmp.lt.s32.totalorder %s1772, 63
      %s1774 = scalar_select %p1773, %s1772, 63
      %s1775 = smul.addr %s1774, 4
      %s1776 = scalar_lea.vmem %s2, %s1775
      %p1777 = scmp.lt.s32.totalorder %s15, 1
      %s1778 = scalar_select %p1777, %s15, 1
      %s1779 = smul.addr %s1778, 2
      %s1780 = scalar_lea.vmem %s3, %s1779
      // Predicated region
      $region29: #{inception_b_forward.13} parent=27 // pred_check
        %p1781 = pneg %p80
      $region30: #{inception_b_forward.13} parent=27 // pred_check_branch
        %1783 = sbr.rel (%p1781) target = $region32
      $region31: #{inception_b_forward.13} parent=27 // pred_region
        %s1784 = smul.u32 32, %s15
      $region32: #{inception_b_forward.13} parent=27 // pred_fallthru
        _
      // Predicated region
      $region33: #{inception_b_forward.13} parent=27 // pred_check
        %p1785 = pneg %p106
      $region34: #{inception_b_forward.13} parent=27 // pred_check_branch
        %1787 = sbr.rel (%p1785) target = $region36
      $region35: #{inception_b_forward.13} parent=27 // pred_region
        _
      $region36: #{inception_b_forward.13} parent=27 // pred_fallthru
        _
    $region28: #{inception_b_forward.13} parent=5 // pred_fallthru
      _
    %p1788 = scmp.le.s32.totalorder 2, %s10
    // Predicated region
    $region37: #{inception_b_forward.13} parent=5 // pred_check
      %p1789 = pneg %p1788
    $region38: #{inception_b_forward.13} parent=5 // pred_check_branch
      %1791 = sbr.rel (%p1789) target = $region40
    $region39: #{inception_b_forward.13} parent=5 // pred_region
      %s1792 = ssub.s32 %s10, 2
      // Predicated region
      $region41: #{inception_b_forward.13} parent=39 // pred_check
        %p1793 = pneg %p86
      $region42: #{inception_b_forward.13} parent=39 // pred_check_branch
        %1795 = sbr.rel (%p1793) target = $region44
      $region43: #{inception_b_forward.13} parent=39 // pred_region
        %s1796 = smul.u32 32, %s16
        %p1797 = scmp.lt.s32.totalorder %s1796, 63
        %s1798 = scalar_select %p1797, %s1796, 63
        %s1799 = smul.addr %s1798, 4
        %s1800 = scalar_lea.vmem %s2, %s1799
      $region44: #{inception_b_forward.13} parent=39 // pred_fallthru
        _
      // Predicated region
      $region45: #{inception_b_forward.13} parent=39 // pred_check
        %p1801 = pneg %p112
      $region46: #{inception_b_forward.13} parent=39 // pred_check_branch
        %1803 = sbr.rel (%p1801) target = $region48
      $region47: #{inception_b_forward.13} parent=39 // pred_region
        %p1804 = scmp.lt.s32.totalorder %s16, 1
        %s1805 = scalar_select %p1804, %s16, 1
        %s1806 = smul.addr %s1805, 2
        %s1807 = scalar_lea.vmem %s3, %s1806
      $region48: #{inception_b_forward.13} parent=39 // pred_fallthru
        _
    $region40: #{inception_b_forward.13} parent=5 // pred_fallthru
      _
  $region6: #{inception_b_forward.13} parent=0 // loop_footer
    %s14 = sadd.s32 1, %s10
  $region7: #{inception_b_forward.13} parent=0 // loop_footer_branch
    %9 = sbr.rel target = $region3
  $region8: #{inception_b_forward.13} parent=0 // loop_exit
    _

// kernel: inception_b_forward.15
$region0: #{inception_b_forward.15}
  #allocation0 [shape = 'u32[]', space=smem, size = 0x4, offset = 0x4, fixed_abs, tag = 'smem constant byte address 0x4 - core index']
  #allocation1 [shape = 'u32[144,128]{1,0:T(1,128)}', space=vmem, size = 0x12000, scoped, tag = 'internal scratch']
  %s0 = inlined_call_operand.vmem [shape: bf16[112,896], index: 0, kind: input, shape index: {}]
  %s1 = inlined_call_operand.vmem [shape: bf16[896,128], index: 1, kind: input, shape index: {}]
  %s2 = inlined_call_operand.vmem [shape: bf16[112,128], index: 2, kind: output, shape index: {0}]
  %s3 = inlined_call_operand.vmem [shape: f32[2,2,128], index: 3, kind: output, shape index: {1}]
  %4 = xla_tuple %s2, %s3
  %s5 = sld [smem:[#allocation0]]
  $region49: #{inception_b_forward.15} parent=0
    _
  %s7 = ssub.s32 1, %s5
  %s8 = scalar_select 0, %s7, %s5
  loop: start=0, step=1, limit=4
  $region2: #{inception_b_forward.15} parent=0 // loop_pre_header
    _
  $region3: #{inception_b_forward.15} parent=0 // loop_header
    %s10 = sphi 0, %s14
    %p11 = scmp.ge.s32.totalorder %s10, 4
    %s20 = sphi 0, %s22
    %s23 = sphi 0, %s20
    %s24 = sphi 0, %s23
    %s40 = sphi 0, %s24
    %s44 = sphi 0, %s44
    %s46 = sphi 0, %s44
    %s47 = sphi 0, %s46
    %s61 = sphi 0, %s47
    %s67 = sphi 0, %s69
    %s70 = sphi 0, %s67
    %s71 = sphi 0, %s70
    %s87 = sphi 0, %s71
    %s93 = sphi 0, %s95
    %s96 = sphi 0, %s93
    %s97 = sphi 0, %s96
    %s113 = sphi 0, %s97
  $region4: #{inception_b_forward.15} parent=0 // loop_header_branch
    %13 = sbr.rel (%p11) target = $region8
  $region5: #{inception_b_forward.15} parent=0 // loop_body
    %s15 = ssub.s32 %s10, 1
    %s16 = ssub.s32 %s10, 2
    %s17 = sadd.s32 %s10, 1
    %s18 = ssub.s32 %s10, %s17
    %p19 = scmp.eq.s32.totalorder %s18, 0
    %s21 = sadd.s32 %s20, 1
    %s22 = scalar_select %p19, %s20, %s21
    %p25 = pneg %p19
    %p26 = scmp.eq.s32.totalorder %s10, 1
    %p27 = por %p25, %p26
    %p28 = scmp.ne.s32.totalorder %s20, %s23
    %p29 = scmp.eq.s32.totalorder %s10, 0
    %p30 = por %p28, %p29
    %p31 = scmp.ne.s32.totalorder %s20, %s23
    %p32 = scmp.eq.s32.totalorder %s15, 1
    %p33 = por %p31, %p32
    %p34 = scmp.ne.s32.totalorder %s23, %s24
    %p35 = scmp.eq.s32.totalorder %s15, 0
    %p36 = por %p34, %p35
    %p37 = scmp.ne.s32.totalorder %s23, %s24
    %p38 = scmp.eq.s32.totalorder %s16, 1
    %p39 = por %p37, %p38
    %p41 = scmp.ne.s32.totalorder %s24, %s40
    %p42 = scmp.eq.s32.totalorder %s16, 0
    %p43 = por %p41, %p42
    %s45 = sadd.s32 %s44, 1
    %p48 = scmp.eq.s32.totalorder %s10, 1
    %p49 = scmp.ne.s32.totalorder %s44, %s46
    %p50 = scmp.eq.s32.totalorder %s10, 0
    %p51 = por %p49, %p50
    %p52 = scmp.ne.s32.totalorder %s44, %s46
    %p53 = scmp.eq.s32.totalorder %s15, 1
    %p54 = por %p52, %p53
    %p55 = scmp.ne.s32.totalorder %s46, %s47
    %p56 = scmp.eq.s32.totalorder %s15, 0
    %p57 = por %p55, %p56
    %p58 = scmp.ne.s32.totalorder %s46, %s47
    %p59 = scmp.eq.s32.totalorder %s16, 1
    %p60 = por %p58, %p59
    %p62 = scmp.ne.s32.totalorder %s47, %s61
    %p63 = scmp.eq.s32.totalorder %s16, 0
    %p64 = por %p62, %p63
    %s65 = ssub.s32 %s10, %s17
    %p66 = scmp.eq.s32.totalorder %s65, 0
    %s68 = sadd.s32 %s67, 1
    %s69 = scalar_select %p66, %s67, %s68
    %p72 = pneg %p66
    %p73 = scmp.eq.s32.totalorder %s10, 1
    %p74 = por %p72, %p73
    %p75 = scmp.ne.s32.totalorder %s67, %s70
    %p76 = scmp.eq.s32.totalorder %s10, 0
    %p77 = por %p75, %p76
    %p78 = scmp.ne.s32.totalorder %s67, %s70
    %p79 = scmp.eq.s32.totalorder %s15, 1
    %p80 = por %p78, %p79
    %p81 = scmp.ne.s32.totalorder %s70, %s71
    %p82 = scmp.eq.s32.totalorder %s15, 0
    %p83 = por %p81, %p82
    %p84 = scmp.ne.s32.totalorder %s70, %s71
    %p85 = scmp.eq.s32.totalorder %s16, 1
    %p86 = por %p84, %p85
    %p88 = scmp.ne.s32.totalorder %s71, %s87
    %p89 = scmp.eq.s32.totalorder %s16, 0
    %p90 = por %p88, %p89
    %s91 = ssub.s32 %s10, %s17
    %p92 = scmp.eq.s32.totalorder %s91, 0
    %s94 = sadd.s32 %s93, 1
    %s95 = scalar_select %p92, %s93, %s94
    %p98 = pneg %p92
    %p99 = scmp.eq.s32.totalorder %s10, 1
    %p100 = por %p98, %p99
    %p101 = scmp.ne.s32.totalorder %s93, %s96
    %p102 = scmp.eq.s32.totalorder %s10, 0
    %p103 = por %p101, %p102
    %p104 = scmp.ne.s32.totalorder %s93, %s96
    %p105 = scmp.eq.s32.totalorder %s15, 1
    %p106 = por %p104, %p105
    %p107 = scmp.ne.s32.totalorder %s96, %s97
    %p108 = scmp.eq.s32.totalorder %s15, 0
    %p109 = por %p107, %p108
    %p110 = scmp.ne.s32.totalorder %s96, %s97
    %p111 = scmp.eq.s32.totalorder %s16, 1
    %p112 = por %p110, %p111
    %p114 = scmp.ne.s32.totalorder %s97, %s113
    %p115 = scmp.eq.s32.totalorder %s16, 0
    %p116 = por %p114, %p115
    %p117 = scmp.le.s32.totalorder 1, %s10
    %p118 = scmp.lt.s32.totalorder %s10, 3
    %p119 = pnand %p117, %p118
    %p120 = pneg %p119
    // Predicated region
    $region9: #{inception_b_forward.15} parent=5 // pred_check
      _
    $region10: #{inception_b_forward.15} parent=5 // pred_check_branch
      %122 = sbr.rel (%p119) target = $region12
    $region11: #{inception_b_forward.15} parent=5 // pred_region
      %s123 = ssub.s32 %s10, 1
      // Predicated region
      $region13: #{inception_b_forward.15} parent=11 // pred_check
        %p124 = pneg %p57
      $region14: #{inception_b_forward.15} parent=11 // pred_check_branch
        %126 = sbr.rel (%p124) target = $region16
      $region15: #{inception_b_forward.15} parent=11 // pred_region
        _
      $region16: #{inception_b_forward.15} parent=11 // pred_fallthru
        _
    $region12: #{inception_b_forward.15} parent=5 // pred_fallthru
      _
    %p127 = scmp.lt.s32.totalorder %s10, 2
    // Predicated region
    $region17: #{inception_b_forward.15} parent=5 // pred_check
      %p128 = pneg %p127
    $region18: #{inception_b_forward.15} parent=5 // pred_check_branch
      %130 = sbr.rel (%p128) target = $region20
    $region19: #{inception_b_forward.15} parent=5 // pred_region
      // Predicated region
      $region21: #{inception_b_forward.15} parent=19 // pred_check
        %p131 = pneg %p30
      $region22: #{inception_b_forward.15} parent=19 // pred_check_branch
        %133 = sbr.rel (%p131) target = $region24
      $region23: #{inception_b_forward.15} parent=19 // pred_region
        %s134 = smul.u32 7, %s10
        %p135 = scmp.lt.s32.totalorder %s134, 13
        %s136 = scalar_select %p135, %s134, 13
        %s137 = smul.addr %s136, 7
        %s138 = smul.addr %s137, 4
        %s139 = scalar_lea.vmem %s0, %s138
        %s140 = smul.u32 7, %s10
      $region24: #{inception_b_forward.15} parent=19 // pred_fallthru
        _
    $region20: #{inception_b_forward.15} parent=5 // pred_fallthru
      _
    %p141 = scmp.le.s32.totalorder 1, %s10
    %p142 = scmp.lt.s32.totalorder %s10, 3
    %p143 = pnand %p141, %p142
    %p144 = pneg %p143
    // Predicated region
    $region25: #{inception_b_forward.15} parent=5 // pred_check
      _
    $region26: #{inception_b_forward.15} parent=5 // pred_check_branch
      %146 = sbr.rel (%p143) target = $region28
    $region27: #{inception_b_forward.15} parent=5 // pred_region
      %s147 = ssub.s32 %s10, 1
      %s148 = smul.u32 7, %s15
      %p149 = scmp.lt.s32.totalorder %s148, 13
      %s150 = scalar_select %p149, %s148, 13
      %s151 = smul.addr %s150, 7
      %s152 = smul.addr %s151, 4
      %s153 = scalar_lea.vmem %s0, %s152
      %p154 = pneg %p36
      %p155 = pneg %p33
      %p156 = pneg %p57
      %p157 = pneg %p54
      %p158 = pneg %p83
      %p159 = pneg %p80
      %s160 = smul.u32 7, %s15
      %p161 = scmp.lt.s32.totalorder %s160, 13
      %s162 = scalar_select %p161, %s160, 13
      %s163 = smul.addr %s162, 4
      %s164 = scalar_lea.vmem %s2, %s163
      %p165 = pneg %p109
      %p166 = pneg %p106
      %p167 = scmp.lt.s32.totalorder %s15, 1
      %s168 = scalar_select %p167, %s15, 1
      %s169 = smul.addr %s168, 2
      %s170 = scalar_lea.vmem %s3, %s169
      %s171 = smul.u32 7, %s15
      %p172 = scmp.lt.s32.totalorder %s171, 13
      %s173 = scalar_select %p172, %s171, 13
      %s174 = smul.addr %s173, 7
      %s175 = smul.addr %s174, 4
      %s176 = scalar_lea.vmem %s0, %s175
      %s177 = smul.u32 7, %s15
      %s178 = smul.u32 7, %s15
      %p179 = scmp.lt.s32.totalorder %s178, 13
      %s180 = scalar_select %p179, %s178, 13
      %s181 = smul.addr %s180, 4
      %s182 = scalar_lea.vmem %s2, %s181
      %s183 = smul.u32 7, %s15
      %p184 = scmp.lt.s32.totalorder %s15, 1
      %s185 = scalar_select %p184, %s15, 1
      %s186 = smul.addr %s185, 2
      %s187 = scalar_lea.vmem %s3, %s186
      %v189 = vld [vmem:[%s176] sm:$0xff]
      %v190 = vld [vmem:[%s176 + $0x8] sm:$0xff]
      %v191 = vld [vmem:[%s176 + $0x10] sm:$0xff]
      %v192 = vld [vmem:[%s176 + $0x18] sm:$0xf]
      %v193 = vld [vmem:[%s176 + $0x1c] sm:$0xff]
      %v194 = vld [vmem:[%s176 + $0x24] sm:$0xff]
      %v195 = vld [vmem:[%s176 + $0x2c] sm:$0xff]
      %v196 = vld [vmem:[%s176 + $0x34] sm:$0xf]
      %v197 = vld [vmem:[%s176 + $0x38] sm:$0xff]
      %v198 = vld [vmem:[%s176 + $0x40] sm:$0xff]
      %v199 = vld [vmem:[%s176 + $0x48] sm:$0xff]
      %v200 = vld [vmem:[%s176 + $0x50] sm:$0xf]
      %v201 = vld [vmem:[%s176 + $0x54] sm:$0xff]
      %v202 = vld [vmem:[%s176 + $0x5c] sm:$0xff]
      %v203 = vld [vmem:[%s176 + $0x64] sm:$0xff]
      %v204 = vld [vmem:[%s176 + $0x6c] sm:$0xf]
      %v205 = vld [vmem:[%s176 + $0x70] sm:$0xff]
      %v206 = vld [vmem:[%s176 + $0x78] sm:$0xff]
      %v207 = vld [vmem:[%s176 + $0x80] sm:$0xff]
      %v208 = vld [vmem:[%s176 + $0x88] sm:$0xf]
      %v209 = vld [vmem:[%s176 + $0x8c] sm:$0xff]
      %v210 = vld [vmem:[%s176 + $0x94] sm:$0xff]
      %v211 = vld [vmem:[%s176 + $0x9c] sm:$0xff]
      %v212 = vld [vmem:[%s176 + $0xa4] sm:$0xf]
      %v213 = vld [vmem:[%s176 + $0xa8] sm:$0xff]
      %v214 = vld [vmem:[%s176 + $0xb0] sm:$0xff]
      %v215 = vld [vmem:[%s176 + $0xb8] sm:$0xff]
      %v216 = vld [vmem:[%s176 + $0xc0] sm:$0xf]
      %v217 = vld [vmem:[%s1] sm:$0xf]
      %v218 = vld [vmem:[%s1 + $0x4] sm:$0xf]
      %v219 = vld [vmem:[%s1 + $0x8] sm:$0xf]
      %v220 = vld [vmem:[%s1 + $0xc] sm:$0xf]
      %v221 = vld [vmem:[%s1 + $0x10] sm:$0xf]
      %v222 = vld [vmem:[%s1 + $0x14] sm:$0xf]
      %v223 = vld [vmem:[%s1 + $0x18] sm:$0xf]
      %v224 = vld [vmem:[%s1 + $0x1c] sm:$0xf]
      %v225 = vld [vmem:[%s1 + $0x20] sm:$0xf]
      %v226 = vld [vmem:[%s1 + $0x24] sm:$0xf]
      %v227 = vld [vmem:[%s1 + $0x28] sm:$0xf]
      %v228 = vld [vmem:[%s1 + $0x2c] sm:$0xf]
      %v229 = vld [vmem:[%s1 + $0x30] sm:$0xf]
      %v230 = vld [vmem:[%s1 + $0x34] sm:$0xf]
      %v231 = vld [vmem:[%s1 + $0x38] sm:$0xf]
      %v232 = vld [vmem:[%s1 + $0x3c] sm:$0xf]
      %v233 = vld [vmem:[%s1 + $0x40] sm:$0xf]
      %v234 = vld [vmem:[%s1 + $0x44] sm:$0xf]
      %v235 = vld [vmem:[%s1 + $0x48] sm:$0xf]
      %v236 = vld [vmem:[%s1 + $0x4c] sm:$0xf]
      %v237 = vld [vmem:[%s1 + $0x50] sm:$0xf]
      %v238 = vld [vmem:[%s1 + $0x54] sm:$0xf]
      %v239 = vld [vmem:[%s1 + $0x58] sm:$0xf]
      %v240 = vld [vmem:[%s1 + $0x5c] sm:$0xf]
      %v241 = vld [vmem:[%s1 + $0x60] sm:$0xf]
      %v242 = vld [vmem:[%s1 + $0x64] sm:$0xf]
      %v243 = vld [vmem:[%s1 + $0x68] sm:$0xf]
      %v244 = vld [vmem:[%s1 + $0x6c] sm:$0xf]
      %v245 = vld [vmem:[%s1 + $0x70] sm:$0xf]
      %v246 = vld [vmem:[%s1 + $0x74] sm:$0xf]
      %v247 = vld [vmem:[%s1 + $0x78] sm:$0xf]
      %v248 = vld [vmem:[%s1 + $0x7c] sm:$0xf]
      %v249 = vld [vmem:[%s1 + $0x80] sm:$0xf]
      %v250 = vld [vmem:[%s1 + $0x84] sm:$0xf]
      %v251 = vld [vmem:[%s1 + $0x88] sm:$0xf]
      %v252 = vld [vmem:[%s1 + $0x8c] sm:$0xf]
      %v253 = vld [vmem:[%s1 + $0x90] sm:$0xf]
      %v254 = vld [vmem:[%s1 + $0x94] sm:$0xf]
      %v255 = vld [vmem:[%s1 + $0x98] sm:$0xf]
      %v256 = vld [vmem:[%s1 + $0x9c] sm:$0xf]
      %v257 = vld [vmem:[%s1 + $0xa0] sm:$0xf]
      %v258 = vld [vmem:[%s1 + $0xa4] sm:$0xf]
      %v259 = vld [vmem:[%s1 + $0xa8] sm:$0xf]
      %v260 = vld [vmem:[%s1 + $0xac] sm:$0xf]
      %v261 = vld [vmem:[%s1 + $0xb0] sm:$0xf]
      %v262 = vld [vmem:[%s1 + $0xb4] sm:$0xf]
      %v263 = vld [vmem:[%s1 + $0xb8] sm:$0xf]
      %v264 = vld [vmem:[%s1 + $0xbc] sm:$0xf]
      %v265 = vld [vmem:[%s1 + $0xc0] sm:$0xf]
      %v266 = vld [vmem:[%s1 + $0xc4] sm:$0xf]
      %v267 = vld [vmem:[%s1 + $0xc8] sm:$0xf]
      %v268 = vld [vmem:[%s1 + $0xcc] sm:$0xf]
      %v269 = vld [vmem:[%s1 + $0xd0] sm:$0xf]
      %v270 = vld [vmem:[%s1 + $0xd4] sm:$0xf]
      %v271 = vld [vmem:[%s1 + $0xd8] sm:$0xf]
      %v272 = vld [vmem:[%s1 + $0xdc] sm:$0xf]
      %v273 = vld [vmem:[%s1 + $0xe0] sm:$0xf]
      %v274 = vld [vmem:[%s1 + $0xe4] sm:$0xf]
      %v275 = vld [vmem:[%s1 + $0xe8] sm:$0xf]
      %v276 = vld [vmem:[%s1 + $0xec] sm:$0xf]
      %v277 = vld [vmem:[%s1 + $0xf0] sm:$0xf]
      %v278 = vld [vmem:[%s1 + $0xf4] sm:$0xf]
      %v279 = vld [vmem:[%s1 + $0xf8] sm:$0xf]
      %v280 = vld [vmem:[%s1 + $0xfc] sm:$0xf]
      %v281 = vld [vmem:[%s1 + $0x100] sm:$0xf]
      %v282 = vld [vmem:[%s1 + $0x104] sm:$0xf]
      %v283 = vld [vmem:[%s1 + $0x108] sm:$0xf]
      %v284 = vld [vmem:[%s1 + $0x10c] sm:$0xf]
      %v285 = vld [vmem:[%s1 + $0x110] sm:$0xf]
      %v286 = vld [vmem:[%s1 + $0x114] sm:$0xf]
      %v287 = vld [vmem:[%s1 + $0x118] sm:$0xf]
      %v288 = vld [vmem:[%s1 + $0x11c] sm:$0xf]
      %v289 = vld [vmem:[%s1 + $0x120] sm:$0xf]
      %v290 = vld [vmem:[%s1 + $0x124] sm:$0xf]
      %v291 = vld [vmem:[%s1 + $0x128] sm:$0xf]
      %v292 = vld [vmem:[%s1 + $0x12c] sm:$0xf]
      %v293 = vld [vmem:[%s1 + $0x130] sm:$0xf]
      %v294 = vld [vmem:[%s1 + $0x134] sm:$0xf]
      %v295 = vld [vmem:[%s1 + $0x138] sm:$0xf]
      %v296 = vld [vmem:[%s1 + $0x13c] sm:$0xf]
      %v297 = vld [vmem:[%s1 + $0x140] sm:$0xf]
      %v298 = vld [vmem:[%s1 + $0x144] sm:$0xf]
      %v299 = vld [vmem:[%s1 + $0x148] sm:$0xf]
      %v300 = vld [vmem:[%s1 + $0x14c] sm:$0xf]
      %v301 = vld [vmem:[%s1 + $0x150] sm:$0xf]
      %v302 = vld [vmem:[%s1 + $0x154] sm:$0xf]
      %v303 = vld [vmem:[%s1 + $0x158] sm:$0xf]
      %v304 = vld [vmem:[%s1 + $0x15c] sm:$0xf]
      %v305 = vld [vmem:[%s1 + $0x160] sm:$0xf]
      %v306 = vld [vmem:[%s1 + $0x164] sm:$0xf]
      %v307 = vld [vmem:[%s1 + $0x168] sm:$0xf]
      %v308 = vld [vmem:[%s1 + $0x16c] sm:$0xf]
      %v309 = vld [vmem:[%s1 + $0x170] sm:$0xf]
      %v310 = vld [vmem:[%s1 + $0x174] sm:$0xf]
      %v311 = vld [vmem:[%s1 + $0x178] sm:$0xf]
      %v312 = vld [vmem:[%s1 + $0x17c] sm:$0xf]
      %v313 = vld [vmem:[%s1 + $0x180] sm:$0xf]
      %v314 = vld [vmem:[%s1 + $0x184] sm:$0xf]
      %v315 = vld [vmem:[%s1 + $0x188] sm:$0xf]
      %v316 = vld [vmem:[%s1 + $0x18c] sm:$0xf]
      %v317 = vld [vmem:[%s1 + $0x190] sm:$0xf]
      %v318 = vld [vmem:[%s1 + $0x194] sm:$0xf]
      %v319 = vld [vmem:[%s1 + $0x198] sm:$0xf]
      %v320 = vld [vmem:[%s1 + $0x19c] sm:$0xf]
      %v321 = vld [vmem:[%s1 + $0x1a0] sm:$0xf]
      %v322 = vld [vmem:[%s1 + $0x1a4] sm:$0xf]
      %v323 = vld [vmem:[%s1 + $0x1a8] sm:$0xf]
      %v324 = vld [vmem:[%s1 + $0x1ac] sm:$0xf]
      %v325 = vld [vmem:[%s1 + $0x1b0] sm:$0xf]
      %v326 = vld [vmem:[%s1 + $0x1b4] sm:$0xf]
      %v327 = vld [vmem:[%s1 + $0x1b8] sm:$0xf]
      %v328 = vld [vmem:[%s1 + $0x1bc] sm:$0xf]
      %v357 = vunpack.c.l.b16 %v189
      %v358 = vunpack.c.h.b16 %v189
      %v359 = vunpack.c.l.b16 %v190
      %v360 = vunpack.c.h.b16 %v190
      %v361 = vunpack.c.l.b16 %v191
      %v362 = vunpack.c.h.b16 %v191
      %v363 = vunpack.c.l.b16 %v192
      %v364 = vunpack.c.l.b16 %v193
      %v365 = vunpack.c.h.b16 %v193
      %v366 = vunpack.c.l.b16 %v194
      %v367 = vunpack.c.h.b16 %v194
      %v368 = vunpack.c.l.b16 %v195
      %v369 = vunpack.c.h.b16 %v195
      %v370 = vunpack.c.l.b16 %v196
      %v371 = vunpack.c.l.b16 %v197
      %v372 = vunpack.c.h.b16 %v197
      %v373 = vunpack.c.l.b16 %v198
      %v374 = vunpack.c.h.b16 %v198
      %v375 = vunpack.c.l.b16 %v199
      %v376 = vunpack.c.h.b16 %v199
      %v377 = vunpack.c.l.b16 %v200
      %v378 = vunpack.c.l.b16 %v201
      %v379 = vunpack.c.h.b16 %v201
      %v380 = vunpack.c.l.b16 %v202
      %v381 = vunpack.c.h.b16 %v202
      %v382 = vunpack.c.l.b16 %v203
      %v383 = vunpack.c.h.b16 %v203
      %v384 = vunpack.c.l.b16 %v204
      %v385 = vunpack.c.l.b16 %v205
      %v386 = vunpack.c.h.b16 %v205
      %v387 = vunpack.c.l.b16 %v206
      %v388 = vunpack.c.h.b16 %v206
      %v389 = vunpack.c.l.b16 %v207
      %v390 = vunpack.c.h.b16 %v207
      %v391 = vunpack.c.l.b16 %v208
      %v392 = vunpack.c.l.b16 %v209
      %v393 = vunpack.c.h.b16 %v209
      %v394 = vunpack.c.l.b16 %v210
      %v395 = vunpack.c.h.b16 %v210
      %v396 = vunpack.c.l.b16 %v211
      %v397 = vunpack.c.h.b16 %v211
      %v398 = vunpack.c.l.b16 %v212
      %v399 = vunpack.c.l.b16 %v213
      %v400 = vunpack.c.h.b16 %v213
      %v401 = vunpack.c.l.b16 %v214
      %v402 = vunpack.c.h.b16 %v214
      %v403 = vunpack.c.l.b16 %v215
      %v404 = vunpack.c.h.b16 %v215
      %v405 = vunpack.c.l.b16 %v216
      %v406 = vpack.c.b16 %v364, %v357
      %v407 = vpack.c.b16 %v365, %v358
      %v408 = vpack.c.b16 %v366, %v359
      %v409 = vpack.c.b16 %v367, %v360
      %v410 = vpack.c.b16 %v368, %v361
      %v411 = vpack.c.b16 %v369, %v362
      %v412 = vpack.c.b16 %v370, %v363
      %v413 = vpack.c.b16 %v378, %v371
      %v414 = vpack.c.b16 %v379, %v372
      %v415 = vpack.c.b16 %v380, %v373
      %v416 = vpack.c.b16 %v381, %v374
      %v417 = vpack.c.b16 %v382, %v375
      %v418 = vpack.c.b16 %v383, %v376
      %v419 = vpack.c.b16 %v384, %v377
      %v420 = vpack.c.b16 %v392, %v385
      %v421 = vpack.c.b16 %v393, %v386
      %v422 = vpack.c.b16 %v394, %v387
      %v423 = vpack.c.b16 %v395, %v388
      %v424 = vpack.c.b16 %v396, %v389
      %v425 = vpack.c.b16 %v397, %v390
      %v426 = vpack.c.b16 %v398, %v391
      %v427 = vpack.c.b16 %v399, %v399
      %v428 = vpack.c.b16 %v400, %v400
      %v429 = vpack.c.b16 %v401, %v401
      %v430 = vpack.c.b16 %v402, %v402
      %v431 = vpack.c.b16 %v403, %v403
      %v432 = vpack.c.b16 %v404, %v404
      %v433 = vpack.c.b16 %v405, %v405
      %v574 = vunpack.c.l.b16 %v217
      %v575 = vunpack.c.l.b16 %v218
      %v576 = vunpack.c.l.b16 %v219
      %v577 = vunpack.c.l.b16 %v220
      %v578 = vunpack.c.l.b16 %v221
      %v579 = vunpack.c.l.b16 %v222
      %v580 = vunpack.c.l.b16 %v223
      %v581 = vunpack.c.l.b16 %v224
      %v582 = vunpack.c.l.b16 %v225
      %v583 = vunpack.c.l.b16 %v226
      %v584 = vunpack.c.l.b16 %v227
      %v585 = vunpack.c.l.b16 %v228
      %v586 = vunpack.c.l.b16 %v229
      %v587 = vunpack.c.l.b16 %v230
      %v588 = vunpack.c.l.b16 %v231
      %v589 = vunpack.c.l.b16 %v232
      %v590 = vunpack.c.l.b16 %v233
      %v591 = vunpack.c.l.b16 %v234
      %v592 = vunpack.c.l.b16 %v235
      %v593 = vunpack.c.l.b16 %v236
      %v594 = vunpack.c.l.b16 %v237
      %v595 = vunpack.c.l.b16 %v238
      %v596 = vunpack.c.l.b16 %v239
      %v597 = vunpack.c.l.b16 %v240
      %v598 = vunpack.c.l.b16 %v241
      %v599 = vunpack.c.l.b16 %v242
      %v600 = vunpack.c.l.b16 %v243
      %v601 = vunpack.c.l.b16 %v244
      %v602 = vunpack.c.l.b16 %v245
      %v603 = vunpack.c.l.b16 %v246
      %v604 = vunpack.c.l.b16 %v247
      %v605 = vunpack.c.l.b16 %v248
      %v606 = vunpack.c.l.b16 %v249
      %v607 = vunpack.c.l.b16 %v250
      %v608 = vunpack.c.l.b16 %v251
      %v609 = vunpack.c.l.b16 %v252
      %v610 = vunpack.c.l.b16 %v253
      %v611 = vunpack.c.l.b16 %v254
      %v612 = vunpack.c.l.b16 %v255
      %v613 = vunpack.c.l.b16 %v256
      %v614 = vunpack.c.l.b16 %v257
      %v615 = vunpack.c.l.b16 %v258
      %v616 = vunpack.c.l.b16 %v259
      %v617 = vunpack.c.l.b16 %v260
      %v618 = vunpack.c.l.b16 %v261
      %v619 = vunpack.c.l.b16 %v262
      %v620 = vunpack.c.l.b16 %v263
      %v621 = vunpack.c.l.b16 %v264
      %v622 = vunpack.c.l.b16 %v265
      %v623 = vunpack.c.l.b16 %v266
      %v624 = vunpack.c.l.b16 %v267
      %v625 = vunpack.c.l.b16 %v268
      %v626 = vunpack.c.l.b16 %v269
      %v627 = vunpack.c.l.b16 %v270
      %v628 = vunpack.c.l.b16 %v271
      %v629 = vunpack.c.l.b16 %v272
      %v630 = vunpack.c.l.b16 %v273
      %v631 = vunpack.c.l.b16 %v274
      %v632 = vunpack.c.l.b16 %v275
      %v633 = vunpack.c.l.b16 %v276
      %v634 = vunpack.c.l.b16 %v277
      %v635 = vunpack.c.l.b16 %v278
      %v636 = vunpack.c.l.b16 %v279
      %v637 = vunpack.c.l.b16 %v280
      %v638 = vunpack.c.l.b16 %v281
      %v639 = vunpack.c.l.b16 %v282
      %v640 = vunpack.c.l.b16 %v283
      %v641 = vunpack.c.l.b16 %v284
      %v642 = vunpack.c.l.b16 %v285
      %v643 = vunpack.c.l.b16 %v286
      %v644 = vunpack.c.l.b16 %v287
      %v645 = vunpack.c.l.b16 %v288
      %v646 = vunpack.c.l.b16 %v289
      %v647 = vunpack.c.l.b16 %v290
      %v648 = vunpack.c.l.b16 %v291
      %v649 = vunpack.c.l.b16 %v292
      %v650 = vunpack.c.l.b16 %v293
      %v651 = vunpack.c.l.b16 %v294
      %v652 = vunpack.c.l.b16 %v295
      %v653 = vunpack.c.l.b16 %v296
      %v654 = vunpack.c.l.b16 %v297
      %v655 = vunpack.c.l.b16 %v298
      %v656 = vunpack.c.l.b16 %v299
      %v657 = vunpack.c.l.b16 %v300
      %v658 = vunpack.c.l.b16 %v301
      %v659 = vunpack.c.l.b16 %v302
      %v660 = vunpack.c.l.b16 %v303
      %v661 = vunpack.c.l.b16 %v304
      %v662 = vunpack.c.l.b16 %v305
      %v663 = vunpack.c.l.b16 %v306
      %v664 = vunpack.c.l.b16 %v307
      %v665 = vunpack.c.l.b16 %v308
      %v666 = vunpack.c.l.b16 %v309
      %v667 = vunpack.c.l.b16 %v310
      %v668 = vunpack.c.l.b16 %v311
      %v669 = vunpack.c.l.b16 %v312
      %v670 = vunpack.c.l.b16 %v313
      %v671 = vunpack.c.l.b16 %v314
      %v672 = vunpack.c.l.b16 %v315
      %v673 = vunpack.c.l.b16 %v316
      %v674 = vunpack.c.l.b16 %v317
      %v675 = vunpack.c.l.b16 %v318
      %v676 = vunpack.c.l.b16 %v319
      %v677 = vunpack.c.l.b16 %v320
      %v678 = vunpack.c.l.b16 %v321
      %v679 = vunpack.c.l.b16 %v322
      %v680 = vunpack.c.l.b16 %v323
      %v681 = vunpack.c.l.b16 %v324
      %v682 = vunpack.c.l.b16 %v325
      %v683 = vunpack.c.l.b16 %v326
      %v684 = vunpack.c.l.b16 %v327
      %v685 = vunpack.c.l.b16 %v328
      %v686 = vpack.c.b16 %v575, %v574
      %v687 = vpack.c.b16 %v577, %v576
      %v688 = vpack.c.b16 %v579, %v578
      %v689 = vpack.c.b16 %v581, %v580
      %v690 = vpack.c.b16 %v583, %v582
      %v691 = vpack.c.b16 %v585, %v584
      %v692 = vpack.c.b16 %v587, %v586
      %v693 = vpack.c.b16 %v589, %v588
      %v694 = vpack.c.b16 %v591, %v590
      %v695 = vpack.c.b16 %v593, %v592
      %v696 = vpack.c.b16 %v595, %v594
      %v697 = vpack.c.b16 %v597, %v596
      %v698 = vpack.c.b16 %v599, %v598
      %v699 = vpack.c.b16 %v601, %v600
      %v700 = vpack.c.b16 %v603, %v602
      %v701 = vpack.c.b16 %v605, %v604
      %v702 = vpack.c.b16 %v607, %v606
      %v703 = vpack.c.b16 %v609, %v608
      %v704 = vpack.c.b16 %v611, %v610
      %v705 = vpack.c.b16 %v613, %v612
      %v706 = vpack.c.b16 %v615, %v614
      %v707 = vpack.c.b16 %v617, %v616
      %v708 = vpack.c.b16 %v619, %v618
      %v709 = vpack.c.b16 %v621, %v620
      %v710 = vpack.c.b16 %v623, %v622
      %v711 = vpack.c.b16 %v625, %v624
      %v712 = vpack.c.b16 %v627, %v626
      %v713 = vpack.c.b16 %v629, %v628
      %v714 = vpack.c.b16 %v631, %v630
      %v715 = vpack.c.b16 %v633, %v632
      %v716 = vpack.c.b16 %v635, %v634
      %v717 = vpack.c.b16 %v637, %v636
      %v718 = vpack.c.b16 %v639, %v638
      %v719 = vpack.c.b16 %v641, %v640
      %v720 = vpack.c.b16 %v643, %v642
      %v721 = vpack.c.b16 %v645, %v644
      %v722 = vpack.c.b16 %v647, %v646
      %v723 = vpack.c.b16 %v649, %v648
      %v724 = vpack.c.b16 %v651, %v650
      %v725 = vpack.c.b16 %v653, %v652
      %v726 = vpack.c.b16 %v655, %v654
      %v727 = vpack.c.b16 %v657, %v656
      %v728 = vpack.c.b16 %v659, %v658
      %v729 = vpack.c.b16 %v661, %v660
      %v730 = vpack.c.b16 %v663, %v662
      %v731 = vpack.c.b16 %v665, %v664
      %v732 = vpack.c.b16 %v667, %v666
      %v733 = vpack.c.b16 %v669, %v668
      %v734 = vpack.c.b16 %v671, %v670
      %v735 = vpack.c.b16 %v673, %v672
      %v736 = vpack.c.b16 %v675, %v674
      %v737 = vpack.c.b16 %v677, %v676
      %v738 = vpack.c.b16 %v679, %v678
      %v739 = vpack.c.b16 %v681, %v680
      %v740 = vpack.c.b16 %v683, %v682
      %v741 = vpack.c.b16 %v685, %v684
      %798 = vmatprep.subr.bf16.mxu0 0
      %799 = vmatpush1.bf16.msra.mxu0 %v686
      %800 = vmatprep.subr.bf16.mxu0 0
      %801 = vmatpush1.bf16.msra.mxu0 %v687
      %802 = vmatprep.subr.bf16.mxu0 0
      %803 = vmatpush1.bf16.msra.mxu0 %v688
      %804 = vmatprep.subr.bf16.mxu0 0
      %805 = vmatpush1.bf16.msra.mxu0 %v689
      %806 = vmatprep.subr.bf16.mxu0 0
      %807 = vmatpush1.bf16.msra.mxu0 %v690
      %808 = vmatprep.subr.bf16.mxu0 0
      %809 = vmatpush1.bf16.msra.mxu0 %v691
      %810 = vmatprep.subr.bf16.mxu0 0
      %811 = vmatpush1.bf16.msra.mxu0 %v692
      %812 = vmatprep.subr.bf16.mxu0 0
      %813 = vmatpush1.bf16.msra.mxu0 %v693
      %814 = vmatprep.subr.bf16.mxu0 0
      %815 = vmatpush1.bf16.msra.mxu0 %v694
      %816 = vmatprep.subr.bf16.mxu0 0
      %817 = vmatpush1.bf16.msra.mxu0 %v695
      %818 = vmatprep.subr.bf16.mxu0 0
      %819 = vmatpush1.bf16.msra.mxu0 %v696
      %820 = vmatprep.subr.bf16.mxu0 0
      %821 = vmatpush1.bf16.msra.mxu0 %v697
      %822 = vmatprep.subr.bf16.mxu0 0
      %823 = vmatpush1.bf16.msra.mxu0 %v698
      %824 = vmatprep.subr.bf16.mxu0 0
      %825 = vmatpush1.bf16.msra.mxu0 %v699
      %826 = vmatprep.subr.bf16.mxu0 0
      %827 = vmatpush1.bf16.msra.mxu0 %v700
      %828 = vmatprep.subr.bf16.mxu0 0
      %829 = vmatpush1.bf16.msra.mxu0 %v701
      %830 = vmatprep.mubr.bf16.mxu0 %v407
      %831 = vmatmul.mubr.bf16.gmra.mrb[0].mxu0 %v406
      %v832 = vpop.f32.mrb[0].mxu0
      %v833 = vadd.f32 0.0, %v832
      %v834 = vpop.f32.mrb[0].mxu0
      %v835 = vpop.f32.mrb[0].mxu0
      %v836 = vadd.f32 0.0, %v835
      %v837 = vpop.f32.mrb[0].mxu0
      %838 = vmatprep.mubr.bf16.mxu0 %v414
      %839 = vmatmul.mubr.bf16.gmra.mrb[0].mxu0 %v413
      %v840 = vpop.f32.mrb[0].mxu0
      %v841 = vadd.f32 0.0, %v840
      %v842 = vpop.f32.mrb[0].mxu0
      %v843 = vpop.f32.mrb[0].mxu0
      %v844 = vadd.f32 0.0, %v843
      %v845 = vpop.f32.mrb[0].mxu0
      %846 = vmatprep.mubr.bf16.mxu0 %v421
      %847 = vmatmul.mubr.bf16.gmra.mrb[0].mxu0 %v420
      %v848 = vpop.f32.mrb[0].mxu0
      %v849 = vadd.f32 0.0, %v848
      %v850 = vpop.f32.mrb[0].mxu0
      %v851 = vpop.f32.mrb[0].mxu0
      %v852 = vadd.f32 0.0, %v851
      %v853 = vpop.f32.mrb[0].mxu0
      %854 = vmatprep.mubr.bf16.mxu0 %v428
      %855 = vmatmul.mubr.bf16.gmra.mrb[0].mxu0 %v427
      %v856 = vpop.f32.mrb[0].mxu0
      %v857 = vadd.f32 0.0, %v856
      %v858 = vpop.f32.mrb[0].mxu0
      %v859 = vpop.f32.mrb[0].mxu0
      %v860 = vpop.f32.mrb[0].mxu0
      %861 = vdwg.mxu0
      %862 = vmatprep.subr.bf16.mxu0 0
      %863 = vmatpush1.bf16.msra.mxu0 %v702
      %864 = vmatprep.subr.bf16.mxu0 0
      %865 = vmatpush1.bf16.msra.mxu0 %v703
      %866 = vmatprep.subr.bf16.mxu0 0
      %867 = vmatpush1.bf16.msra.mxu0 %v704
      %868 = vmatprep.subr.bf16.mxu0 0
      %869 = vmatpush1.bf16.msra.mxu0 %v705
      %870 = vmatprep.subr.bf16.mxu0 0
      %871 = vmatpush1.bf16.msra.mxu0 %v706
      %872 = vmatprep.subr.bf16.mxu0 0
      %873 = vmatpush1.bf16.msra.mxu0 %v707
      %874 = vmatprep.subr.bf16.mxu0 0
      %875 = vmatpush1.bf16.msra.mxu0 %v708
      %876 = vmatprep.subr.bf16.mxu0 0
      %877 = vmatpush1.bf16.msra.mxu0 %v709
      %878 = vmatprep.subr.bf16.mxu0 0
      %879 = vmatpush1.bf16.msra.mxu0 %v710
      %880 = vmatprep.subr.bf16.mxu0 0
      %881 = vmatpush1.bf16.msra.mxu0 %v711
      %882 = vmatprep.subr.bf16.mxu0 0
      %883 = vmatpush1.bf16.msra.mxu0 %v712
      %884 = vmatprep.subr.bf16.mxu0 0
      %885 = vmatpush1.bf16.msra.mxu0 %v713
      %886 = vmatprep.subr.bf16.mxu0 0
      %887 = vmatpush1.bf16.msra.mxu0 %v714
      %888 = vmatprep.subr.bf16.mxu0 0
      %889 = vmatpush1.bf16.msra.mxu0 %v715
      %890 = vmatprep.subr.bf16.mxu0 0
      %891 = vmatpush1.bf16.msra.mxu0 %v716
      %892 = vmatprep.subr.bf16.mxu0 0
      %893 = vmatpush1.bf16.msra.mxu0 %v717
      %894 = vmatprep.mubr.bf16.mxu0 %v409
      %895 = vmatmul.mubr.bf16.gmra.mrb[0].mxu0 %v408
      %v896 = vpop.f32.mrb[0].mxu0
      %v897 = vadd.f32 %v833, %v896
      %v898 = vpop.f32.mrb[0].mxu0
      %v899 = vpop.f32.mrb[0].mxu0
      %v900 = vadd.f32 %v836, %v899
      %v901 = vpop.f32.mrb[0].mxu0
      %902 = vmatprep.mubr.bf16.mxu0 %v416
      %903 = vmatmul.mubr.bf16.gmra.mrb[0].mxu0 %v415
      %v904 = vpop.f32.mrb[0].mxu0
      %v905 = vadd.f32 %v841, %v904
      %v906 = vpop.f32.mrb[0].mxu0
      %v907 = vpop.f32.mrb[0].mxu0
      %v908 = vadd.f32 %v844, %v907
      %v909 = vpop.f32.mrb[0].mxu0
      %910 = vmatprep.mubr.bf16.mxu0 %v423
      %911 = vmatmul.mubr.bf16.gmra.mrb[0].mxu0 %v422
      %v912 = vpop.f32.mrb[0].mxu0
      %v913 = vadd.f32 %v849, %v912
      %v914 = vpop.f32.mrb[0].mxu0
      %v915 = vpop.f32.mrb[0].mxu0
      %v916 = vadd.f32 %v852, %v915
      %v917 = vpop.f32.mrb[0].mxu0
      %918 = vmatprep.mubr.bf16.mxu0 %v430
      %919 = vmatmul.mubr.bf16.gmra.mrb[0].mxu0 %v429
      %v920 = vpop.f32.mrb[0].mxu0
      %v921 = vadd.f32 %v857, %v920
      %v922 = vpop.f32.mrb[0].mxu0
      %v923 = vpop.f32.mrb[0].mxu0
      %v924 = vpop.f32.mrb[0].mxu0
      %925 = vdwg.mxu0
      %926 = vmatprep.subr.bf16.mxu0 0
      %927 = vmatpush1.bf16.msra.mxu0 %v718
      %928 = vmatprep.subr.bf16.mxu0 0
      %929 = vmatpush1.bf16.msra.mxu0 %v719
      %930 = vmatprep.subr.bf16.mxu0 0
      %931 = vmatpush1.bf16.msra.mxu0 %v720
      %932 = vmatprep.subr.bf16.mxu0 0
      %933 = vmatpush1.bf16.msra.mxu0 %v721
      %934 = vmatprep.subr.bf16.mxu0 0
      %935 = vmatpush1.bf16.msra.mxu0 %v722
      %936 = vmatprep.subr.bf16.mxu0 0
      %937 = vmatpush1.bf16.msra.mxu0 %v723
      %938 = vmatprep.subr.bf16.mxu0 0
      %939 = vmatpush1.bf16.msra.mxu0 %v724
      %940 = vmatprep.subr.bf16.mxu0 0
      %941 = vmatpush1.bf16.msra.mxu0 %v725
      %942 = vmatprep.subr.bf16.mxu0 0
      %943 = vmatpush1.bf16.msra.mxu0 %v726
      %944 = vmatprep.subr.bf16.mxu0 0
      %945 = vmatpush1.bf16.msra.mxu0 %v727
      %946 = vmatprep.subr.bf16.mxu0 0
      %947 = vmatpush1.bf16.msra.mxu0 %v728
      %948 = vmatprep.subr.bf16.mxu0 0
      %949 = vmatpush1.bf16.msra.mxu0 %v729
      %950 = vmatprep.subr.bf16.mxu0 0
      %951 = vmatpush1.bf16.msra.mxu0 %v730
      %952 = vmatprep.subr.bf16.mxu0 0
      %953 = vmatpush1.bf16.msra.mxu0 %v731
      %954 = vmatprep.subr.bf16.mxu0 0
      %955 = vmatpush1.bf16.msra.mxu0 %v732
      %956 = vmatprep.subr.bf16.mxu0 0
      %957 = vmatpush1.bf16.msra.mxu0 %v733
      %958 = vmatprep.mubr.bf16.mxu0 %v411
      %959 = vmatmul.mubr.bf16.gmra.mrb[0].mxu0 %v410
      %v960 = vpop.f32.mrb[0].mxu0
      %v961 = vadd.f32 %v897, %v960
      %v962 = vpop.f32.mrb[0].mxu0
      %v963 = vpop.f32.mrb[0].mxu0
      %v964 = vadd.f32 %v900, %v963
      %v965 = vpop.f32.mrb[0].mxu0
      %966 = vmatprep.mubr.bf16.mxu0 %v418
      %967 = vmatmul.mubr.bf16.gmra.mrb[0].mxu0 %v417
      %v968 = vpop.f32.mrb[0].mxu0
      %v969 = vadd.f32 %v905, %v968
      %v970 = vpop.f32.mrb[0].mxu0
      %v971 = vpop.f32.mrb[0].mxu0
      %v972 = vadd.f32 %v908, %v971
      %v973 = vpop.f32.mrb[0].mxu0
      %974 = vmatprep.mubr.bf16.mxu0 %v425
      %975 = vmatmul.mubr.bf16.gmra.mrb[0].mxu0 %v424
      %v976 = vpop.f32.mrb[0].mxu0
      %v977 = vadd.f32 %v913, %v976
      %v978 = vpop.f32.mrb[0].mxu0
      %v979 = vpop.f32.mrb[0].mxu0
      %v980 = vadd.f32 %v916, %v979
      %v981 = vpop.f32.mrb[0].mxu0
      %982 = vmatprep.mubr.bf16.mxu0 %v432
      %983 = vmatmul.mubr.bf16.gmra.mrb[0].mxu0 %v431
      %v984 = vpop.f32.mrb[0].mxu0
      %v985 = vadd.f32 %v921, %v984
      %v986 = vpop.f32.mrb[0].mxu0
      %v987 = vpop.f32.mrb[0].mxu0
      %v988 = vpop.f32.mrb[0].mxu0
      %989 = vdwg.mxu0
      %990 = vmatprep.subr.bf16.mxu0 0
      %991 = vmatpush1.bf16.msra.mxu0 %v734
      %992 = vmatprep.subr.bf16.mxu0 0
      %993 = vmatpush1.bf16.msra.mxu0 %v735
      %994 = vmatprep.subr.bf16.mxu0 0
      %995 = vmatpush1.bf16.msra.mxu0 %v736
      %996 = vmatprep.subr.bf16.mxu0 0
      %997 = vmatpush1.bf16.msra.mxu0 %v737
      %998 = vmatprep.subr.bf16.mxu0 0
      %999 = vmatpush1.bf16.msra.mxu0 %v738
      %1000 = vmatprep.subr.bf16.mxu0 0
      %1001 = vmatpush1.bf16.msra.mxu0 %v739
      %1002 = vmatprep.subr.bf16.mxu0 0
      %1003 = vmatpush1.bf16.msra.mxu0 %v740
      %1004 = vmatprep.subr.bf16.mxu0 0
      %1005 = vmatpush1.bf16.msra.mxu0 %v741
      %1006 = vmatprep.subr.bf16.mxu0 0
      %1007 = vmatpush1.bf16.msra.mxu0 0
      %1008 = vmatprep.subr.bf16.mxu0 0
      %1009 = vmatpush1.bf16.msra.mxu0 0
      %1010 = vmatprep.subr.bf16.mxu0 0
      %1011 = vmatpush1.bf16.msra.mxu0 0
      %1012 = vmatprep.subr.bf16.mxu0 0
      %1013 = vmatpush1.bf16.msra.mxu0 0
      %1014 = vmatprep.subr.bf16.mxu0 0
      %1015 = vmatpush1.bf16.msra.mxu0 0
      %1016 = vmatprep.subr.bf16.mxu0 0
      %1017 = vmatpush1.bf16.msra.mxu0 0
      %1018 = vmatprep.subr.bf16.mxu0 0
      %1019 = vmatpush1.bf16.msra.mxu0 0
      %1020 = vmatprep.subr.bf16.mxu0 0
      %1021 = vmatpush1.bf16.msra.mxu0 0
      %1022 = vmatprep.mubr.bf16.mxu0 0
      %1023 = vmatmul.mubr.bf16.gmra.mrb[0].mxu0 %v412
      %v1024 = vpop.f32.mrb[0].mxu0
      %v1025 = vadd.f32 %v961, %v1024
      %v1026 = vpop.f32.mrb[0].mxu0
      %v1027 = vpop.f32.mrb[0].mxu0
      %v1028 = vadd.f32 %v964, %v1027
      %v1029 = vpop.f32.mrb[0].mxu0
      %1030 = vmatprep.mubr.bf16.mxu0 0
      %1031 = vmatmul.mubr.bf16.gmra.mrb[0].mxu0 %v419
      %v1032 = vpop.f32.mrb[0].mxu0
      %v1033 = vadd.f32 %v969, %v1032
      %v1034 = vpop.f32.mrb[0].mxu0
      %v1035 = vpop.f32.mrb[0].mxu0
      %v1036 = vadd.f32 %v972, %v1035
      %v1037 = vpop.f32.mrb[0].mxu0
      %1038 = vmatprep.mubr.bf16.mxu0 0
      %1039 = vmatmul.mubr.bf16.gmra.mrb[0].mxu0 %v426
      %v1040 = vpop.f32.mrb[0].mxu0
      %v1041 = vadd.f32 %v977, %v1040
      %v1042 = vpop.f32.mrb[0].mxu0
      %v1043 = vpop.f32.mrb[0].mxu0
      %v1044 = vadd.f32 %v980, %v1043
      %v1045 = vpop.f32.mrb[0].mxu0
      %1046 = vmatprep.mubr.bf16.mxu0 0
      %1047 = vmatmul.mubr.bf16.gmra.mrb[0].mxu0 %v433
      %v1048 = vpop.f32.mrb[0].mxu0
      %v1049 = vadd.f32 %v985, %v1048
      %v1050 = vpop.f32.mrb[0].mxu0
      %v1051 = vpop.f32.mrb[0].mxu0
      %v1052 = vpop.f32.mrb[0].mxu0
      %1053 = vdwg.mxu0
      %v1054 = vpack.c.bf16 %v1028, %v1025
      %v1055 = vpack.c.bf16 %v1036, %v1033
      %v1056 = vpack.c.bf16 %v1044, %v1041
      %v1057 = vpack.c.bf16 %v1049, %v1049
      %v1062 = vunpack.c.l.b16 %v1054
      %v1063 = vunpack.c.h.b16 %v1054
      %v1064 = vunpack.c.l.b16 %v1055
      %v1065 = vunpack.c.h.b16 %v1055
      %v1066 = vunpack.c.l.b16 %v1056
      %v1067 = vunpack.c.h.b16 %v1056
      %v1068 = vunpack.c.l.b16 %v1057
      %v1069 = vpack.c.b16 %v1062, %v1062
      %v1070 = vpack.c.b16 %v1063, %v1063
      %v1071 = vpack.c.b16 %v1064, %v1064
      %v1072 = vpack.c.b16 %v1065, %v1065
      %v1073 = vpack.c.b16 %v1066, %v1066
      %v1074 = vpack.c.b16 %v1067, %v1067
      %v1075 = vpack.c.b16 %v1068, %v1068
      %1083 = vst [vmem:[%s182] sm:$0xf] %v1069
      %1084 = vst [vmem:[%s182 + $0x4] sm:$0xf] %v1070
      %1085 = vst [vmem:[%s182 + $0x8] sm:$0xf] %v1071
      %1086 = vst [vmem:[%s182 + $0xc] sm:$0xf] %v1072
      %1087 = vst [vmem:[%s182 + $0x10] sm:$0xf] %v1073
      %1088 = vst [vmem:[%s182 + $0x14] sm:$0xf] %v1074
      %1089 = vst [vmem:[%s182 + $0x18] sm:$0xf] %v1075
      %v1090 = vadd.f32 %v1025, %v1028
      %v1091 = vadd.f32 %v1090, %v1033
      %v1092 = vadd.f32 %v1091, %v1036
      %v1093 = vadd.f32 %v1092, %v1041
      %v1094 = vadd.f32 %v1093, %v1044
      %v1095 = vadd.f32 %v1094, %v1049
      %v1096 = vrot.slane %v1095, 4
      %v1097 = vadd.f32 %v1095, %v1096
      %v1098 = vrot.slane %v1097, 2
      %v1099 = vadd.f32 %v1097, %v1098
      %v1100 = vrot.slane %v1099, 1
      %v1101 = vadd.f32 %v1099, %v1100
      %1102 = vst [vmem:[%s187] sm:$0x1] %v1101
      %v1103 = vmul.f32 %v1025, %v1025
      %v1104 = vmul.f32 %v1028, %v1028
      %v1105 = vmul.f32 %v1033, %v1033
      %v1106 = vmul.f32 %v1036, %v1036
      %v1107 = vmul.f32 %v1041, %v1041
      %v1108 = vmul.f32 %v1044, %v1044
      %v1109 = vmul.f32 %v1049, %v1049
      %v1110 = vadd.f32 %v1103, %v1104
      %v1111 = vadd.f32 %v1110, %v1105
      %v1112 = vadd.f32 %v1111, %v1106
      %v1113 = vadd.f32 %v1112, %v1107
      %v1114 = vadd.f32 %v1113, %v1108
      %v1115 = vadd.f32 %v1114, %v1109
      %v1116 = vrot.slane %v1115, 4
      %v1117 = vadd.f32 %v1115, %v1116
      %v1118 = vrot.slane %v1117, 2
      %v1119 = vadd.f32 %v1117, %v1118
      %v1120 = vrot.slane %v1119, 1
      %v1121 = vadd.f32 %v1119, %v1120
      %1122 = vst [vmem:[%s187 + $0x1] sm:$0x1] %v1121
      %s1123 = smul.u32 7, %s15
      %p1124 = scmp.lt.s32.totalorder %s1123, 13
      %s1125 = scalar_select %p1124, %s1123, 13
      %s1126 = smul.addr %s1125, 4
      %s1127 = scalar_lea.vmem %s2, %s1126
      %p1128 = scmp.lt.s32.totalorder %s15, 1
      %s1129 = scalar_select %p1128, %s15, 1
      %s1130 = smul.addr %s1129, 2
      %s1131 = scalar_lea.vmem %s3, %s1130
      // Predicated region
      $region29: #{inception_b_forward.15} parent=27 // pred_check
        %p1132 = pneg %p80
      $region30: #{inception_b_forward.15} parent=27 // pred_check_branch
        %1134 = sbr.rel (%p1132) target = $region32
      $region31: #{inception_b_forward.15} parent=27 // pred_region
        %s1135 = smul.u32 7, %s15
      $region32: #{inception_b_forward.15} parent=27 // pred_fallthru
        _
      // Predicated region
      $region33: #{inception_b_forward.15} parent=27 // pred_check
        %p1136 = pneg %p106
      $region34: #{inception_b_forward.15} parent=27 // pred_check_branch
        %1138 = sbr.rel (%p1136) target = $region36
      $region35: #{inception_b_forward.15} parent=27 // pred_region
        _
      $region36: #{inception_b_forward.15} parent=27 // pred_fallthru
        _
    $region28: #{inception_b_forward.15} parent=5 // pred_fallthru
      _
    %p1139 = scmp.le.s32.totalorder 2, %s10
    // Predicated region
    $region37: #{inception_b_forward.15} parent=5 // pred_check
      %p1140 = pneg %p1139
    $region38: #{inception_b_forward.15} parent=5 // pred_check_branch
      %1142 = sbr.rel (%p1140) target = $region40
    $region39: #{inception_b_forward.15} parent=5 // pred_region
      %s1143 = ssub.s32 %s10, 2
      // Predicated region
      $region41: #{inception_b_forward.15} parent=39 // pred_check
        %p1144 = pneg %p86
      $region42: #{inception_b_forward.15} parent=39 // pred_check_branch
        %1146 = sbr.rel (%p1144) target = $region44
      $region43: #{inception_b_forward.15} parent=39 // pred_region
        %s1147 = smul.u32 7, %s16
        %p1148 = scmp.lt.s32.totalorder %s1147, 13
        %s1149 = scalar_select %p1148, %s1147, 13
        %s1150 = smul.addr %s1149, 4
        %s1151 = scalar_lea.vmem %s2, %s1150
      $region44: #{inception_b_forward.15} parent=39 // pred_fallthru
        _
      // Predicated region
      $region45: #{inception_b_forward.15} parent=39 // pred_check
        %p1152 = pneg %p112
      $region46: #{inception_b_forward.15} parent=39 // pred_check_branch
        %1154 = sbr.rel (%p1152) target = $region48
      $region47: #{inception_b_forward.15} parent=39 // pred_region
        %p1155 = scmp.lt.s32.totalorder %s16, 1
        %s1156 = scalar_select %p1155, %s16, 1
        %s1157 = smul.addr %s1156, 2
        %s1158 = scalar_lea.vmem %s3, %s1157
      $region48: #{inception_b_forward.15} parent=39 // pred_fallthru
        _
    $region40: #{inception_b_forward.15} parent=5 // pred_fallthru
      _
  $region6: #{inception_b_forward.15} parent=0 // loop_footer
    %s14 = sadd.s32 1, %s10
  $region7: #{inception_b_forward.15} parent=0 // loop_footer_branch
    %9 = sbr.rel target = $region3
  $region8: #{inception_b_forward.15} parent=0 // loop_exit
    _

// kernel: inception_b_forward.16
$region0: #{inception_b_forward.16}
  #allocation0 [shape = 'u32[]', space=smem, size = 0x4, offset = 0x4, fixed_abs, tag = 'smem constant byte address 0x4 - core index']
  #allocation1 [shape = 'u32[144,128]{1,0:T(1,128)}', space=vmem, size = 0x12000, scoped, tag = 'internal scratch']
  %s0 = inlined_call_operand.vmem [shape: bf16[112,128], index: 0, kind: input, shape index: {}]
  %s1 = inlined_call_operand.vmem [shape: f32[1,128], index: 1, kind: input, shape index: {}]
  %s2 = inlined_call_operand.vmem [shape: f32[1,128], index: 2, kind: input, shape index: {}]
  %s3 = inlined_call_operand.vmem [shape: f32[112,128], index: 3, kind: output, shape index: {}]
  %s4 = sld [smem:[#allocation0]]
  $region45: #{inception_b_forward.16} parent=0
    _
  %s6 = ssub.s32 1, %s4
  %s7 = scalar_select 0, %s6, %s4
  loop: start=0, step=1, limit=4
  $region2: #{inception_b_forward.16} parent=0 // loop_pre_header
    _
  $region3: #{inception_b_forward.16} parent=0 // loop_header
    %s9 = sphi 0, %s13
    %p10 = scmp.ge.s32.totalorder %s9, 4
    %s19 = sphi 0, %s21
    %s22 = sphi 0, %s19
    %s23 = sphi 0, %s22
    %s39 = sphi 0, %s23
    %s43 = sphi 0, %s43
    %s45 = sphi 0, %s43
    %s46 = sphi 0, %s45
    %s60 = sphi 0, %s46
    %s64 = sphi 0, %s64
    %s66 = sphi 0, %s64
    %s67 = sphi 0, %s66
    %s81 = sphi 0, %s67
    %s87 = sphi 0, %s89
    %s90 = sphi 0, %s87
    %s91 = sphi 0, %s90
    %s107 = sphi 0, %s91
  $region4: #{inception_b_forward.16} parent=0 // loop_header_branch
    %12 = sbr.rel (%p10) target = $region8
  $region5: #{inception_b_forward.16} parent=0 // loop_body
    %s14 = ssub.s32 %s9, 1
    %s15 = ssub.s32 %s9, 2
    %s16 = sadd.s32 %s9, 1
    %s17 = ssub.s32 %s9, %s16
    %p18 = scmp.eq.s32.totalorder %s17, 0
    %s20 = sadd.s32 %s19, 1
    %s21 = scalar_select %p18, %s19, %s20
    %p24 = pneg %p18
    %p25 = scmp.eq.s32.totalorder %s9, 1
    %p26 = por %p24, %p25
    %p27 = scmp.ne.s32.totalorder %s19, %s22
    %p28 = scmp.eq.s32.totalorder %s9, 0
    %p29 = por %p27, %p28
    %p30 = scmp.ne.s32.totalorder %s19, %s22
    %p31 = scmp.eq.s32.totalorder %s14, 1
    %p32 = por %p30, %p31
    %p33 = scmp.ne.s32.totalorder %s22, %s23
    %p34 = scmp.eq.s32.totalorder %s14, 0
    %p35 = por %p33, %p34
    %p36 = scmp.ne.s32.totalorder %s22, %s23
    %p37 = scmp.eq.s32.totalorder %s15, 1
    %p38 = por %p36, %p37
    %p40 = scmp.ne.s32.totalorder %s23, %s39
    %p41 = scmp.eq.s32.totalorder %s15, 0
    %p42 = por %p40, %p41
    %s44 = sadd.s32 %s43, 1
    %p47 = scmp.eq.s32.totalorder %s9, 1
    %p48 = scmp.ne.s32.totalorder %s43, %s45
    %p49 = scmp.eq.s32.totalorder %s9, 0
    %p50 = por %p48, %p49
    %p51 = scmp.ne.s32.totalorder %s43, %s45
    %p52 = scmp.eq.s32.totalorder %s14, 1
    %p53 = por %p51, %p52
    %p54 = scmp.ne.s32.totalorder %s45, %s46
    %p55 = scmp.eq.s32.totalorder %s14, 0
    %p56 = por %p54, %p55
    %p57 = scmp.ne.s32.totalorder %s45, %s46
    %p58 = scmp.eq.s32.totalorder %s15, 1
    %p59 = por %p57, %p58
    %p61 = scmp.ne.s32.totalorder %s46, %s60
    %p62 = scmp.eq.s32.totalorder %s15, 0
    %p63 = por %p61, %p62
    %s65 = sadd.s32 %s64, 1
    %p68 = scmp.eq.s32.totalorder %s9, 1
    %p69 = scmp.ne.s32.totalorder %s64, %s66
    %p70 = scmp.eq.s32.totalorder %s9, 0
    %p71 = por %p69, %p70
    %p72 = scmp.ne.s32.totalorder %s64, %s66
    %p73 = scmp.eq.s32.totalorder %s14, 1
    %p74 = por %p72, %p73
    %p75 = scmp.ne.s32.totalorder %s66, %s67
    %p76 = scmp.eq.s32.totalorder %s14, 0
    %p77 = por %p75, %p76
    %p78 = scmp.ne.s32.totalorder %s66, %s67
    %p79 = scmp.eq.s32.totalorder %s15, 1
    %p80 = por %p78, %p79
    %p82 = scmp.ne.s32.totalorder %s67, %s81
    %p83 = scmp.eq.s32.totalorder %s15, 0
    %p84 = por %p82, %p83
    %s85 = ssub.s32 %s9, %s16
    %p86 = scmp.eq.s32.totalorder %s85, 0
    %s88 = sadd.s32 %s87, 1
    %s89 = scalar_select %p86, %s87, %s88
    %p92 = pneg %p86
    %p93 = scmp.eq.s32.totalorder %s9, 1
    %p94 = por %p92, %p93
    %p95 = scmp.ne.s32.totalorder %s87, %s90
    %p96 = scmp.eq.s32.totalorder %s9, 0
    %p97 = por %p95, %p96
    %p98 = scmp.ne.s32.totalorder %s87, %s90
    %p99 = scmp.eq.s32.totalorder %s14, 1
    %p100 = por %p98, %p99
    %p101 = scmp.ne.s32.totalorder %s90, %s91
    %p102 = scmp.eq.s32.totalorder %s14, 0
    %p103 = por %p101, %p102
    %p104 = scmp.ne.s32.totalorder %s90, %s91
    %p105 = scmp.eq.s32.totalorder %s15, 1
    %p106 = por %p104, %p105
    %p108 = scmp.ne.s32.totalorder %s91, %s107
    %p109 = scmp.eq.s32.totalorder %s15, 0
    %p110 = por %p108, %p109
    %p111 = scmp.le.s32.totalorder 1, %s9
    %p112 = scmp.lt.s32.totalorder %s9, 3
    %p113 = pnand %p111, %p112
    %p114 = pneg %p113
    // Predicated region
    $region9: #{inception_b_forward.16} parent=5 // pred_check
      _
    $region10: #{inception_b_forward.16} parent=5 // pred_check_branch
      %116 = sbr.rel (%p113) target = $region12
    $region11: #{inception_b_forward.16} parent=5 // pred_region
      %s117 = ssub.s32 %s9, 1
      // Predicated region
      $region13: #{inception_b_forward.16} parent=11 // pred_check
        %p118 = pneg %p56
      $region14: #{inception_b_forward.16} parent=11 // pred_check_branch
        %120 = sbr.rel (%p118) target = $region16
      $region15: #{inception_b_forward.16} parent=11 // pred_region
        _
      $region16: #{inception_b_forward.16} parent=11 // pred_fallthru
        _
      // Predicated region
      $region17: #{inception_b_forward.16} parent=11 // pred_check
        %p121 = pneg %p77
      $region18: #{inception_b_forward.16} parent=11 // pred_check_branch
        %123 = sbr.rel (%p121) target = $region20
      $region19: #{inception_b_forward.16} parent=11 // pred_region
        _
      $region20: #{inception_b_forward.16} parent=11 // pred_fallthru
        _
    $region12: #{inception_b_forward.16} parent=5 // pred_fallthru
      _
    %p124 = scmp.lt.s32.totalorder %s9, 2
    // Predicated region
    $region21: #{inception_b_forward.16} parent=5 // pred_check
      %p125 = pneg %p124
    $region22: #{inception_b_forward.16} parent=5 // pred_check_branch
      %127 = sbr.rel (%p125) target = $region24
    $region23: #{inception_b_forward.16} parent=5 // pred_region
      // Predicated region
      $region25: #{inception_b_forward.16} parent=23 // pred_check
        %p128 = pneg %p29
      $region26: #{inception_b_forward.16} parent=23 // pred_check_branch
        %130 = sbr.rel (%p128) target = $region28
      $region27: #{inception_b_forward.16} parent=23 // pred_region
        %s131 = smul.u32 7, %s9
        %p132 = scmp.lt.s32.totalorder %s131, 13
        %s133 = scalar_select %p132, %s131, 13
        %s134 = smul.addr %s133, 4
        %s135 = scalar_lea.vmem %s0, %s134
        %s136 = smul.u32 7, %s9
      $region28: #{inception_b_forward.16} parent=23 // pred_fallthru
        _
    $region24: #{inception_b_forward.16} parent=5 // pred_fallthru
      _
    %p137 = scmp.le.s32.totalorder 1, %s9
    %p138 = scmp.lt.s32.totalorder %s9, 3
    %p139 = pnand %p137, %p138
    %p140 = pneg %p139
    // Predicated region
    $region29: #{inception_b_forward.16} parent=5 // pred_check
      _
    $region30: #{inception_b_forward.16} parent=5 // pred_check_branch
      %142 = sbr.rel (%p139) target = $region32
    $region31: #{inception_b_forward.16} parent=5 // pred_region
      %s143 = ssub.s32 %s9, 1
      %s144 = smul.u32 7, %s14
      %p145 = scmp.lt.s32.totalorder %s144, 13
      %s146 = scalar_select %p145, %s144, 13
      %s147 = smul.addr %s146, 4
      %s148 = scalar_lea.vmem %s0, %s147
      %p149 = pneg %p35
      %p150 = pneg %p32
      %p151 = pneg %p56
      %p152 = pneg %p53
      %p153 = pneg %p77
      %p154 = pneg %p74
      %p155 = pneg %p103
      %p156 = pneg %p100
      %s157 = smul.u32 7, %s14
      %p158 = scmp.lt.s32.totalorder %s157, 13
      %s159 = scalar_select %p158, %s157, 13
      %s160 = smul.addr %s159, 8
      %s161 = scalar_lea.vmem %s3, %s160
      %s162 = smul.u32 7, %s14
      %p163 = scmp.lt.s32.totalorder %s162, 13
      %s164 = scalar_select %p163, %s162, 13
      %s165 = smul.addr %s164, 4
      %s166 = scalar_lea.vmem %s0, %s165
      %s167 = smul.u32 7, %s14
      %s168 = smul.u32 7, %s14
      %p169 = scmp.lt.s32.totalorder %s168, 13
      %s170 = scalar_select %p169, %s168, 13
      %s171 = smul.addr %s170, 8
      %s172 = scalar_lea.vmem %s3, %s171
      %s173 = smul.u32 7, %s14
      %v174 = vld [vmem:[%s166] sm:$0xf]
      %v175 = vld [vmem:[%s166 + $0x4] sm:$0xf]
      %v176 = vld [vmem:[%s166 + $0x8] sm:$0xf]
      %v177 = vld [vmem:[%s166 + $0xc] sm:$0xf]
      %v178 = vld [vmem:[%s166 + $0x10] sm:$0xf]
      %v179 = vld [vmem:[%s166 + $0x14] sm:$0xf]
      %v180 = vld [vmem:[%s166 + $0x18] sm:$0xf]
      %v181 = vunpack.c.l.bf16 %v174
      %v182 = vunpack.c.l.bf16 %v175
      %v183 = vunpack.c.l.bf16 %v176
      %v184 = vunpack.c.l.bf16 %v177
      %v185 = vunpack.c.l.bf16 %v178
      %v186 = vunpack.c.l.bf16 %v179
      %v187 = vunpack.c.l.bf16 %v180
      %v188 = vld [vmem:[%s1] sm:$0x1]
      %v190 = vlaneseq
      %v191 = vshrl.u32 %v190, 7
      %v192 = vsub.s32 0, %v191
      %v193 = vrot.slane %v188, %v192
      %v195 = vmul.f32 %v181, %v193
      %v196 = vmul.f32 %v182, %v193
      %v197 = vmul.f32 %v183, %v193
      %v198 = vmul.f32 %v184, %v193
      %v199 = vmul.f32 %v185, %v193
      %v200 = vmul.f32 %v186, %v193
      %v201 = vmul.f32 %v187, %v193
      %v202 = vld [vmem:[%s2] sm:$0x1]
      %v204 = vlaneseq
      %v205 = vshrl.u32 %v204, 7
      %v206 = vsub.s32 0, %v205
      %v207 = vrot.slane %v202, %v206
      %v209 = vadd.f32 %v195, %v207
      %v210 = vadd.f32 %v196, %v207
      %v211 = vadd.f32 %v197, %v207
      %v212 = vadd.f32 %v198, %v207
      %v213 = vadd.f32 %v199, %v207
      %v214 = vadd.f32 %v200, %v207
      %v215 = vadd.f32 %v201, %v207
      %v216 = vmax.f32 %v209, 0.0
      %v217 = vmax.f32 %v210, 0.0
      %v218 = vmax.f32 %v211, 0.0
      %v219 = vmax.f32 %v212, 0.0
      %v220 = vmax.f32 %v213, 0.0
      %v221 = vmax.f32 %v214, 0.0
      %v222 = vmax.f32 %v215, 0.0
      %223 = vst [vmem:[%s172] sm:$0xff] %v216
      %224 = vst [vmem:[%s172 + $0x8] sm:$0xff] %v217
      %225 = vst [vmem:[%s172 + $0x10] sm:$0xff] %v218
      %226 = vst [vmem:[%s172 + $0x18] sm:$0xff] %v219
      %227 = vst [vmem:[%s172 + $0x20] sm:$0xff] %v220
      %228 = vst [vmem:[%s172 + $0x28] sm:$0xff] %v221
      %229 = vst [vmem:[%s172 + $0x30] sm:$0xff] %v222
      %s230 = smul.u32 7, %s14
      %p231 = scmp.lt.s32.totalorder %s230, 13
      %s232 = scalar_select %p231, %s230, 13
      %s233 = smul.addr %s232, 8
      %s234 = scalar_lea.vmem %s3, %s233
      // Predicated region
      $region33: #{inception_b_forward.16} parent=31 // pred_check
        %p235 = pneg %p100
      $region34: #{inception_b_forward.16} parent=31 // pred_check_branch
        %237 = sbr.rel (%p235) target = $region36
      $region35: #{inception_b_forward.16} parent=31 // pred_region
        %s238 = smul.u32 7, %s14
      $region36: #{inception_b_forward.16} parent=31 // pred_fallthru
        _
    $region32: #{inception_b_forward.16} parent=5 // pred_fallthru
      _
    %p239 = scmp.le.s32.totalorder 2, %s9
    // Predicated region
    $region37: #{inception_b_forward.16} parent=5 // pred_check
      %p240 = pneg %p239
    $region38: #{inception_b_forward.16} parent=5 // pred_check_branch
      %242 = sbr.rel (%p240) target = $region40
    $region39: #{inception_b_forward.16} parent=5 // pred_region
      %s243 = ssub.s32 %s9, 2
      // Predicated region
      $region41: #{inception_b_forward.16} parent=39 // pred_check
        %p244 = pneg %p106
      $region42: #{inception_b_forward.16} parent=39 // pred_check_branch
        %246 = sbr.rel (%p244) target = $region44
      $region43: #{inception_b_forward.16} parent=39 // pred_region
        %s247 = smul.u32 7, %s15
        %p248 = scmp.lt.s32.totalorder %s247, 13
        %s249 = scalar_select %p248, %s247, 13
        %s250 = smul.addr %s249, 8
        %s251 = scalar_lea.vmem %s3, %s250
      $region44: #{inception_b_forward.16} parent=39 // pred_fallthru
        _
    $region40: #{inception_b_forward.16} parent=5 // pred_fallthru
      _
  $region6: #{inception_b_forward.16} parent=0 // loop_footer
    %s13 = sadd.s32 1, %s9
  $region7: #{inception_b_forward.16} parent=0 // loop_footer_branch
    %8 = sbr.rel target = $region3
  $region8: #{inception_b_forward.16} parent=0 // loop_exit
    _

// kernel: inception_b_forward.10
$region0: #{inception_b_forward.10}
  #allocation0 [shape = 'u32[]', space=smem, size = 0x4, offset = 0x4, fixed_abs, tag = 'smem constant byte address 0x4 - core index']
  #allocation1 [shape = 'u32[144,128]{1,0:T(1,128)}', space=vmem, size = 0x12000, scoped, tag = 'internal scratch']
  %s0 = inlined_call_operand.vmem [shape: bf16[112,384], index: 0, kind: input, shape index: {}]
  %s1 = inlined_call_operand.vmem [shape: f32[1,384], index: 1, kind: input, shape index: {}]
  %s2 = inlined_call_operand.vmem [shape: f32[1,384], index: 2, kind: input, shape index: {}]
  %s3 = inlined_call_operand.vmem [shape: f32[112,384], index: 3, kind: output, shape index: {}]
  %s4 = sld [smem:[#allocation0]]
  $region45: #{inception_b_forward.10} parent=0
    _
  %s6 = ssub.s32 1, %s4
  %s7 = scalar_select 0, %s6, %s4
  loop: start=0, step=1, limit=4
  $region2: #{inception_b_forward.10} parent=0 // loop_pre_header
    _
  $region3: #{inception_b_forward.10} parent=0 // loop_header
    %s9 = sphi 0, %s13
    %p10 = scmp.ge.s32.totalorder %s9, 4
    %s19 = sphi 0, %s21
    %s22 = sphi 0, %s19
    %s23 = sphi 0, %s22
    %s39 = sphi 0, %s23
    %s43 = sphi 0, %s43
    %s45 = sphi 0, %s43
    %s46 = sphi 0, %s45
    %s60 = sphi 0, %s46
    %s64 = sphi 0, %s64
    %s66 = sphi 0, %s64
    %s67 = sphi 0, %s66
    %s81 = sphi 0, %s67
    %s87 = sphi 0, %s89
    %s90 = sphi 0, %s87
    %s91 = sphi 0, %s90
    %s107 = sphi 0, %s91
  $region4: #{inception_b_forward.10} parent=0 // loop_header_branch
    %12 = sbr.rel (%p10) target = $region8
  $region5: #{inception_b_forward.10} parent=0 // loop_body
    %s14 = ssub.s32 %s9, 1
    %s15 = ssub.s32 %s9, 2
    %s16 = sadd.s32 %s9, 1
    %s17 = ssub.s32 %s9, %s16
    %p18 = scmp.eq.s32.totalorder %s17, 0
    %s20 = sadd.s32 %s19, 1
    %s21 = scalar_select %p18, %s19, %s20
    %p24 = pneg %p18
    %p25 = scmp.eq.s32.totalorder %s9, 1
    %p26 = por %p24, %p25
    %p27 = scmp.ne.s32.totalorder %s19, %s22
    %p28 = scmp.eq.s32.totalorder %s9, 0
    %p29 = por %p27, %p28
    %p30 = scmp.ne.s32.totalorder %s19, %s22
    %p31 = scmp.eq.s32.totalorder %s14, 1
    %p32 = por %p30, %p31
    %p33 = scmp.ne.s32.totalorder %s22, %s23
    %p34 = scmp.eq.s32.totalorder %s14, 0
    %p35 = por %p33, %p34
    %p36 = scmp.ne.s32.totalorder %s22, %s23
    %p37 = scmp.eq.s32.totalorder %s15, 1
    %p38 = por %p36, %p37
    %p40 = scmp.ne.s32.totalorder %s23, %s39
    %p41 = scmp.eq.s32.totalorder %s15, 0
    %p42 = por %p40, %p41
    %s44 = sadd.s32 %s43, 1
    %p47 = scmp.eq.s32.totalorder %s9, 1
    %p48 = scmp.ne.s32.totalorder %s43, %s45
    %p49 = scmp.eq.s32.totalorder %s9, 0
    %p50 = por %p48, %p49
    %p51 = scmp.ne.s32.totalorder %s43, %s45
    %p52 = scmp.eq.s32.totalorder %s14, 1
    %p53 = por %p51, %p52
    %p54 = scmp.ne.s32.totalorder %s45, %s46
    %p55 = scmp.eq.s32.totalorder %s14, 0
    %p56 = por %p54, %p55
    %p57 = scmp.ne.s32.totalorder %s45, %s46
    %p58 = scmp.eq.s32.totalorder %s15, 1
    %p59 = por %p57, %p58
    %p61 = scmp.ne.s32.totalorder %s46, %s60
    %p62 = scmp.eq.s32.totalorder %s15, 0
    %p63 = por %p61, %p62
    %s65 = sadd.s32 %s64, 1
    %p68 = scmp.eq.s32.totalorder %s9, 1
    %p69 = scmp.ne.s32.totalorder %s64, %s66
    %p70 = scmp.eq.s32.totalorder %s9, 0
    %p71 = por %p69, %p70
    %p72 = scmp.ne.s32.totalorder %s64, %s66
    %p73 = scmp.eq.s32.totalorder %s14, 1
    %p74 = por %p72, %p73
    %p75 = scmp.ne.s32.totalorder %s66, %s67
    %p76 = scmp.eq.s32.totalorder %s14, 0
    %p77 = por %p75, %p76
    %p78 = scmp.ne.s32.totalorder %s66, %s67
    %p79 = scmp.eq.s32.totalorder %s15, 1
    %p80 = por %p78, %p79
    %p82 = scmp.ne.s32.totalorder %s67, %s81
    %p83 = scmp.eq.s32.totalorder %s15, 0
    %p84 = por %p82, %p83
    %s85 = ssub.s32 %s9, %s16
    %p86 = scmp.eq.s32.totalorder %s85, 0
    %s88 = sadd.s32 %s87, 1
    %s89 = scalar_select %p86, %s87, %s88
    %p92 = pneg %p86
    %p93 = scmp.eq.s32.totalorder %s9, 1
    %p94 = por %p92, %p93
    %p95 = scmp.ne.s32.totalorder %s87, %s90
    %p96 = scmp.eq.s32.totalorder %s9, 0
    %p97 = por %p95, %p96
    %p98 = scmp.ne.s32.totalorder %s87, %s90
    %p99 = scmp.eq.s32.totalorder %s14, 1
    %p100 = por %p98, %p99
    %p101 = scmp.ne.s32.totalorder %s90, %s91
    %p102 = scmp.eq.s32.totalorder %s14, 0
    %p103 = por %p101, %p102
    %p104 = scmp.ne.s32.totalorder %s90, %s91
    %p105 = scmp.eq.s32.totalorder %s15, 1
    %p106 = por %p104, %p105
    %p108 = scmp.ne.s32.totalorder %s91, %s107
    %p109 = scmp.eq.s32.totalorder %s15, 0
    %p110 = por %p108, %p109
    %p111 = scmp.le.s32.totalorder 1, %s9
    %p112 = scmp.lt.s32.totalorder %s9, 3
    %p113 = pnand %p111, %p112
    %p114 = pneg %p113
    // Predicated region
    $region9: #{inception_b_forward.10} parent=5 // pred_check
      _
    $region10: #{inception_b_forward.10} parent=5 // pred_check_branch
      %116 = sbr.rel (%p113) target = $region12
    $region11: #{inception_b_forward.10} parent=5 // pred_region
      %s117 = ssub.s32 %s9, 1
      // Predicated region
      $region13: #{inception_b_forward.10} parent=11 // pred_check
        %p118 = pneg %p56
      $region14: #{inception_b_forward.10} parent=11 // pred_check_branch
        %120 = sbr.rel (%p118) target = $region16
      $region15: #{inception_b_forward.10} parent=11 // pred_region
        _
      $region16: #{inception_b_forward.10} parent=11 // pred_fallthru
        _
      // Predicated region
      $region17: #{inception_b_forward.10} parent=11 // pred_check
        %p121 = pneg %p77
      $region18: #{inception_b_forward.10} parent=11 // pred_check_branch
        %123 = sbr.rel (%p121) target = $region20
      $region19: #{inception_b_forward.10} parent=11 // pred_region
        _
      $region20: #{inception_b_forward.10} parent=11 // pred_fallthru
        _
    $region12: #{inception_b_forward.10} parent=5 // pred_fallthru
      _
    %p124 = scmp.lt.s32.totalorder %s9, 2
    // Predicated region
    $region21: #{inception_b_forward.10} parent=5 // pred_check
      %p125 = pneg %p124
    $region22: #{inception_b_forward.10} parent=5 // pred_check_branch
      %127 = sbr.rel (%p125) target = $region24
    $region23: #{inception_b_forward.10} parent=5 // pred_region
      // Predicated region
      $region25: #{inception_b_forward.10} parent=23 // pred_check
        %p128 = pneg %p29
      $region26: #{inception_b_forward.10} parent=23 // pred_check_branch
        %130 = sbr.rel (%p128) target = $region28
      $region27: #{inception_b_forward.10} parent=23 // pred_region
        %s131 = smul.u32 7, %s9
        %p132 = scmp.lt.s32.totalorder %s131, 13
        %s133 = scalar_select %p132, %s131, 13
        %s134 = smul.addr %s133, 3
        %s135 = smul.addr %s134, 4
        %s136 = scalar_lea.vmem %s0, %s135
        %s137 = smul.u32 7, %s9
      $region28: #{inception_b_forward.10} parent=23 // pred_fallthru
        _
    $region24: #{inception_b_forward.10} parent=5 // pred_fallthru
      _
    %p138 = scmp.le.s32.totalorder 1, %s9
    %p139 = scmp.lt.s32.totalorder %s9, 3
    %p140 = pnand %p138, %p139
    %p141 = pneg %p140
    // Predicated region
    $region29: #{inception_b_forward.10} parent=5 // pred_check
      _
    $region30: #{inception_b_forward.10} parent=5 // pred_check_branch
      %143 = sbr.rel (%p140) target = $region32
    $region31: #{inception_b_forward.10} parent=5 // pred_region
      %s144 = ssub.s32 %s9, 1
      %s145 = smul.u32 7, %s14
      %p146 = scmp.lt.s32.totalorder %s145, 13
      %s147 = scalar_select %p146, %s145, 13
      %s148 = smul.addr %s147, 3
      %s149 = smul.addr %s148, 4
      %s150 = scalar_lea.vmem %s0, %s149
      %p151 = pneg %p35
      %p152 = pneg %p32
      %p153 = pneg %p56
      %p154 = pneg %p53
      %p155 = pneg %p77
      %p156 = pneg %p74
      %p157 = pneg %p103
      %p158 = pneg %p100
      %s159 = smul.u32 7, %s14
      %p160 = scmp.lt.s32.totalorder %s159, 13
      %s161 = scalar_select %p160, %s159, 13
      %s162 = smul.addr %s161, 3
      %s163 = smul.addr %s162, 8
      %s164 = scalar_lea.vmem %s3, %s163
      %s165 = smul.u32 7, %s14
      %p166 = scmp.lt.s32.totalorder %s165, 13
      %s167 = scalar_select %p166, %s165, 13
      %s168 = smul.addr %s167, 3
      %s169 = smul.addr %s168, 4
      %s170 = scalar_lea.vmem %s0, %s169
      %s171 = smul.u32 7, %s14
      %s172 = smul.u32 7, %s14
      %p173 = scmp.lt.s32.totalorder %s172, 13
      %s174 = scalar_select %p173, %s172, 13
      %s175 = smul.addr %s174, 3
      %s176 = smul.addr %s175, 8
      %s177 = scalar_lea.vmem %s3, %s176
      %s178 = smul.u32 7, %s14
      %v179 = vld [vmem:[%s170] sm:$0xff]
      %v180 = vld [vmem:[%s170 + $0x8] sm:$0xf]
      %v181 = vld [vmem:[%s170 + $0xc] sm:$0xff]
      %v182 = vld [vmem:[%s170 + $0x14] sm:$0xf]
      %v183 = vld [vmem:[%s170 + $0x18] sm:$0xff]
      %v184 = vld [vmem:[%s170 + $0x20] sm:$0xf]
      %v185 = vld [vmem:[%s170 + $0x24] sm:$0xff]
      %v186 = vld [vmem:[%s170 + $0x2c] sm:$0xf]
      %v187 = vld [vmem:[%s170 + $0x30] sm:$0xff]
      %v188 = vld [vmem:[%s170 + $0x38] sm:$0xf]
      %v189 = vld [vmem:[%s170 + $0x3c] sm:$0xff]
      %v190 = vld [vmem:[%s170 + $0x44] sm:$0xf]
      %v191 = vld [vmem:[%s170 + $0x48] sm:$0xff]
      %v192 = vld [vmem:[%s170 + $0x50] sm:$0xf]
      %v193 = vunpack.c.l.bf16 %v179
      %v194 = vunpack.c.h.bf16 %v179
      %v195 = vunpack.c.l.bf16 %v180
      %v196 = vunpack.c.l.bf16 %v181
      %v197 = vunpack.c.h.bf16 %v181
      %v198 = vunpack.c.l.bf16 %v182
      %v199 = vunpack.c.l.bf16 %v183
      %v200 = vunpack.c.h.bf16 %v183
      %v201 = vunpack.c.l.bf16 %v184
      %v202 = vunpack.c.l.bf16 %v185
      %v203 = vunpack.c.h.bf16 %v185
      %v204 = vunpack.c.l.bf16 %v186
      %v205 = vunpack.c.l.bf16 %v187
      %v206 = vunpack.c.h.bf16 %v187
      %v207 = vunpack.c.l.bf16 %v188
      %v208 = vunpack.c.l.bf16 %v189
      %v209 = vunpack.c.h.bf16 %v189
      %v210 = vunpack.c.l.bf16 %v190
      %v211 = vunpack.c.l.bf16 %v191
      %v212 = vunpack.c.h.bf16 %v191
      %v213 = vunpack.c.l.bf16 %v192
      %v214 = vld [vmem:[%s1] sm:$0x7]
      %v216 = vlaneseq
      %v217 = vshrl.u32 %v216, 7
      %v218 = vsub.s32 0, %v217
      %v219 = vrot.slane %v214, %v218
      %v220 = vlaneseq
      %v221 = vshrl.u32 %v220, 7
      %v222 = vsub.s32 1, %v221
      %v223 = vrot.slane %v214, %v222
      %v224 = vlaneseq
      %v225 = vshrl.u32 %v224, 7
      %v226 = vsub.s32 2, %v225
      %v227 = vrot.slane %v214, %v226
      %v231 = vmul.f32 %v193, %v219
      %v232 = vmul.f32 %v194, %v223
      %v233 = vmul.f32 %v195, %v227
      %v234 = vmul.f32 %v196, %v219
      %v235 = vmul.f32 %v197, %v223
      %v236 = vmul.f32 %v198, %v227
      %v237 = vmul.f32 %v199, %v219
      %v238 = vmul.f32 %v200, %v223
      %v239 = vmul.f32 %v201, %v227
      %v240 = vmul.f32 %v202, %v219
      %v241 = vmul.f32 %v203, %v223
      %v242 = vmul.f32 %v204, %v227
      %v243 = vmul.f32 %v205, %v219
      %v244 = vmul.f32 %v206, %v223
      %v245 = vmul.f32 %v207, %v227
      %v246 = vmul.f32 %v208, %v219
      %v247 = vmul.f32 %v209, %v223
      %v248 = vmul.f32 %v210, %v227
      %v249 = vmul.f32 %v211, %v219
      %v250 = vmul.f32 %v212, %v223
      %v251 = vmul.f32 %v213, %v227
      %v252 = vld [vmem:[%s2] sm:$0x7]
      %v254 = vlaneseq
      %v255 = vshrl.u32 %v254, 7
      %v256 = vsub.s32 0, %v255
      %v257 = vrot.slane %v252, %v256
      %v258 = vlaneseq
      %v259 = vshrl.u32 %v258, 7
      %v260 = vsub.s32 1, %v259
      %v261 = vrot.slane %v252, %v260
      %v262 = vlaneseq
      %v263 = vshrl.u32 %v262, 7
      %v264 = vsub.s32 2, %v263
      %v265 = vrot.slane %v252, %v264
      %v269 = vadd.f32 %v231, %v257
      %v270 = vadd.f32 %v232, %v261
      %v271 = vadd.f32 %v233, %v265
      %v272 = vadd.f32 %v234, %v257
      %v273 = vadd.f32 %v235, %v261
      %v274 = vadd.f32 %v236, %v265
      %v275 = vadd.f32 %v237, %v257
      %v276 = vadd.f32 %v238, %v261
      %v277 = vadd.f32 %v239, %v265
      %v278 = vadd.f32 %v240, %v257
      %v279 = vadd.f32 %v241, %v261
      %v280 = vadd.f32 %v242, %v265
      %v281 = vadd.f32 %v243, %v257
      %v282 = vadd.f32 %v244, %v261
      %v283 = vadd.f32 %v245, %v265
      %v284 = vadd.f32 %v246, %v257
      %v285 = vadd.f32 %v247, %v261
      %v286 = vadd.f32 %v248, %v265
      %v287 = vadd.f32 %v249, %v257
      %v288 = vadd.f32 %v250, %v261
      %v289 = vadd.f32 %v251, %v265
      %v290 = vmax.f32 %v269, 0.0
      %v291 = vmax.f32 %v270, 0.0
      %v292 = vmax.f32 %v271, 0.0
      %v293 = vmax.f32 %v272, 0.0
      %v294 = vmax.f32 %v273, 0.0
      %v295 = vmax.f32 %v274, 0.0
      %v296 = vmax.f32 %v275, 0.0
      %v297 = vmax.f32 %v276, 0.0
      %v298 = vmax.f32 %v277, 0.0
      %v299 = vmax.f32 %v278, 0.0
      %v300 = vmax.f32 %v279, 0.0
      %v301 = vmax.f32 %v280, 0.0
      %v302 = vmax.f32 %v281, 0.0
      %v303 = vmax.f32 %v282, 0.0
      %v304 = vmax.f32 %v283, 0.0
      %v305 = vmax.f32 %v284, 0.0
      %v306 = vmax.f32 %v285, 0.0
      %v307 = vmax.f32 %v286, 0.0
      %v308 = vmax.f32 %v287, 0.0
      %v309 = vmax.f32 %v288, 0.0
      %v310 = vmax.f32 %v289, 0.0
      %311 = vst [vmem:[%s177] sm:$0xff] %v290
      %312 = vst [vmem:[%s177 + $0x8] sm:$0xff] %v291
      %313 = vst [vmem:[%s177 + $0x10] sm:$0xff] %v292
      %314 = vst [vmem:[%s177 + $0x18] sm:$0xff] %v293
      %315 = vst [vmem:[%s177 + $0x20] sm:$0xff] %v294
      %316 = vst [vmem:[%s177 + $0x28] sm:$0xff] %v295
      %317 = vst [vmem:[%s177 + $0x30] sm:$0xff] %v296
      %318 = vst [vmem:[%s177 + $0x38] sm:$0xff] %v297
      %319 = vst [vmem:[%s177 + $0x40] sm:$0xff] %v298
      %320 = vst [vmem:[%s177 + $0x48] sm:$0xff] %v299
      %321 = vst [vmem:[%s177 + $0x50] sm:$0xff] %v300
      %322 = vst [vmem:[%s177 + $0x58] sm:$0xff] %v301
      %323 = vst [vmem:[%s177 + $0x60] sm:$0xff] %v302
      %324 = vst [vmem:[%s177 + $0x68] sm:$0xff] %v303
      %325 = vst [vmem:[%s177 + $0x70] sm:$0xff] %v304
      %326 = vst [vmem:[%s177 + $0x78] sm:$0xff] %v305
      %327 = vst [vmem:[%s177 + $0x80] sm:$0xff] %v306
      %328 = vst [vmem:[%s177 + $0x88] sm:$0xff] %v307
      %329 = vst [vmem:[%s177 + $0x90] sm:$0xff] %v308
      %330 = vst [vmem:[%s177 + $0x98] sm:$0xff] %v309
      %331 = vst [vmem:[%s177 + $0xa0] sm:$0xff] %v310
      %s332 = smul.u32 7, %s14
      %p333 = scmp.lt.s32.totalorder %s332, 13
      %s334 = scalar_select %p333, %s332, 13
      %s335 = smul.addr %s334, 3
      %s336 = smul.addr %s335, 8
      %s337 = scalar_lea.vmem %s3, %s336
      // Predicated region
      $region33: #{inception_b_forward.10} parent=31 // pred_check
        %p338 = pneg %p100
      $region34: #{inception_b_forward.10} parent=31 // pred_check_branch
        %340 = sbr.rel (%p338) target = $region36
      $region35: #{inception_b_forward.10} parent=31 // pred_region
        %s341 = smul.u32 7, %s14
      $region36: #{inception_b_forward.10} parent=31 // pred_fallthru
        _
    $region32: #{inception_b_forward.10} parent=5 // pred_fallthru
      _
    %p342 = scmp.le.s32.totalorder 2, %s9
    // Predicated region
    $region37: #{inception_b_forward.10} parent=5 // pred_check
      %p343 = pneg %p342
    $region38: #{inception_b_forward.10} parent=5 // pred_check_branch
      %345 = sbr.rel (%p343) target = $region40
    $region39: #{inception_b_forward.10} parent=5 // pred_region
      %s346 = ssub.s32 %s9, 2
      // Predicated region
      $region41: #{inception_b_forward.10} parent=39 // pred_check
        %p347 = pneg %p106
      $region42: #{inception_b_forward.10} parent=39 // pred_check_branch
        %349 = sbr.rel (%p347) target = $region44
      $region43: #{inception_b_forward.10} parent=39 // pred_region
        %s350 = smul.u32 7, %s15
        %p351 = scmp.lt.s32.totalorder %s350, 13
        %s352 = scalar_select %p351, %s350, 13
        %s353 = smul.addr %s352, 3
        %s354 = smul.addr %s353, 8
        %s355 = scalar_lea.vmem %s3, %s354
      $region44: #{inception_b_forward.10} parent=39 // pred_fallthru
        _
    $region40: #{inception_b_forward.10} parent=5 // pred_fallthru
      _
  $region6: #{inception_b_forward.10} parent=0 // loop_footer
    %s13 = sadd.s32 1, %s9
  $region7: #{inception_b_forward.10} parent=0 // loop_footer_branch
    %8 = sbr.rel target = $region3
  $region8: #{inception_b_forward.10} parent=0 // loop_exit
    _

// kernel: inception_b_forward.9
$region0: #{inception_b_forward.9}
  #allocation0 [shape = 'u32[]', space=smem, size = 0x4, offset = 0x4, fixed_abs, tag = 'smem constant byte address 0x4 - core index']
  #allocation1 [shape = 'u32[144,128]{1,0:T(1,128)}', space=vmem, size = 0x12000, scoped, tag = 'internal scratch']
  %s0 = inlined_call_operand.vmem [shape: bf16[112,128], index: 0, kind: input, shape index: {}]
  %s1 = inlined_call_operand.vmem [shape: bf16[128,384], index: 1, kind: input, shape index: {}]
  %s2 = inlined_call_operand.vmem [shape: bf16[112,384], index: 2, kind: output, shape index: {0}]
  %s3 = inlined_call_operand.vmem [shape: f32[2,2,384], index: 3, kind: output, shape index: {1}]
  %4 = xla_tuple %s2, %s3
  %s5 = sld [smem:[#allocation0]]
  $region49: #{inception_b_forward.9} parent=0
    _
  %s7 = ssub.s32 1, %s5
  %s8 = scalar_select 0, %s7, %s5
  loop: start=0, step=1, limit=4
  $region2: #{inception_b_forward.9} parent=0 // loop_pre_header
    _
  $region3: #{inception_b_forward.9} parent=0 // loop_header
    %s10 = sphi 0, %s14
    %p11 = scmp.ge.s32.totalorder %s10, 4
    %s20 = sphi 0, %s22
    %s23 = sphi 0, %s20
    %s24 = sphi 0, %s23
    %s40 = sphi 0, %s24
    %s44 = sphi 0, %s44
    %s46 = sphi 0, %s44
    %s47 = sphi 0, %s46
    %s61 = sphi 0, %s47
    %s67 = sphi 0, %s69
    %s70 = sphi 0, %s67
    %s71 = sphi 0, %s70
    %s87 = sphi 0, %s71
    %s93 = sphi 0, %s95
    %s96 = sphi 0, %s93
    %s97 = sphi 0, %s96
    %s113 = sphi 0, %s97
  $region4: #{inception_b_forward.9} parent=0 // loop_header_branch
    %13 = sbr.rel (%p11) target = $region8
  $region5: #{inception_b_forward.9} parent=0 // loop_body
    %s15 = ssub.s32 %s10, 1
    %s16 = ssub.s32 %s10, 2
    %s17 = sadd.s32 %s10, 1
    %s18 = ssub.s32 %s10, %s17
    %p19 = scmp.eq.s32.totalorder %s18, 0
    %s21 = sadd.s32 %s20, 1
    %s22 = scalar_select %p19, %s20, %s21
    %p25 = pneg %p19
    %p26 = scmp.eq.s32.totalorder %s10, 1
    %p27 = por %p25, %p26
    %p28 = scmp.ne.s32.totalorder %s20, %s23
    %p29 = scmp.eq.s32.totalorder %s10, 0
    %p30 = por %p28, %p29
    %p31 = scmp.ne.s32.totalorder %s20, %s23
    %p32 = scmp.eq.s32.totalorder %s15, 1
    %p33 = por %p31, %p32
    %p34 = scmp.ne.s32.totalorder %s23, %s24
    %p35 = scmp.eq.s32.totalorder %s15, 0
    %p36 = por %p34, %p35
    %p37 = scmp.ne.s32.totalorder %s23, %s24
    %p38 = scmp.eq.s32.totalorder %s16, 1
    %p39 = por %p37, %p38
    %p41 = scmp.ne.s32.totalorder %s24, %s40
    %p42 = scmp.eq.s32.totalorder %s16, 0
    %p43 = por %p41, %p42
    %s45 = sadd.s32 %s44, 1
    %p48 = scmp.eq.s32.totalorder %s10, 1
    %p49 = scmp.ne.s32.totalorder %s44, %s46
    %p50 = scmp.eq.s32.totalorder %s10, 0
    %p51 = por %p49, %p50
    %p52 = scmp.ne.s32.totalorder %s44, %s46
    %p53 = scmp.eq.s32.totalorder %s15, 1
    %p54 = por %p52, %p53
    %p55 = scmp.ne.s32.totalorder %s46, %s47
    %p56 = scmp.eq.s32.totalorder %s15, 0
    %p57 = por %p55, %p56
    %p58 = scmp.ne.s32.totalorder %s46, %s47
    %p59 = scmp.eq.s32.totalorder %s16, 1
    %p60 = por %p58, %p59
    %p62 = scmp.ne.s32.totalorder %s47, %s61
    %p63 = scmp.eq.s32.totalorder %s16, 0
    %p64 = por %p62, %p63
    %s65 = ssub.s32 %s10, %s17
    %p66 = scmp.eq.s32.totalorder %s65, 0
    %s68 = sadd.s32 %s67, 1
    %s69 = scalar_select %p66, %s67, %s68
    %p72 = pneg %p66
    %p73 = scmp.eq.s32.totalorder %s10, 1
    %p74 = por %p72, %p73
    %p75 = scmp.ne.s32.totalorder %s67, %s70
    %p76 = scmp.eq.s32.totalorder %s10, 0
    %p77 = por %p75, %p76
    %p78 = scmp.ne.s32.totalorder %s67, %s70
    %p79 = scmp.eq.s32.totalorder %s15, 1
    %p80 = por %p78, %p79
    %p81 = scmp.ne.s32.totalorder %s70, %s71
    %p82 = scmp.eq.s32.totalorder %s15, 0
    %p83 = por %p81, %p82
    %p84 = scmp.ne.s32.totalorder %s70, %s71
    %p85 = scmp.eq.s32.totalorder %s16, 1
    %p86 = por %p84, %p85
    %p88 = scmp.ne.s32.totalorder %s71, %s87
    %p89 = scmp.eq.s32.totalorder %s16, 0
    %p90 = por %p88, %p89
    %s91 = ssub.s32 %s10, %s17
    %p92 = scmp.eq.s32.totalorder %s91, 0
    %s94 = sadd.s32 %s93, 1
    %s95 = scalar_select %p92, %s93, %s94
    %p98 = pneg %p92
    %p99 = scmp.eq.s32.totalorder %s10, 1
    %p100 = por %p98, %p99
    %p101 = scmp.ne.s32.totalorder %s93, %s96
    %p102 = scmp.eq.s32.totalorder %s10, 0
    %p103 = por %p101, %p102
    %p104 = scmp.ne.s32.totalorder %s93, %s96
    %p105 = scmp.eq.s32.totalorder %s15, 1
    %p106 = por %p104, %p105
    %p107 = scmp.ne.s32.totalorder %s96, %s97
    %p108 = scmp.eq.s32.totalorder %s15, 0
    %p109 = por %p107, %p108
    %p110 = scmp.ne.s32.totalorder %s96, %s97
    %p111 = scmp.eq.s32.totalorder %s16, 1
    %p112 = por %p110, %p111
    %p114 = scmp.ne.s32.totalorder %s97, %s113
    %p115 = scmp.eq.s32.totalorder %s16, 0
    %p116 = por %p114, %p115
    %p117 = scmp.le.s32.totalorder 1, %s10
    %p118 = scmp.lt.s32.totalorder %s10, 3
    %p119 = pnand %p117, %p118
    %p120 = pneg %p119
    // Predicated region
    $region9: #{inception_b_forward.9} parent=5 // pred_check
      _
    $region10: #{inception_b_forward.9} parent=5 // pred_check_branch
      %122 = sbr.rel (%p119) target = $region12
    $region11: #{inception_b_forward.9} parent=5 // pred_region
      %s123 = ssub.s32 %s10, 1
      // Predicated region
      $region13: #{inception_b_forward.9} parent=11 // pred_check
        %p124 = pneg %p57
      $region14: #{inception_b_forward.9} parent=11 // pred_check_branch
        %126 = sbr.rel (%p124) target = $region16
      $region15: #{inception_b_forward.9} parent=11 // pred_region
        _
      $region16: #{inception_b_forward.9} parent=11 // pred_fallthru
        _
    $region12: #{inception_b_forward.9} parent=5 // pred_fallthru
      _
    %p127 = scmp.lt.s32.totalorder %s10, 2
    // Predicated region
    $region17: #{inception_b_forward.9} parent=5 // pred_check
      %p128 = pneg %p127
    $region18: #{inception_b_forward.9} parent=5 // pred_check_branch
      %130 = sbr.rel (%p128) target = $region20
    $region19: #{inception_b_forward.9} parent=5 // pred_region
      // Predicated region
      $region21: #{inception_b_forward.9} parent=19 // pred_check
        %p131 = pneg %p30
      $region22: #{inception_b_forward.9} parent=19 // pred_check_branch
        %133 = sbr.rel (%p131) target = $region24
      $region23: #{inception_b_forward.9} parent=19 // pred_region
        %s134 = smul.u32 7, %s10
        %p135 = scmp.lt.s32.totalorder %s134, 13
        %s136 = scalar_select %p135, %s134, 13
        %s137 = smul.addr %s136, 4
        %s138 = scalar_lea.vmem %s0, %s137
        %s139 = smul.u32 7, %s10
      $region24: #{inception_b_forward.9} parent=19 // pred_fallthru
        _
    $region20: #{inception_b_forward.9} parent=5 // pred_fallthru
      _
    %p140 = scmp.le.s32.totalorder 1, %s10
    %p141 = scmp.lt.s32.totalorder %s10, 3
    %p142 = pnand %p140, %p141
    %p143 = pneg %p142
    // Predicated region
    $region25: #{inception_b_forward.9} parent=5 // pred_check
      _
    $region26: #{inception_b_forward.9} parent=5 // pred_check_branch
      %145 = sbr.rel (%p142) target = $region28
    $region27: #{inception_b_forward.9} parent=5 // pred_region
      %s146 = ssub.s32 %s10, 1
      %s147 = smul.u32 7, %s15
      %p148 = scmp.lt.s32.totalorder %s147, 13
      %s149 = scalar_select %p148, %s147, 13
      %s150 = smul.addr %s149, 4
      %s151 = scalar_lea.vmem %s0, %s150
      %p152 = pneg %p36
      %p153 = pneg %p33
      %p154 = pneg %p57
      %p155 = pneg %p54
      %p156 = pneg %p83
      %p157 = pneg %p80
      %s158 = smul.u32 7, %s15
      %p159 = scmp.lt.s32.totalorder %s158, 13
      %s160 = scalar_select %p159, %s158, 13
      %s161 = smul.addr %s160, 3
      %s162 = smul.addr %s161, 4
      %s163 = scalar_lea.vmem %s2, %s162
      %p164 = pneg %p109
      %p165 = pneg %p106
      %p166 = scmp.lt.s32.totalorder %s15, 1
      %s167 = scalar_select %p166, %s15, 1
      %s168 = smul.addr %s167, 3
      %s169 = smul.addr %s168, 2
      %s170 = scalar_lea.vmem %s3, %s169
      %s171 = smul.u32 7, %s15
      %p172 = scmp.lt.s32.totalorder %s171, 13
      %s173 = scalar_select %p172, %s171, 13
      %s174 = smul.addr %s173, 4
      %s175 = scalar_lea.vmem %s0, %s174
      %s176 = smul.u32 7, %s15
      %s177 = smul.u32 7, %s15
      %p178 = scmp.lt.s32.totalorder %s177, 13
      %s179 = scalar_select %p178, %s177, 13
      %s180 = smul.addr %s179, 3
      %s181 = smul.addr %s180, 4
      %s182 = scalar_lea.vmem %s2, %s181
      %s183 = smul.u32 7, %s15
      %p184 = scmp.lt.s32.totalorder %s15, 1
      %s185 = scalar_select %p184, %s15, 1
      %s186 = smul.addr %s185, 3
      %s187 = smul.addr %s186, 2
      %s188 = scalar_lea.vmem %s3, %s187
      %v190 = vld [vmem:[%s175] sm:$0xf]
      %v191 = vld [vmem:[%s175 + $0x4] sm:$0xf]
      %v192 = vld [vmem:[%s175 + $0x8] sm:$0xf]
      %v193 = vld [vmem:[%s175 + $0xc] sm:$0xf]
      %v194 = vld [vmem:[%s175 + $0x10] sm:$0xf]
      %v195 = vld [vmem:[%s175 + $0x14] sm:$0xf]
      %v196 = vld [vmem:[%s175 + $0x18] sm:$0xf]
      %v197 = vld [vmem:[%s1] sm:$0xff]
      %v198 = vld [vmem:[%s1 + $0x8] sm:$0xf]
      %v199 = vld [vmem:[%s1 + $0xc] sm:$0xff]
      %v200 = vld [vmem:[%s1 + $0x14] sm:$0xf]
      %v201 = vld [vmem:[%s1 + $0x18] sm:$0xff]
      %v202 = vld [vmem:[%s1 + $0x20] sm:$0xf]
      %v203 = vld [vmem:[%s1 + $0x24] sm:$0xff]
      %v204 = vld [vmem:[%s1 + $0x2c] sm:$0xf]
      %v205 = vld [vmem:[%s1 + $0x30] sm:$0xff]
      %v206 = vld [vmem:[%s1 + $0x38] sm:$0xf]
      %v207 = vld [vmem:[%s1 + $0x3c] sm:$0xff]
      %v208 = vld [vmem:[%s1 + $0x44] sm:$0xf]
      %v209 = vld [vmem:[%s1 + $0x48] sm:$0xff]
      %v210 = vld [vmem:[%s1 + $0x50] sm:$0xf]
      %v211 = vld [vmem:[%s1 + $0x54] sm:$0xff]
      %v212 = vld [vmem:[%s1 + $0x5c] sm:$0xf]
      %v213 = vld [vmem:[%s1 + $0x60] sm:$0xff]
      %v214 = vld [vmem:[%s1 + $0x68] sm:$0xf]
      %v215 = vld [vmem:[%s1 + $0x6c] sm:$0xff]
      %v216 = vld [vmem:[%s1 + $0x74] sm:$0xf]
      %v217 = vld [vmem:[%s1 + $0x78] sm:$0xff]
      %v218 = vld [vmem:[%s1 + $0x80] sm:$0xf]
      %v219 = vld [vmem:[%s1 + $0x84] sm:$0xff]
      %v220 = vld [vmem:[%s1 + $0x8c] sm:$0xf]
      %v221 = vld [vmem:[%s1 + $0x90] sm:$0xff]
      %v222 = vld [vmem:[%s1 + $0x98] sm:$0xf]
      %v223 = vld [vmem:[%s1 + $0x9c] sm:$0xff]
      %v224 = vld [vmem:[%s1 + $0xa4] sm:$0xf]
      %v225 = vld [vmem:[%s1 + $0xa8] sm:$0xff]
      %v226 = vld [vmem:[%s1 + $0xb0] sm:$0xf]
      %v227 = vld [vmem:[%s1 + $0xb4] sm:$0xff]
      %v228 = vld [vmem:[%s1 + $0xbc] sm:$0xf]
      %v236 = vunpack.c.l.b16 %v190
      %v237 = vunpack.c.l.b16 %v191
      %v238 = vunpack.c.l.b16 %v192
      %v239 = vunpack.c.l.b16 %v193
      %v240 = vunpack.c.l.b16 %v194
      %v241 = vunpack.c.l.b16 %v195
      %v242 = vunpack.c.l.b16 %v196
      %v243 = vpack.c.b16 %v237, %v236
      %v244 = vpack.c.b16 %v239, %v238
      %v245 = vpack.c.b16 %v241, %v240
      %v246 = vpack.c.b16 %v242, %v242
      %v283 = vunpack.c.l.b16 %v197
      %v284 = vunpack.c.h.b16 %v197
      %v285 = vunpack.c.l.b16 %v198
      %v286 = vunpack.c.l.b16 %v199
      %v287 = vunpack.c.h.b16 %v199
      %v288 = vunpack.c.l.b16 %v200
      %v289 = vunpack.c.l.b16 %v201
      %v290 = vunpack.c.h.b16 %v201
      %v291 = vunpack.c.l.b16 %v202
      %v292 = vunpack.c.l.b16 %v203
      %v293 = vunpack.c.h.b16 %v203
      %v294 = vunpack.c.l.b16 %v204
      %v295 = vunpack.c.l.b16 %v205
      %v296 = vunpack.c.h.b16 %v205
      %v297 = vunpack.c.l.b16 %v206
      %v298 = vunpack.c.l.b16 %v207
      %v299 = vunpack.c.h.b16 %v207
      %v300 = vunpack.c.l.b16 %v208
      %v301 = vunpack.c.l.b16 %v209
      %v302 = vunpack.c.h.b16 %v209
      %v303 = vunpack.c.l.b16 %v210
      %v304 = vunpack.c.l.b16 %v211
      %v305 = vunpack.c.h.b16 %v211
      %v306 = vunpack.c.l.b16 %v212
      %v307 = vunpack.c.l.b16 %v213
      %v308 = vunpack.c.h.b16 %v213
      %v309 = vunpack.c.l.b16 %v214
      %v310 = vunpack.c.l.b16 %v215
      %v311 = vunpack.c.h.b16 %v215
      %v312 = vunpack.c.l.b16 %v216
      %v313 = vunpack.c.l.b16 %v217
      %v314 = vunpack.c.h.b16 %v217
      %v315 = vunpack.c.l.b16 %v218
      %v316 = vunpack.c.l.b16 %v219
      %v317 = vunpack.c.h.b16 %v219
      %v318 = vunpack.c.l.b16 %v220
      %v319 = vunpack.c.l.b16 %v221
      %v320 = vunpack.c.h.b16 %v221
      %v321 = vunpack.c.l.b16 %v222
      %v322 = vunpack.c.l.b16 %v223
      %v323 = vunpack.c.h.b16 %v223
      %v324 = vunpack.c.l.b16 %v224
      %v325 = vunpack.c.l.b16 %v225
      %v326 = vunpack.c.h.b16 %v225
      %v327 = vunpack.c.l.b16 %v226
      %v328 = vunpack.c.l.b16 %v227
      %v329 = vunpack.c.h.b16 %v227
      %v330 = vunpack.c.l.b16 %v228
      %v331 = vpack.c.b16 %v286, %v283
      %v332 = vpack.c.b16 %v287, %v284
      %v333 = vpack.c.b16 %v288, %v285
      %v334 = vpack.c.b16 %v292, %v289
      %v335 = vpack.c.b16 %v293, %v290
      %v336 = vpack.c.b16 %v294, %v291
      %v337 = vpack.c.b16 %v298, %v295
      %v338 = vpack.c.b16 %v299, %v296
      %v339 = vpack.c.b16 %v300, %v297
      %v340 = vpack.c.b16 %v304, %v301
      %v341 = vpack.c.b16 %v305, %v302
      %v342 = vpack.c.b16 %v306, %v303
      %v343 = vpack.c.b16 %v310, %v307
      %v344 = vpack.c.b16 %v311, %v308
      %v345 = vpack.c.b16 %v312, %v309
      %v346 = vpack.c.b16 %v316, %v313
      %v347 = vpack.c.b16 %v317, %v314
      %v348 = vpack.c.b16 %v318, %v315
      %v349 = vpack.c.b16 %v322, %v319
      %v350 = vpack.c.b16 %v323, %v320
      %v351 = vpack.c.b16 %v324, %v321
      %v352 = vpack.c.b16 %v328, %v325
      %v353 = vpack.c.b16 %v329, %v326
      %v354 = vpack.c.b16 %v330, %v327
      %379 = vmatprep.subr.bf16.mxu0 %v332
      %380 = vmatpush1.bf16.msra.mxu0 %v331
      %381 = vmatprep.subr.bf16.mxu0 %v335
      %382 = vmatpush1.bf16.msra.mxu0 %v334
      %383 = vmatprep.subr.bf16.mxu0 %v338
      %384 = vmatpush1.bf16.msra.mxu0 %v337
      %385 = vmatprep.subr.bf16.mxu0 %v341
      %386 = vmatpush1.bf16.msra.mxu0 %v340
      %387 = vmatprep.subr.bf16.mxu0 %v344
      %388 = vmatpush1.bf16.msra.mxu0 %v343
      %389 = vmatprep.subr.bf16.mxu0 %v347
      %390 = vmatpush1.bf16.msra.mxu0 %v346
      %391 = vmatprep.subr.bf16.mxu0 %v350
      %392 = vmatpush1.bf16.msra.mxu0 %v349
      %393 = vmatprep.subr.bf16.mxu0 %v353
      %394 = vmatpush1.bf16.msra.mxu0 %v352
      %395 = vmatprep.subr.bf16.mxu0 0
      %396 = vmatpush1.bf16.msra.mxu0 0
      %397 = vmatprep.subr.bf16.mxu0 0
      %398 = vmatpush1.bf16.msra.mxu0 0
      %399 = vmatprep.subr.bf16.mxu0 0
      %400 = vmatpush1.bf16.msra.mxu0 0
      %401 = vmatprep.subr.bf16.mxu0 0
      %402 = vmatpush1.bf16.msra.mxu0 0
      %403 = vmatprep.subr.bf16.mxu0 0
      %404 = vmatpush1.bf16.msra.mxu0 0
      %405 = vmatprep.subr.bf16.mxu0 0
      %406 = vmatpush1.bf16.msra.mxu0 0
      %407 = vmatprep.subr.bf16.mxu0 0
      %408 = vmatpush1.bf16.msra.mxu0 0
      %409 = vmatprep.subr.bf16.mxu0 0
      %410 = vmatpush1.bf16.msra.mxu0 0
      %411 = vmatprep.mubr.bf16.mxu0 0
      %412 = vmatmul.mubr.bf16.gmra.mrb[0].mxu0 %v243
      %v413 = vpop.f32.mrb[0].mxu0
      %v414 = vadd.f32 0.0, %v413
      %v415 = vpop.f32.mrb[0].mxu0
      %v416 = vadd.f32 0.0, %v415
      %v417 = vpop.f32.mrb[0].mxu0
      %v418 = vadd.f32 0.0, %v417
      %v419 = vpop.f32.mrb[0].mxu0
      %v420 = vadd.f32 0.0, %v419
      %421 = vmatprep.mubr.bf16.mxu0 0
      %422 = vmatmul.mubr.bf16.gmra.mrb[0].mxu0 %v244
      %v423 = vpop.f32.mrb[0].mxu0
      %v424 = vadd.f32 0.0, %v423
      %v425 = vpop.f32.mrb[0].mxu0
      %v426 = vadd.f32 0.0, %v425
      %v427 = vpop.f32.mrb[0].mxu0
      %v428 = vadd.f32 0.0, %v427
      %v429 = vpop.f32.mrb[0].mxu0
      %v430 = vadd.f32 0.0, %v429
      %431 = vmatprep.mubr.bf16.mxu0 0
      %432 = vmatmul.mubr.bf16.gmra.mrb[0].mxu0 %v245
      %v433 = vpop.f32.mrb[0].mxu0
      %v434 = vadd.f32 0.0, %v433
      %v435 = vpop.f32.mrb[0].mxu0
      %v436 = vadd.f32 0.0, %v435
      %v437 = vpop.f32.mrb[0].mxu0
      %v438 = vadd.f32 0.0, %v437
      %v439 = vpop.f32.mrb[0].mxu0
      %v440 = vadd.f32 0.0, %v439
      %441 = vmatprep.mubr.bf16.mxu0 0
      %442 = vmatmul.mubr.bf16.gmra.mrb[0].mxu0 %v246
      %v443 = vpop.f32.mrb[0].mxu0
      %v444 = vadd.f32 0.0, %v443
      %v445 = vpop.f32.mrb[0].mxu0
      %v446 = vadd.f32 0.0, %v445
      %v447 = vpop.f32.mrb[0].mxu0
      %v448 = vpop.f32.mrb[0].mxu0
      %449 = vdwg.mxu0
      %450 = vmatprep.subr.bf16.mxu0 0
      %451 = vmatpush1.bf16.msra.mxu0 %v333
      %452 = vmatprep.subr.bf16.mxu0 0
      %453 = vmatpush1.bf16.msra.mxu0 %v336
      %454 = vmatprep.subr.bf16.mxu0 0
      %455 = vmatpush1.bf16.msra.mxu0 %v339
      %456 = vmatprep.subr.bf16.mxu0 0
      %457 = vmatpush1.bf16.msra.mxu0 %v342
      %458 = vmatprep.subr.bf16.mxu0 0
      %459 = vmatpush1.bf16.msra.mxu0 %v345
      %460 = vmatprep.subr.bf16.mxu0 0
      %461 = vmatpush1.bf16.msra.mxu0 %v348
      %462 = vmatprep.subr.bf16.mxu0 0
      %463 = vmatpush1.bf16.msra.mxu0 %v351
      %464 = vmatprep.subr.bf16.mxu0 0
      %465 = vmatpush1.bf16.msra.mxu0 %v354
      %466 = vmatprep.subr.bf16.mxu0 0
      %467 = vmatpush1.bf16.msra.mxu0 0
      %468 = vmatprep.subr.bf16.mxu0 0
      %469 = vmatpush1.bf16.msra.mxu0 0
      %470 = vmatprep.subr.bf16.mxu0 0
      %471 = vmatpush1.bf16.msra.mxu0 0
      %472 = vmatprep.subr.bf16.mxu0 0
      %473 = vmatpush1.bf16.msra.mxu0 0
      %474 = vmatprep.subr.bf16.mxu0 0
      %475 = vmatpush1.bf16.msra.mxu0 0
      %476 = vmatprep.subr.bf16.mxu0 0
      %477 = vmatpush1.bf16.msra.mxu0 0
      %478 = vmatprep.subr.bf16.mxu0 0
      %479 = vmatpush1.bf16.msra.mxu0 0
      %480 = vmatprep.subr.bf16.mxu0 0
      %481 = vmatpush1.bf16.msra.mxu0 0
      %482 = vmatprep.mubr.bf16.mxu0 0
      %483 = vmatmul.mubr.bf16.gmra.mrb[0].mxu0 %v243
      %v484 = vpop.f32.mrb[0].mxu0
      %v485 = vadd.f32 0.0, %v484
      %v486 = vpop.f32.mrb[0].mxu0
      %v487 = vpop.f32.mrb[0].mxu0
      %v488 = vadd.f32 0.0, %v487
      %v489 = vpop.f32.mrb[0].mxu0
      %490 = vmatprep.mubr.bf16.mxu0 0
      %491 = vmatmul.mubr.bf16.gmra.mrb[0].mxu0 %v244
      %v492 = vpop.f32.mrb[0].mxu0
      %v493 = vadd.f32 0.0, %v492
      %v494 = vpop.f32.mrb[0].mxu0
      %v495 = vpop.f32.mrb[0].mxu0
      %v496 = vadd.f32 0.0, %v495
      %v497 = vpop.f32.mrb[0].mxu0
      %498 = vmatprep.mubr.bf16.mxu0 0
      %499 = vmatmul.mubr.bf16.gmra.mrb[0].mxu0 %v245
      %v500 = vpop.f32.mrb[0].mxu0
      %v501 = vadd.f32 0.0, %v500
      %v502 = vpop.f32.mrb[0].mxu0
      %v503 = vpop.f32.mrb[0].mxu0
      %v504 = vadd.f32 0.0, %v503
      %v505 = vpop.f32.mrb[0].mxu0
      %506 = vmatprep.mubr.bf16.mxu0 0
      %507 = vmatmul.mubr.bf16.gmra.mrb[0].mxu0 %v246
      %v508 = vpop.f32.mrb[0].mxu0
      %v509 = vadd.f32 0.0, %v508
      %v510 = vpop.f32.mrb[0].mxu0
      %v511 = vpop.f32.mrb[0].mxu0
      %v512 = vpop.f32.mrb[0].mxu0
      %513 = vdwg.mxu0
      %v514 = vpack.c.bf16 %v418, %v414
      %v515 = vpack.c.bf16 %v420, %v416
      %v516 = vpack.c.bf16 %v488, %v485
      %v517 = vpack.c.bf16 %v428, %v424
      %v518 = vpack.c.bf16 %v430, %v426
      %v519 = vpack.c.bf16 %v496, %v493
      %v520 = vpack.c.bf16 %v438, %v434
      %v521 = vpack.c.bf16 %v440, %v436
      %v522 = vpack.c.bf16 %v504, %v501
      %v523 = vpack.c.bf16 %v444, %v444
      %v524 = vpack.c.bf16 %v446, %v446
      %v525 = vpack.c.bf16 %v509, %v509
      %v538 = vunpack.c.l.b16 %v514
      %v539 = vunpack.c.l.b16 %v515
      %v540 = vunpack.c.l.b16 %v516
      %v541 = vunpack.c.h.b16 %v514
      %v542 = vunpack.c.h.b16 %v515
      %v543 = vunpack.c.h.b16 %v516
      %v544 = vunpack.c.l.b16 %v517
      %v545 = vunpack.c.l.b16 %v518
      %v546 = vunpack.c.l.b16 %v519
      %v547 = vunpack.c.h.b16 %v517
      %v548 = vunpack.c.h.b16 %v518
      %v549 = vunpack.c.h.b16 %v519
      %v550 = vunpack.c.l.b16 %v520
      %v551 = vunpack.c.l.b16 %v521
      %v552 = vunpack.c.l.b16 %v522
      %v553 = vunpack.c.h.b16 %v520
      %v554 = vunpack.c.h.b16 %v521
      %v555 = vunpack.c.h.b16 %v522
      %v556 = vunpack.c.l.b16 %v523
      %v557 = vunpack.c.l.b16 %v524
      %v558 = vunpack.c.l.b16 %v525
      %v559 = vpack.c.b16 %v539, %v538
      %v560 = vpack.c.b16 %v540, %v540
      %v561 = vpack.c.b16 %v542, %v541
      %v562 = vpack.c.b16 %v543, %v543
      %v563 = vpack.c.b16 %v545, %v544
      %v564 = vpack.c.b16 %v546, %v546
      %v565 = vpack.c.b16 %v548, %v547
      %v566 = vpack.c.b16 %v549, %v549
      %v567 = vpack.c.b16 %v551, %v550
      %v568 = vpack.c.b16 %v552, %v552
      %v569 = vpack.c.b16 %v554, %v553
      %v570 = vpack.c.b16 %v555, %v555
      %v571 = vpack.c.b16 %v557, %v556
      %v572 = vpack.c.b16 %v558, %v558
      %587 = vst [vmem:[%s182] sm:$0xff] %v559
      %588 = vst [vmem:[%s182 + $0x8] sm:$0xf] %v560
      %589 = vst [vmem:[%s182 + $0xc] sm:$0xff] %v561
      %590 = vst [vmem:[%s182 + $0x14] sm:$0xf] %v562
      %591 = vst [vmem:[%s182 + $0x18] sm:$0xff] %v563
      %592 = vst [vmem:[%s182 + $0x20] sm:$0xf] %v564
      %593 = vst [vmem:[%s182 + $0x24] sm:$0xff] %v565
      %594 = vst [vmem:[%s182 + $0x2c] sm:$0xf] %v566
      %595 = vst [vmem:[%s182 + $0x30] sm:$0xff] %v567
      %596 = vst [vmem:[%s182 + $0x38] sm:$0xf] %v568
      %597 = vst [vmem:[%s182 + $0x3c] sm:$0xff] %v569
      %598 = vst [vmem:[%s182 + $0x44] sm:$0xf] %v570
      %599 = vst [vmem:[%s182 + $0x48] sm:$0xff] %v571
      %600 = vst [vmem:[%s182 + $0x50] sm:$0xf] %v572
      %v601 = vadd.f32 %v414, %v418
      %v602 = vadd.f32 %v601, %v424
      %v603 = vadd.f32 %v602, %v428
      %v604 = vadd.f32 %v603, %v434
      %v605 = vadd.f32 %v604, %v438
      %v606 = vadd.f32 %v605, %v444
      %v607 = vrot.slane %v606, 4
      %v608 = vadd.f32 %v606, %v607
      %v609 = vrot.slane %v608, 2
      %v610 = vadd.f32 %v608, %v609
      %v611 = vrot.slane %v610, 1
      %v612 = vadd.f32 %v610, %v611
      %v613 = vadd.f32 %v416, %v420
      %v614 = vadd.f32 %v613, %v426
      %v615 = vadd.f32 %v614, %v430
      %v616 = vadd.f32 %v615, %v436
      %v617 = vadd.f32 %v616, %v440
      %v618 = vadd.f32 %v617, %v446
      %v619 = vrot.slane %v618, 4
      %v620 = vadd.f32 %v618, %v619
      %v621 = vrot.slane %v620, 2
      %v622 = vadd.f32 %v620, %v621
      %v623 = vrot.slane %v622, 1
      %v624 = vadd.f32 %v622, %v623
      %v625 = vadd.f32 %v485, %v488
      %v626 = vadd.f32 %v625, %v493
      %v627 = vadd.f32 %v626, %v496
      %v628 = vadd.f32 %v627, %v501
      %v629 = vadd.f32 %v628, %v504
      %v630 = vadd.f32 %v629, %v509
      %v631 = vrot.slane %v630, 4
      %v632 = vadd.f32 %v630, %v631
      %v633 = vrot.slane %v632, 2
      %v634 = vadd.f32 %v632, %v633
      %v635 = vrot.slane %v634, 1
      %v636 = vadd.f32 %v634, %v635
      %v640 = vcombine.low %v612, %v624
      %v642 = vunpack.c.l.s4 1966171168
      %v643 = vunpack.c.0.s8 %v642
      %v644 = vlaneseq
      %v645 = vshrl.u32 %v644, 7
      %v646 = vsub.s32 %v643, %v645
      %v647 = vrot.slane %v640, %v646
      %v649 = vunpack.c.l.s4 1966171168
      %v650 = vunpack.c.0.s8 %v649
      %v651 = vlaneseq
      %v652 = vshrl.u32 %v651, 7
      %v653 = vsub.s32 %v650, %v652
      %v654 = vrot.slane %v636, %v653
      %v655 = vcombine.low %v647, %v654
      %v657 = vunpack.c.l.s4 1966171168
      %v658 = vunpack.c.0.s8 %v657
      %v659 = vlaneseq
      %v660 = vshrl.u32 %v659, 7
      %v661 = vsub.s32 %v658, %v660
      %v662 = vrot.slane %v655, %v661
      %v664 = vlaneseq
      %vm665 = vcmp.ge.s32.totalorder %v664, 0
      %vm666 = vcmp.lt.s32.totalorder %v664, 384
      %vm667 = vmand %vm665, %vm666
      %668 = vst.msk [vmem:[%s188] ss:$2 sm:$0x7] %vm667, %v662
      %v669 = vmul.f32 %v414, %v414
      %v670 = vmul.f32 %v416, %v416
      %v671 = vmul.f32 %v485, %v485
      %v672 = vmul.f32 %v418, %v418
      %v673 = vmul.f32 %v420, %v420
      %v674 = vmul.f32 %v488, %v488
      %v675 = vmul.f32 %v424, %v424
      %v676 = vmul.f32 %v426, %v426
      %v677 = vmul.f32 %v493, %v493
      %v678 = vmul.f32 %v428, %v428
      %v679 = vmul.f32 %v430, %v430
      %v680 = vmul.f32 %v496, %v496
      %v681 = vmul.f32 %v434, %v434
      %v682 = vmul.f32 %v436, %v436
      %v683 = vmul.f32 %v501, %v501
      %v684 = vmul.f32 %v438, %v438
      %v685 = vmul.f32 %v440, %v440
      %v686 = vmul.f32 %v504, %v504
      %v687 = vmul.f32 %v444, %v444
      %v688 = vmul.f32 %v446, %v446
      %v689 = vmul.f32 %v509, %v509
      %v690 = vadd.f32 %v669, %v672
      %v691 = vadd.f32 %v690, %v675
      %v692 = vadd.f32 %v691, %v678
      %v693 = vadd.f32 %v692, %v681
      %v694 = vadd.f32 %v693, %v684
      %v695 = vadd.f32 %v694, %v687
      %v696 = vrot.slane %v695, 4
      %v697 = vadd.f32 %v695, %v696
      %v698 = vrot.slane %v697, 2
      %v699 = vadd.f32 %v697, %v698
      %v700 = vrot.slane %v699, 1
      %v701 = vadd.f32 %v699, %v700
      %v702 = vadd.f32 %v670, %v673
      %v703 = vadd.f32 %v702, %v676
      %v704 = vadd.f32 %v703, %v679
      %v705 = vadd.f32 %v704, %v682
      %v706 = vadd.f32 %v705, %v685
      %v707 = vadd.f32 %v706, %v688
      %v708 = vrot.slane %v707, 4
      %v709 = vadd.f32 %v707, %v708
      %v710 = vrot.slane %v709, 2
      %v711 = vadd.f32 %v709, %v710
      %v712 = vrot.slane %v711, 1
      %v713 = vadd.f32 %v711, %v712
      %v714 = vadd.f32 %v671, %v674
      %v715 = vadd.f32 %v714, %v677
      %v716 = vadd.f32 %v715, %v680
      %v717 = vadd.f32 %v716, %v683
      %v718 = vadd.f32 %v717, %v686
      %v719 = vadd.f32 %v718, %v689
      %v720 = vrot.slane %v719, 4
      %v721 = vadd.f32 %v719, %v720
      %v722 = vrot.slane %v721, 2
      %v723 = vadd.f32 %v721, %v722
      %v724 = vrot.slane %v723, 1
      %v725 = vadd.f32 %v723, %v724
      %v729 = vcombine.low %v701, %v713
      %v731 = vunpack.c.l.s4 1966171168
      %v732 = vunpack.c.0.s8 %v731
      %v733 = vlaneseq
      %v734 = vshrl.u32 %v733, 7
      %v735 = vsub.s32 %v732, %v734
      %v736 = vrot.slane %v729, %v735
      %v738 = vunpack.c.l.s4 1966171168
      %v739 = vunpack.c.0.s8 %v738
      %v740 = vlaneseq
      %v741 = vshrl.u32 %v740, 7
      %v742 = vsub.s32 %v739, %v741
      %v743 = vrot.slane %v725, %v742
      %v744 = vcombine.low %v736, %v743
      %v746 = vunpack.c.l.s4 1966171168
      %v747 = vunpack.c.0.s8 %v746
      %v748 = vlaneseq
      %v749 = vshrl.u32 %v748, 7
      %v750 = vsub.s32 %v747, %v749
      %v751 = vrot.slane %v744, %v750
      %s753 = scalar_lea.vmem %s188, 1
      %754 = vst.msk [vmem:[%s753] ss:$2 sm:$0x7] %vm667, %v751
      %s755 = smul.u32 7, %s15
      %p756 = scmp.lt.s32.totalorder %s755, 13
      %s757 = scalar_select %p756, %s755, 13
      %s758 = smul.addr %s757, 3
      %s759 = smul.addr %s758, 4
      %s760 = scalar_lea.vmem %s2, %s759
      %p761 = scmp.lt.s32.totalorder %s15, 1
      %s762 = scalar_select %p761, %s15, 1
      %s763 = smul.addr %s762, 3
      %s764 = smul.addr %s763, 2
      %s765 = scalar_lea.vmem %s3, %s764
      // Predicated region
      $region29: #{inception_b_forward.9} parent=27 // pred_check
        %p766 = pneg %p80
      $region30: #{inception_b_forward.9} parent=27 // pred_check_branch
        %768 = sbr.rel (%p766) target = $region32
      $region31: #{inception_b_forward.9} parent=27 // pred_region
        %s769 = smul.u32 7, %s15
      $region32: #{inception_b_forward.9} parent=27 // pred_fallthru
        _
      // Predicated region
      $region33: #{inception_b_forward.9} parent=27 // pred_check
        %p770 = pneg %p106
      $region34: #{inception_b_forward.9} parent=27 // pred_check_branch
        %772 = sbr.rel (%p770) target = $region36
      $region35: #{inception_b_forward.9} parent=27 // pred_region
        _
      $region36: #{inception_b_forward.9} parent=27 // pred_fallthru
        _
    $region28: #{inception_b_forward.9} parent=5 // pred_fallthru
      _
    %p773 = scmp.le.s32.totalorder 2, %s10
    // Predicated region
    $region37: #{inception_b_forward.9} parent=5 // pred_check
      %p774 = pneg %p773
    $region38: #{inception_b_forward.9} parent=5 // pred_check_branch
      %776 = sbr.rel (%p774) target = $region40
    $region39: #{inception_b_forward.9} parent=5 // pred_region
      %s777 = ssub.s32 %s10, 2
      // Predicated region
      $region41: #{inception_b_forward.9} parent=39 // pred_check
        %p778 = pneg %p86
      $region42: #{inception_b_forward.9} parent=39 // pred_check_branch
        %780 = sbr.rel (%p778) target = $region44
      $region43: #{inception_b_forward.9} parent=39 // pred_region
        %s781 = smul.u32 7, %s16
        %p782 = scmp.lt.s32.totalorder %s781, 13
        %s783 = scalar_select %p782, %s781, 13
        %s784 = smul.addr %s783, 3
        %s785 = smul.addr %s784, 4
        %s786 = scalar_lea.vmem %s2, %s785
      $region44: #{inception_b_forward.9} parent=39 // pred_fallthru
        _
      // Predicated region
      $region45: #{inception_b_forward.9} parent=39 // pred_check
        %p787 = pneg %p112
      $region46: #{inception_b_forward.9} parent=39 // pred_check_branch
        %789 = sbr.rel (%p787) target = $region48
      $region47: #{inception_b_forward.9} parent=39 // pred_region
        %p790 = scmp.lt.s32.totalorder %s16, 1
        %s791 = scalar_select %p790, %s16, 1
        %s792 = smul.addr %s791, 3
        %s793 = smul.addr %s792, 2
        %s794 = scalar_lea.vmem %s3, %s793
      $region48: #{inception_b_forward.9} parent=39 // pred_fallthru
        _
    $region40: #{inception_b_forward.9} parent=5 // pred_fallthru
      _
  $region6: #{inception_b_forward.9} parent=0 // loop_footer
    %s14 = sadd.s32 1, %s10
  $region7: #{inception_b_forward.9} parent=0 // loop_footer_branch
    %9 = sbr.rel target = $region3
  $region8: #{inception_b_forward.9} parent=0 // loop_exit
    _

// kernel: inception_b_forward.17
$region0: #{inception_b_forward.17}
  #allocation0 [shape = 'u32[]', space=smem, size = 0x4, offset = 0x4, fixed_abs, tag = 'smem constant byte address 0x4 - core index']
  #allocation1 [shape = 'u32[144,128]{1,0:T(1,128)}', space=vmem, size = 0x12000, scoped, tag = 'internal scratch']
  %s0 = inlined_call_operand.vmem [shape: f32[3,112,4], index: 0, kind: input, shape index: {}]
  %s1 = inlined_call_operand.vmem [shape: f32[112,4], index: 1, kind: output, shape index: {}]
  %s2 = sld [smem:[#allocation0]]
  $region75: #{inception_b_forward.17} parent=0
    _
  %s4 = ssub.s32 1, %s2
  %s5 = scalar_select 0, %s4, %s2
  $region1: #{inception_b_forward.17} parent=0
    #allocation2 [shape = 'u8[172032]{0}', space=vmem, size = 0x2a000, scoped, tag = 'input window, operand 0']
    loop: start=0, step=1, limit=4
    $region2: #{inception_b_forward.17} parent=1 // loop_pre_header
      _
    $region3: #{inception_b_forward.17} parent=1 // loop_header
      %s7 = sphi 0, %s11
      %p8 = scmp.ge.s32.totalorder %s7, 4
      %s17 = sphi 0, %s19
      %s20 = sphi 0, %s17
      %s21 = sphi 0, %s20
      %s37 = sphi 0, %s21
      %s43 = sphi 0, %s45
      %s46 = sphi 0, %s43
      %s47 = sphi 0, %s46
      %s63 = sphi 0, %s47
    $region4: #{inception_b_forward.17} parent=1 // loop_header_branch
      %10 = sbr.rel (%p8) target = $region8
    $region5: #{inception_b_forward.17} parent=1 // loop_body
      %s12 = ssub.s32 %s7, 1
      %s13 = ssub.s32 %s7, 2
      %s14 = sadd.s32 %s7, 1
      %s15 = ssub.s32 %s7, %s14
      %p16 = scmp.eq.s32.totalorder %s15, 0
      %s18 = sadd.s32 %s17, 1
      %s19 = scalar_select %p16, %s17, %s18
      %p22 = pneg %p16
      %p23 = scmp.eq.s32.totalorder %s7, 1
      %p24 = por %p22, %p23
      %p25 = scmp.ne.s32.totalorder %s17, %s20
      %p26 = scmp.eq.s32.totalorder %s7, 0
      %p27 = por %p25, %p26
      %p28 = scmp.ne.s32.totalorder %s17, %s20
      %p29 = scmp.eq.s32.totalorder %s12, 1
      %p30 = por %p28, %p29
      %p31 = scmp.ne.s32.totalorder %s20, %s21
      %p32 = scmp.eq.s32.totalorder %s12, 0
      %p33 = por %p31, %p32
      %p34 = scmp.ne.s32.totalorder %s20, %s21
      %p35 = scmp.eq.s32.totalorder %s13, 1
      %p36 = por %p34, %p35
      %p38 = scmp.ne.s32.totalorder %s21, %s37
      %p39 = scmp.eq.s32.totalorder %s13, 0
      %p40 = por %p38, %p39
      %s41 = ssub.s32 %s7, %s14
      %p42 = scmp.eq.s32.totalorder %s41, 0
      %s44 = sadd.s32 %s43, 1
      %s45 = scalar_select %p42, %s43, %s44
      %p48 = pneg %p42
      %p49 = scmp.eq.s32.totalorder %s7, 1
      %p50 = por %p48, %p49
      %p51 = scmp.ne.s32.totalorder %s43, %s46
      %p52 = scmp.eq.s32.totalorder %s7, 0
      %p53 = por %p51, %p52
      %p54 = scmp.ne.s32.totalorder %s43, %s46
      %p55 = scmp.eq.s32.totalorder %s12, 1
      %p56 = por %p54, %p55
      %p57 = scmp.ne.s32.totalorder %s46, %s47
      %p58 = scmp.eq.s32.totalorder %s12, 0
      %p59 = por %p57, %p58
      %p60 = scmp.ne.s32.totalorder %s46, %s47
      %p61 = scmp.eq.s32.totalorder %s13, 1
      %p62 = por %p60, %p61
      %p64 = scmp.ne.s32.totalorder %s47, %s63
      %p65 = scmp.eq.s32.totalorder %s13, 0
      %p66 = por %p64, %p65
      %p67 = scmp.le.s32.totalorder 1, %s7
      %p68 = scmp.lt.s32.totalorder %s7, 3
      %p69 = pnand %p67, %p68
      %p70 = pneg %p69
      // Predicated region
      $region9: #{inception_b_forward.17} parent=5 // pred_check
        _
      $region10: #{inception_b_forward.17} parent=5 // pred_check_branch
        %72 = sbr.rel (%p69) target = $region12
      $region11: #{inception_b_forward.17} parent=5 // pred_region
        %s73 = ssub.s32 %s7, 1
      $region12: #{inception_b_forward.17} parent=5 // pred_fallthru
        _
      %p74 = scmp.lt.s32.totalorder %s7, 2
      // Predicated region
      $region13: #{inception_b_forward.17} parent=5 // pred_check
        %p75 = pneg %p74
      $region14: #{inception_b_forward.17} parent=5 // pred_check_branch
        %77 = sbr.rel (%p75) target = $region16
      $region15: #{inception_b_forward.17} parent=5 // pred_region
        // Predicated region
        $region17: #{inception_b_forward.17} parent=15 // pred_check
          %p78 = pneg %p27
        $region18: #{inception_b_forward.17} parent=15 // pred_check_branch
          %80 = sbr.rel (%p78) target = $region20
        $region19: #{inception_b_forward.17} parent=15 // pred_region
          %s81 = sand.u32 %s17, 1
          %s82 = sand.u32 %s17, 1
          %s83 = smul.addr %s82, 168
          %s84 = scalar_lea.vmem [#allocation2], %s83
          %s85 = smul.u32 7, %s7
          %s86 = smul.addr %s85, 8
          %s87 = scalar_lea.vmem %s0, %s86
          // Predicated region
          $region21: #{inception_b_forward.17} parent=19 // pred_check
            _
          $region22: #{inception_b_forward.17} parent=19 // pred_check_branch
            %89 = sbr.rel (0) target = $region24
          $region23: #{inception_b_forward.17} parent=19 // pred_region
            // Predicated region
            $region25: #{inception_b_forward.17} parent=23 // pred_check
              _
            $region26: #{inception_b_forward.17} parent=23 // pred_check_branch
              %91 = sbr.rel (0) target = $region28
            $region27: #{inception_b_forward.17} parent=23 // pred_region
              // Predicated region
              $region40: #{inception_b_forward.17} parent=27 // pred_check
                _
              $region41: #{inception_b_forward.17} parent=27 // pred_check_branch
                %146 = sbr.rel (0) target = $region43
              $region42: #{inception_b_forward.17} parent=27 // pred_region
                loop: start=0, step=1, limit=1
                $region44: #{inception_b_forward.17} parent=42 // loop_pre_header
                  _
                $region45: #{inception_b_forward.17} parent=42 // loop_header
                  %s148 = sphi 0, %s152
                  %p149 = scmp.ge.s32.totalorder %s148, 1
                  %s153 = sphi %s87, %s87
                  %s154 = sphi %s84, %s84
                $region46: #{inception_b_forward.17} parent=42 // loop_header_branch
                  %151 = sbr.rel (%p149) target = $region50
                $region47: #{inception_b_forward.17} parent=42 // loop_body
                  %v155 = vld [vmem:[%s153] sm:$0xff]
                  %156 = vst [vmem:[%s154] sm:$0xff] %v155
                  %v157 = vld [vmem:[%s153 + $0x8] sm:$0xff]
                  %158 = vst [vmem:[%s154 + $0x8] sm:$0xff] %v157
                  %v159 = vld [vmem:[%s153 + $0x10] sm:$0xff]
                  %160 = vst [vmem:[%s154 + $0x10] sm:$0xff] %v159
                  %v161 = vld [vmem:[%s153 + $0x18] sm:$0xff]
                  %162 = vst [vmem:[%s154 + $0x18] sm:$0xff] %v161
                  %v163 = vld [vmem:[%s153 + $0x20] sm:$0xff]
                  %164 = vst [vmem:[%s154 + $0x20] sm:$0xff] %v163
                  %v165 = vld [vmem:[%s153 + $0x28] sm:$0xff]
                  %166 = vst [vmem:[%s154 + $0x28] sm:$0xff] %v165
                  %v167 = vld [vmem:[%s153 + $0x30] sm:$0xff]
                  %168 = vst [vmem:[%s154 + $0x30] sm:$0xff] %v167
                  %v169 = vld [vmem:[%s153 + $0x70] sm:$0xff]
                  %170 = vst [vmem:[%s154 + $0x38] sm:$0xff] %v169
                  %v171 = vld [vmem:[%s153 + $0x78] sm:$0xff]
                  %172 = vst [vmem:[%s154 + $0x40] sm:$0xff] %v171
                  %v173 = vld [vmem:[%s153 + $0x80] sm:$0xff]
                  %174 = vst [vmem:[%s154 + $0x48] sm:$0xff] %v173
                  %v175 = vld [vmem:[%s153 + $0x88] sm:$0xff]
                  %176 = vst [vmem:[%s154 + $0x50] sm:$0xff] %v175
                  %v177 = vld [vmem:[%s153 + $0x90] sm:$0xff]
                  %178 = vst [vmem:[%s154 + $0x58] sm:$0xff] %v177
                  %v179 = vld [vmem:[%s153 + $0x98] sm:$0xff]
                  %180 = vst [vmem:[%s154 + $0x60] sm:$0xff] %v179
                  %v181 = vld [vmem:[%s153 + $0xa0] sm:$0xff]
                  %182 = vst [vmem:[%s154 + $0x68] sm:$0xff] %v181
                  %v183 = vld [vmem:[%s153 + $0xe0] sm:$0xff]
                  %184 = vst [vmem:[%s154 + $0x70] sm:$0xff] %v183
                  %v185 = vld [vmem:[%s153 + $0xe8] sm:$0xff]
                  %186 = vst [vmem:[%s154 + $0x78] sm:$0xff] %v185
                  %v187 = vld [vmem:[%s153 + $0xf0] sm:$0xff]
                  %188 = vst [vmem:[%s154 + $0x80] sm:$0xff] %v187
                  %v189 = vld [vmem:[%s153 + $0xf8] sm:$0xff]
                  %190 = vst [vmem:[%s154 + $0x88] sm:$0xff] %v189
                  %v191 = vld [vmem:[%s153 + $0x100] sm:$0xff]
                  %192 = vst [vmem:[%s154 + $0x90] sm:$0xff] %v191
                  %v193 = vld [vmem:[%s153 + $0x108] sm:$0xff]
                  %194 = vst [vmem:[%s154 + $0x98] sm:$0xff] %v193
                  %v195 = vld [vmem:[%s153 + $0x110] sm:$0xff]
                  %196 = vst [vmem:[%s154 + $0xa0] sm:$0xff] %v195
                $region48: #{inception_b_forward.17} parent=42 // loop_footer
                  %s152 = sadd.s32 1, %s148
                $region49: #{inception_b_forward.17} parent=42 // loop_footer_branch
                  %147 = sbr.rel target = $region45
                $region50: #{inception_b_forward.17} parent=42 // loop_exit
                  _
              $region43: #{inception_b_forward.17} parent=27 // pred_fallthru
                _
              // Predicated region
              $region51: #{inception_b_forward.17} parent=27 // pred_check
                _
              $region52: #{inception_b_forward.17} parent=27 // pred_check_branch
                %198 = sbr.rel target = $region54
              $region53: #{inception_b_forward.17} parent=27 // pred_region
                _
              $region54: #{inception_b_forward.17} parent=27 // pred_fallthru
                _
            $region28: #{inception_b_forward.17} parent=23 // pred_fallthru
              _
            // Predicated region
            $region29: #{inception_b_forward.17} parent=23 // pred_check
              _
            $region30: #{inception_b_forward.17} parent=23 // pred_check_branch
              %93 = sbr.rel target = $region32
            $region31: #{inception_b_forward.17} parent=23 // pred_region
              loop: start=0, step=1, limit=1
              $region33: #{inception_b_forward.17} parent=31 // loop_pre_header
                _
              $region34: #{inception_b_forward.17} parent=31 // loop_header
                %s96 = sphi 0, %s100
                %p97 = scmp.ge.s32.totalorder %s96, 1
                %s101 = sphi %s87, %s87
                %s102 = sphi %s84, %s84
              $region35: #{inception_b_forward.17} parent=31 // loop_header_branch
                %99 = sbr.rel (%p97) target = $region39
              $region36: #{inception_b_forward.17} parent=31 // loop_body
                %v103 = vld [vmem:[%s101] sm:$0xff]
                %104 = vst [vmem:[%s102] sm:$0xff] %v103
                %v105 = vld [vmem:[%s101 + $0x8] sm:$0xff]
                %106 = vst [vmem:[%s102 + $0x8] sm:$0xff] %v105
                %v107 = vld [vmem:[%s101 + $0x10] sm:$0xff]
                %108 = vst [vmem:[%s102 + $0x10] sm:$0xff] %v107
                %v109 = vld [vmem:[%s101 + $0x18] sm:$0xff]
                %110 = vst [vmem:[%s102 + $0x18] sm:$0xff] %v109
                %v111 = vld [vmem:[%s101 + $0x20] sm:$0xff]
                %112 = vst [vmem:[%s102 + $0x20] sm:$0xff] %v111
                %v113 = vld [vmem:[%s101 + $0x28] sm:$0xff]
                %114 = vst [vmem:[%s102 + $0x28] sm:$0xff] %v113
                %v115 = vld [vmem:[%s101 + $0x30] sm:$0xff]
                %116 = vst [vmem:[%s102 + $0x30] sm:$0xff] %v115
                %v117 = vld [vmem:[%s101 + $0x70] sm:$0xff]
                %118 = vst [vmem:[%s102 + $0x38] sm:$0xff] %v117
                %v119 = vld [vmem:[%s101 + $0x78] sm:$0xff]
                %120 = vst [vmem:[%s102 + $0x40] sm:$0xff] %v119
                %v121 = vld [vmem:[%s101 + $0x80] sm:$0xff]
                %122 = vst [vmem:[%s102 + $0x48] sm:$0xff] %v121
                %v123 = vld [vmem:[%s101 + $0x88] sm:$0xff]
                %124 = vst [vmem:[%s102 + $0x50] sm:$0xff] %v123
                %v125 = vld [vmem:[%s101 + $0x90] sm:$0xff]
                %126 = vst [vmem:[%s102 + $0x58] sm:$0xff] %v125
                %v127 = vld [vmem:[%s101 + $0x98] sm:$0xff]
                %128 = vst [vmem:[%s102 + $0x60] sm:$0xff] %v127
                %v129 = vld [vmem:[%s101 + $0xa0] sm:$0xff]
                %130 = vst [vmem:[%s102 + $0x68] sm:$0xff] %v129
                %v131 = vld [vmem:[%s101 + $0xe0] sm:$0xff]
                %132 = vst [vmem:[%s102 + $0x70] sm:$0xff] %v131
                %v133 = vld [vmem:[%s101 + $0xe8] sm:$0xff]
                %134 = vst [vmem:[%s102 + $0x78] sm:$0xff] %v133
                %v135 = vld [vmem:[%s101 + $0xf0] sm:$0xff]
                %136 = vst [vmem:[%s102 + $0x80] sm:$0xff] %v135
                %v137 = vld [vmem:[%s101 + $0xf8] sm:$0xff]
                %138 = vst [vmem:[%s102 + $0x88] sm:$0xff] %v137
                %v139 = vld [vmem:[%s101 + $0x100] sm:$0xff]
                %140 = vst [vmem:[%s102 + $0x90] sm:$0xff] %v139
                %v141 = vld [vmem:[%s101 + $0x108] sm:$0xff]
                %142 = vst [vmem:[%s102 + $0x98] sm:$0xff] %v141
                %v143 = vld [vmem:[%s101 + $0x110] sm:$0xff]
                %144 = vst [vmem:[%s102 + $0xa0] sm:$0xff] %v143
              $region37: #{inception_b_forward.17} parent=31 // loop_footer
                %s100 = sadd.s32 1, %s96
              $region38: #{inception_b_forward.17} parent=31 // loop_footer_branch
                %95 = sbr.rel target = $region34
              $region39: #{inception_b_forward.17} parent=31 // loop_exit
                _
            $region32: #{inception_b_forward.17} parent=23 // pred_fallthru
              _
          $region24: #{inception_b_forward.17} parent=19 // pred_fallthru
            _
          %199 = vnop
        $region20: #{inception_b_forward.17} parent=15 // pred_fallthru
          _
      $region16: #{inception_b_forward.17} parent=5 // pred_fallthru
        _
      %p200 = scmp.le.s32.totalorder 1, %s7
      %p201 = scmp.lt.s32.totalorder %s7, 3
      %p202 = pnand %p200, %p201
      %p203 = pneg %p202
      // Predicated region
      $region55: #{inception_b_forward.17} parent=5 // pred_check
        _
      $region56: #{inception_b_forward.17} parent=5 // pred_check_branch
        %205 = sbr.rel (%p202) target = $region58
      $region57: #{inception_b_forward.17} parent=5 // pred_region
        %s206 = ssub.s32 %s7, 1
        %s207 = sand.u32 %s20, 1
        %s208 = sand.u32 %s20, 1
        %s209 = smul.addr %s208, 168
        %s210 = scalar_lea.vmem [#allocation2], %s209
        // Predicated region
        $region59: #{inception_b_forward.17} parent=57 // pred_check
          %p211 = pneg %p33
        $region60: #{inception_b_forward.17} parent=57 // pred_check_branch
          %213 = sbr.rel (%p211) target = $region62
        $region61: #{inception_b_forward.17} parent=57 // pred_region
          _
        $region62: #{inception_b_forward.17} parent=57 // pred_fallthru
          _
        %s214 = sand.u32 %s20, 1
        %s215 = sand.u32 %s20, 1
        %s216 = smul.addr %s215, 168
        %s217 = scalar_lea.vmem [#allocation2], %s216
        %p218 = pneg %p33
        %p219 = pneg %p30
        %p220 = pneg %p59
        %p221 = pneg %p56
        %s222 = smul.u32 7, %s12
        %p223 = scmp.lt.s32.totalorder %s222, 13
        %s224 = scalar_select %p223, %s222, 13
        %s225 = smul.addr %s224, 8
        %s226 = scalar_lea.vmem %s1, %s225
        %s227 = smul.u32 7, %s12
        %s228 = smul.u32 7, %s12
        %p229 = scmp.lt.s32.totalorder %s228, 13
        %s230 = scalar_select %p229, %s228, 13
        %s231 = smul.addr %s230, 8
        %s232 = scalar_lea.vmem %s1, %s231
        %s233 = smul.u32 7, %s12
        %v234 = vld [vmem:[%s210] sm:$0xff]
        %v235 = vld [vmem:[%s210 + $0x8] sm:$0xff]
        %v236 = vld [vmem:[%s210 + $0x10] sm:$0xff]
        %v237 = vld [vmem:[%s210 + $0x18] sm:$0xff]
        %v238 = vld [vmem:[%s210 + $0x20] sm:$0xff]
        %v239 = vld [vmem:[%s210 + $0x28] sm:$0xff]
        %v240 = vld [vmem:[%s210 + $0x30] sm:$0xff]
        %s241 = scalar_lea.vmem %s210, 56 [#allocation2]
        %v242 = vld [vmem:[%s241] sm:$0xff]
        %v243 = vld [vmem:[%s241 + $0x8] sm:$0xff]
        %v244 = vld [vmem:[%s241 + $0x10] sm:$0xff]
        %v245 = vld [vmem:[%s241 + $0x18] sm:$0xff]
        %v246 = vld [vmem:[%s241 + $0x20] sm:$0xff]
        %v247 = vld [vmem:[%s241 + $0x28] sm:$0xff]
        %v248 = vld [vmem:[%s241 + $0x30] sm:$0xff]
        %v249 = vmax.f32 %v234, %v242
        %v250 = vmax.f32 %v235, %v243
        %v251 = vmax.f32 %v236, %v244
        %v252 = vmax.f32 %v237, %v245
        %v253 = vmax.f32 %v238, %v246
        %v254 = vmax.f32 %v239, %v247
        %v255 = vmax.f32 %v240, %v248
        %s256 = scalar_lea.vmem %s210, 112 [#allocation2]
        %v257 = vld [vmem:[%s256] sm:$0xff]
        %v258 = vld [vmem:[%s256 + $0x8] sm:$0xff]
        %v259 = vld [vmem:[%s256 + $0x10] sm:$0xff]
        %v260 = vld [vmem:[%s256 + $0x18] sm:$0xff]
        %v261 = vld [vmem:[%s256 + $0x20] sm:$0xff]
        %v262 = vld [vmem:[%s256 + $0x28] sm:$0xff]
        %v263 = vld [vmem:[%s256 + $0x30] sm:$0xff]
        %v264 = vmax.f32 %v249, %v257
        %v265 = vmax.f32 %v250, %v258
        %v266 = vmax.f32 %v251, %v259
        %v267 = vmax.f32 %v252, %v260
        %v268 = vmax.f32 %v253, %v261
        %v269 = vmax.f32 %v254, %v262
        %v270 = vmax.f32 %v255, %v263
        %vm271 = vcmask 31744
        %272 = vst.msk [vmem:[%s232] sm:$0xff] %vm271, %v264
        %273 = vst.msk [vmem:[%s232 + $0x8] sm:$0xff] %vm271, %v265
        %274 = vst.msk [vmem:[%s232 + $0x10] sm:$0xff] %vm271, %v266
        %275 = vst.msk [vmem:[%s232 + $0x18] sm:$0xff] %vm271, %v267
        %276 = vst.msk [vmem:[%s232 + $0x20] sm:$0xff] %vm271, %v268
        %277 = vst.msk [vmem:[%s232 + $0x28] sm:$0xff] %vm271, %v269
        %278 = vst.msk [vmem:[%s232 + $0x30] sm:$0xff] %vm271, %v270
        %s279 = smul.u32 7, %s12
        %p280 = scmp.lt.s32.totalorder %s279, 13
        %s281 = scalar_select %p280, %s279, 13
        %s282 = smul.addr %s281, 8
        %s283 = scalar_lea.vmem %s1, %s282
        // Predicated region
        $region63: #{inception_b_forward.17} parent=57 // pred_check
          %p284 = pneg %p56
        $region64: #{inception_b_forward.17} parent=57 // pred_check_branch
          %286 = sbr.rel (%p284) target = $region66
        $region65: #{inception_b_forward.17} parent=57 // pred_region
          %s287 = smul.u32 7, %s12
        $region66: #{inception_b_forward.17} parent=57 // pred_fallthru
          _
      $region58: #{inception_b_forward.17} parent=5 // pred_fallthru
        _
      %p288 = scmp.le.s32.totalorder 2, %s7
      // Predicated region
      $region67: #{inception_b_forward.17} parent=5 // pred_check
        %p289 = pneg %p288
      $region68: #{inception_b_forward.17} parent=5 // pred_check_branch
        %291 = sbr.rel (%p289) target = $region70
      $region69: #{inception_b_forward.17} parent=5 // pred_region
        %s292 = ssub.s32 %s7, 2
        // Predicated region
        $region71: #{inception_b_forward.17} parent=69 // pred_check
          %p293 = pneg %p62
        $region72: #{inception_b_forward.17} parent=69 // pred_check_branch
          %295 = sbr.rel (%p293) target = $region74
        $region73: #{inception_b_forward.17} parent=69 // pred_region
          %s296 = smul.u32 7, %s13
          %p297 = scmp.lt.s32.totalorder %s296, 13
          %s298 = scalar_select %p297, %s296, 13
          %s299 = smul.addr %s298, 8
          %s300 = scalar_lea.vmem %s1, %s299
        $region74: #{inception_b_forward.17} parent=69 // pred_fallthru
          _
      $region70: #{inception_b_forward.17} parent=5 // pred_fallthru
        _
    $region6: #{inception_b_forward.17} parent=1 // loop_footer
      %s11 = sadd.s32 1, %s7
    $region7: #{inception_b_forward.17} parent=1 // loop_footer_branch
      %6 = sbr.rel target = $region3
    $region8: #{inception_b_forward.17} parent=1 // loop_exit
      _

</llo_original>
